<compile_context>
chip_gen: v5e
topology: v5e:2x2
jax: 0.10.0
libtpu: 0.0.40
codegen_flags: <defaults>
</compile_context>

<pallas_src>
import jax
import jax.numpy as jnp
from jax.experimental import pallas as pl
from jax.experimental.pallas import tpu as pltpu

EPS = 1e-5
_VMEM_LIMIT = None


# ---------------------------------------------------------------------------
# Per-generation knobs
# ---------------------------------------------------------------------------
def _vmem_limit():
    """Scoped-VMEM budget: 96 MiB on 128-MiB parts (v5e/v6e), 32 MiB otherwise (v7x)."""
    global _VMEM_LIMIT
    if _VMEM_LIMIT is None:
        limit = 32 * 1024 * 1024
        try:
            cap = int(getattr(pltpu.get_tpu_info(), "vmem_capacity_bytes", 0))
            if cap >= 128 * 1024 * 1024:
                limit = 96 * 1024 * 1024
        except Exception:
            pass
        _VMEM_LIMIT = limit
    return _VMEM_LIMIT


def _pick_h_tile(h, w):
    """Largest divisor of H such that one tile is at most `target` rows of W pixels."""
    target = 1024 if _vmem_limit() >= 64 * 1024 * 1024 else 512
    best = 1
    for t in range(1, h + 1):
        if h % t == 0 and t * w <= target:
            best = t
    return best


def _cparams(semantics):
    return pltpu.CompilerParams(dimension_semantics=semantics,
                                vmem_limit_bytes=_vmem_limit())


# ---------------------------------------------------------------------------
# Kernels
# ---------------------------------------------------------------------------
def _conv1x1_stats_kernel(x_ref, w_ref, y_ref, sum_ref, sq_ref):
    """conv1 (1x1) as a matmul + per-image BN1 sum / sum^2 accumulation."""
    j = pl.program_id(1)

    @pl.when(j == 0)
    def _init():
        sum_ref[...] = jnp.zeros(sum_ref.shape, sum_ref.dtype)
        sq_ref[...] = jnp.zeros(sq_ref.shape, sq_ref.dtype)

    _, th, wd, cin = x_ref.shape
    y = jnp.dot(x_ref[...].reshape(th * wd, cin), w_ref[...],
                preferred_element_type=jnp.float32)
    y_ref[...] = y.reshape(y_ref.shape).astype(y_ref.dtype)
    sum_ref[...] += jnp.sum(y, axis=0, keepdims=True).reshape(sum_ref.shape)
    sq_ref[...] += jnp.sum(y * y, axis=0, keepdims=True).reshape(sq_ref.shape)


def _make_conv3x3_stats_kernel(th, wd, c):
    """Fused BN1-apply + ReLU + 3x3 conv (halo tiling) + BN2 stats accumulation."""
    def kernel(yc_ref, yt_ref, yb_ref, sc_ref, sh_ref, w2_ref,
               y2_ref, sum_ref, sq_ref):
        j = pl.program_id(1)
        ht = pl.num_programs(1)

        @pl.when(j == 0)
        def _init():
            sum_ref[...] = jnp.zeros(sum_ref.shape, sum_ref.dtype)
            sq_ref[...] = jnp.zeros(sq_ref.shape, sq_ref.dtype)

        sc = sc_ref[...]                        # (1, c) f32
        sh = sh_ref[...]

        def bn_relu(v, rows):                   # fused BN1 apply + ReLU
            v2 = v.reshape(rows * wd, c).astype(jnp.float32)
            return jnp.maximum(v2 * sc + sh, 0.0).reshape(rows, wd, c)

        # Halo rows: top only valid for j > 0, bottom only for j < ht-1 (otherwise
        # they realize the conv's spatial zero padding).
        a_c = bn_relu(yc_ref[...], th)                                   # (th,   wd, c)
        a_t = bn_relu(yt_ref[...], 1) * (j > 0).astype(jnp.float32)      # (1,    wd, c)
        a_b = bn_relu(yb_ref[...], 1) * (j < ht - 1).astype(jnp.float32)
        a_ext = jnp.concatenate([a_t, a_c, a_b], axis=0)                 # (th+2, wd, c)

        # Zero-pad W by one column each side, then take the three dx-shifted views.
        zcol = jnp.zeros((th + 2, 1, c), jnp.float32)
        a_wide = jnp.concatenate([zcol, a_ext, zcol], axis=1)            # (th+2, wd+2, c)
        shifted = [a_wide[:, dx:dx + wd, :].astype(jnp.bfloat16) for dx in range(3)]

        cout = w2_ref.shape[2]
        acc = jnp.zeros((th * wd, cout), jnp.float32)
        for dy in range(3):
            for dx in range(3):
                tap = shifted[dx][dy:dy + th].reshape(th * wd, c)
                acc = acc + jnp.dot(tap, w2_ref[3 * dy + dx],
                                    preferred_element_type=jnp.float32)

        y2_ref[...] = acc.reshape(y2_ref.shape).astype(y2_ref.dtype)
        sum_ref[...] += jnp.sum(acc, axis=0, keepdims=True).reshape(sum_ref.shape)
        sq_ref[...] += jnp.sum(acc * acc, axis=0, keepdims=True).reshape(sq_ref.shape)
    return kernel


def _bn_relu_conv1x1_stats_kernel(y_ref, sc_ref, sh_ref, w_ref, o_ref, sum_ref, sq_ref):
    """Fused BN2-apply + ReLU + conv3 (1x1) matmul + BN3 stats accumulation."""
    j = pl.program_id(1)

    @pl.when(j == 0)
    def _init():
        sum_ref[...] = jnp.zeros(sum_ref.shape, sum_ref.dtype)
        sq_ref[...] = jnp.zeros(sq_ref.shape, sq_ref.dtype)

    _, th, wd, cin = y_ref.shape
    a = jnp.maximum(
        y_ref[...].reshape(th * wd, cin).astype(jnp.float32) * sc_ref[...] + sh_ref[...],
        0.0)
    o = jnp.dot(a.astype(jnp.bfloat16), w_ref[...], preferred_element_type=jnp.float32)
    o_ref[...] = o.reshape(o_ref.shape).astype(o_ref.dtype)
    sum_ref[...] += jnp.sum(o, axis=0, keepdims=True).reshape(sum_ref.shape)
    sq_ref[...] += jnp.sum(o * o, axis=0, keepdims=True).reshape(sq_ref.shape)


def _bn_residual_relu_kernel(y_ref, sc_ref, sh_ref, r_ref, o_ref):
    """BN3-apply + identity residual + final ReLU (bf16 in / bf16 out)."""
    _, th, wd, c = y_ref.shape
    y = y_ref[...].reshape(th * wd, c).astype(jnp.float32)
    r = r_ref[...].reshape(th * wd, c).astype(jnp.float32)
    a = y * sc_ref[...] + sh_ref[...] + r
    o_ref[...] = jnp.maximum(a, 0.0).reshape(o_ref.shape).astype(o_ref.dtype)


# ---------------------------------------------------------------------------
# pallas_call wrappers
# ---------------------------------------------------------------------------
def _conv1x1_stats(x, w, th):
    n, h, wd, cin = x.shape
    cout = w.shape[1]
    ht = h // th
    return pl.pallas_call(
        _conv1x1_stats_kernel,
        out_shape=(jax.ShapeDtypeStruct((n, h, wd, cout), jnp.bfloat16),
                   jax.ShapeDtypeStruct((n, 1, cout), jnp.float32),
                   jax.ShapeDtypeStruct((n, 1, cout), jnp.float32)),
        grid=(n, ht),
        in_specs=[pl.BlockSpec((1, th, wd, cin), lambda i, j: (i, j, 0, 0)),
                  pl.BlockSpec((cin, cout), lambda i, j: (0, 0))],
        out_specs=(pl.BlockSpec((1, th, wd, cout), lambda i, j: (i, j, 0, 0)),
                   pl.BlockSpec((1, 1, cout), lambda i, j: (i, 0, 0)),
                   pl.BlockSpec((1, 1, cout), lambda i, j: (i, 0, 0))),
        compiler_params=_cparams(("parallel", "arbitrary")),
    )(x, w)


def _conv3x3_stats(y1, sc, sh, w2, th):
    n, h, wd, c = y1.shape
    cout = w2.shape[2]
    ht = h // th
    kernel = _make_conv3x3_stats_kernel(th, wd, c)
    return pl.pallas_call(
        kernel,
        out_shape=(jax.ShapeDtypeStruct((n, h, wd, cout), jnp.bfloat16),
                   jax.ShapeDtypeStruct((n, 1, cout), jnp.float32),
                   jax.ShapeDtypeStruct((n, 1, cout), jnp.float32)),
        grid=(n, ht),
        in_specs=[
            # centre tile
            pl.BlockSpec((1, th, wd, c), lambda i, j: (i, j, 0, 0)),
            # 1-row top / bottom halos (clamped at the image border; the kernel zeroes
            # them there to realize the conv's spatial zero padding).
            pl.BlockSpec((1, 1, wd, c),
                         lambda i, j: (i, jnp.maximum(j * th - 1, 0), 0, 0)),
            pl.BlockSpec((1, 1, wd, c),
                         lambda i, j: (i, jnp.minimum((j + 1) * th, h - 1), 0, 0)),
            pl.BlockSpec((1, c), lambda i, j: (0, 0)),
            pl.BlockSpec((1, c), lambda i, j: (0, 0)),
            pl.BlockSpec((9, c, cout), lambda i, j: (0, 0, 0)),
        ],
        out_specs=(pl.BlockSpec((1, th, wd, cout), lambda i, j: (i, j, 0, 0)),
                   pl.BlockSpec((1, 1, cout), lambda i, j: (i, 0, 0)),
                   pl.BlockSpec((1, 1, cout), lambda i, j: (i, 0, 0))),
        compiler_params=_cparams(("parallel", "arbitrary")),
    )(y1, y1, y1, sc, sh, w2)


def _bn_relu_conv1x1_stats(y, sc, sh, w, th):
    n, h, wd, c = y.shape
    cout = w.shape[1]
    ht = h // th
    return pl.pallas_call(
        _bn_relu_conv1x1_stats_kernel,
        out_shape=(jax.ShapeDtypeStruct((n, h, wd, cout), jnp.bfloat16),
                   jax.ShapeDtypeStruct((n, 1, cout), jnp.float32),
                   jax.ShapeDtypeStruct((n, 1, cout), jnp.float32)),
        grid=(n, ht),
        in_specs=[pl.BlockSpec((1, th, wd, c), lambda i, j: (i, j, 0, 0)),
                  pl.BlockSpec((1, c), lambda i, j: (0, 0)),
                  pl.BlockSpec((1, c), lambda i, j: (0, 0)),
                  pl.BlockSpec((c, cout), lambda i, j: (0, 0))],
        out_specs=(pl.BlockSpec((1, th, wd, cout), lambda i, j: (i, j, 0, 0)),
                   pl.BlockSpec((1, 1, cout), lambda i, j: (i, 0, 0)),
                   pl.BlockSpec((1, 1, cout), lambda i, j: (i, 0, 0))),
        compiler_params=_cparams(("parallel", "arbitrary")),
    )(y, sc, sh, w)


def _bn_residual_relu(y, sc, sh, res, th):
    n, h, wd, c = y.shape
    ht = h // th
    return pl.pallas_call(
        _bn_residual_relu_kernel,
        out_shape=jax.ShapeDtypeStruct((n, h, wd, c), jnp.bfloat16),
        grid=(n, ht),
        in_specs=[pl.BlockSpec((1, th, wd, c), lambda i, j: (i, j, 0, 0)),
                  pl.BlockSpec((1, c), lambda i, j: (0, 0)),
                  pl.BlockSpec((1, c), lambda i, j: (0, 0)),
                  pl.BlockSpec((1, th, wd, c), lambda i, j: (i, j, 0, 0))],
        out_specs=pl.BlockSpec((1, th, wd, c), lambda i, j: (i, j, 0, 0)),
        compiler_params=_cparams(("parallel", "parallel")),
    )(y, sc, sh, res)


# ---------------------------------------------------------------------------
# Helpers
# ---------------------------------------------------------------------------
def _bn_scale_shift(col_sum, col_sq, gamma, beta, count):
    """Finalize training-mode BN from single-pass sums: per-channel scale & shift."""
    mean = col_sum / count
    var = jnp.maximum(col_sq / count - mean * mean, 0.0)     # biased variance
    scale = gamma * jax.lax.rsqrt(var + EPS)
    shift = beta - mean * scale
    return scale, shift


# ---------------------------------------------------------------------------
# Bottleneck forward
# ---------------------------------------------------------------------------
def bottleneck_forward(x_nchw, params):
    n, c_in, h, w = x_nchw.shape
    planes = params["w1"].shape[1]
    c_out = params["w3"].shape[1]                 # planes * expansion(4)
    if c_in != c_out:
        # TODO(synk): stride>1 / user-supplied downsample branch not implemented.
        raise NotImplementedError("identity residual requires inplanes == planes*4")

    th = _pick_h_tile(h, w)

    # Layout glue: cast to bf16 BEFORE the transpose (halves HBM bytes moved), NCHW->NHWC.
    x_nhwc = jnp.transpose(x_nchw.astype(jnp.bfloat16), (0, 2, 3, 1))   # (N,H,W,Cin)

    w1 = params["w1"].astype(jnp.bfloat16)                              # (Cin, planes)
    w2 = params["w2"].astype(jnp.bfloat16)                              # (9, planes, planes)
    w3 = params["w3"].astype(jnp.bfloat16)                              # (planes, Cout)
    g1 = params["g1"].astype(jnp.float32).reshape(1, -1)
    b1 = params["b1"].astype(jnp.float32).reshape(1, -1)
    g2 = params["g2"].astype(jnp.float32).reshape(1, -1)
    b2 = params["b2"].astype(jnp.float32).reshape(1, -1)
    g3 = params["g3"].astype(jnp.float32).reshape(1, -1)
    b3 = params["b3"].astype(jnp.float32).reshape(1, -1)
    cnt = jnp.float32(n * h * w)

    # Stage 1: conv1 (1x1) + BN1 per-image stats.
    y1, s1, q1 = _conv1x1_stats(x_nhwc, w1, th)
    sc1, sh1 = _bn_scale_shift(jnp.sum(s1, axis=0), jnp.sum(q1, axis=0), g1, b1, cnt)

    # Stage 2: fused BN1-apply+ReLU -> 3x3 halo conv + BN2 per-image stats.
    y2, s2, q2 = _conv3x3_stats(y1, sc1, sh1, w2, th)
    sc2, sh2 = _bn_scale_shift(jnp.sum(s2, axis=0), jnp.sum(q2, axis=0), g2, b2, cnt)

    # Stage 3: fused BN2-apply+ReLU -> conv3 (1x1) + BN3 per-image stats.
    y3, s3, q3 = _bn_relu_conv1x1_stats(y2, sc2, sh2, w3, th)
    sc3, sh3 = _bn_scale_shift(jnp.sum(s3, axis=0), jnp.sum(q3, axis=0), g3, b3, cnt)

    # Stage 4: BN3-apply + identity residual (bf16) + final ReLU.
    out = _bn_residual_relu(y3, sc3, sh3, x_nhwc, th)                   # bf16 NHWC

    # Back to NCHW (transpose in bf16, cast to f32 last to match the module dtype).
    return jnp.transpose(out, (0, 3, 1, 2)).astype(jnp.float32)


# ---------------------------------------------------------------------------
# Pure-JAX f32 reference (correctness check)
# ---------------------------------------------------------------------------
def ref_forward(x, params):
    dn = ("NCHW", "OIHW", "NCHW")

    def bn(y, g, b):
        mean = jnp.mean(y, axis=(0, 2, 3), keepdims=True)
        var = jnp.mean((y - mean) ** 2, axis=(0, 2, 3), keepdims=True)
        return ((y - mean) * jax.lax.rsqrt(var + EPS)
                * g.reshape(1, -1, 1, 1) + b.reshape(1, -1, 1, 1))

    w1 = params["w1"].T[:, :, None, None]
    cin2, cout2 = params["w2"].shape[1], params["w2"].shape[2]
    w2 = params["w2"].reshape(3, 3, cin2, cout2).transpose(3, 2, 0, 1)
    w3 = params["w3"].T[:, :, None, None]

    o = jax.lax.conv_general_dilated(x, w1, (1, 1), "VALID", dimension_numbers=dn)
    o = jnp.maximum(bn(o, params["g1"], params["b1"]), 0.0)
    o = jax.lax.conv_general_dilated(o, w2, (1, 1), ((1, 1), (1, 1)),
                                     dimension_numbers=dn)
    o = jnp.maximum(bn(o, params["g2"], params["b2"]), 0.0)
    o = jax.lax.conv_general_dilated(o, w3, (1, 1), "VALID", dimension_numbers=dn)
    o = bn(o, params["g3"], params["b3"]) + x
    return jnp.maximum(o, 0.0)


# ---------------------------------------------------------------------------
if __name__ == "__main__":
    key = jax.random.PRNGKey(0)
    N, H, W = 2, 16, 16
    planes = 16
    inplanes = planes * 4        # so the downsample=None identity residual is valid

    ks = jax.random.split(key, 10)
    x = jax.random.normal(ks[0], (N, inplanes, H, W), jnp.float32)

    params = dict(
        w1=0.1 * jax.random.normal(ks[1], (inplanes, planes), jnp.float32),
        g1=1.0 + 0.1 * jax.random.normal(ks[2], (planes,), jnp.float32),
        b1=0.1 * jax.random.normal(ks[3], (planes,), jnp.float32),
        w2=0.1 * jax.random.normal(ks[4], (9, planes, planes), jnp.float32),
        g2=1.0 + 0.1 * jax.random.normal(ks[5], (planes,), jnp.float32),
        b2=0.1 * jax.random.normal(ks[6], (planes,), jnp.float32),
        w3=0.1 * jax.random.normal(ks[7], (planes, planes * 4), jnp.float32),
        g3=1.0 + 0.1 * jax.random.normal(ks[8], (planes * 4,), jnp.float32),
        b3=0.1 * jax.random.normal(ks[9], (planes * 4,), jnp.float32),
    )

    fwd = jax.jit(bottleneck_forward)
    out = jax.block_until_ready(fwd(x, params))
    ref = jax.block_until_ready(ref_forward(x, params))

    assert out.shape == (N, planes * 4, H, W), out.shape
    # bf16 MXU operands / bf16 intermediates vs the f32 reference across three
    # conv+BN stages -> loose tolerance.
    if not jnp.allclose(out, ref, rtol=2e-2, atol=1e-1):
        err = float(jnp.max(jnp.abs(out - ref)))
        raise AssertionError(f"Pallas Bottleneck mismatch, max abs err={err}")

    print("KERNEL_OK")
</pallas_src>

<mosaic_0001>
module attributes {stable_mosaic.version = 11 : i64} {
  func.func @_conv1x1_stats_kernel(%arg0: i32, %arg1: i32, %arg2: memref<1x16x16x64xbf16, #tpu.memory_space<vmem>>, %arg3: memref<64x16xbf16, #tpu.memory_space<vmem>>, %arg4: memref<1x16x16x16xbf16, #tpu.memory_space<vmem>>, %arg5: memref<1x1x16xf32, #tpu.memory_space<vmem>>, %arg6: memref<1x1x16xf32, #tpu.memory_space<vmem>>) attributes {dimension_semantics = [#tpu.dimension_semantics<parallel>, #tpu.dimension_semantics<arbitrary>], iteration_bounds = array<i64: 2, 1>, scalar_prefetch = 0 : i64, scratch_operands = 0 : i64, tpu.core_type = #tpu.core_type<tc>, window_params = [{transform_indices = @transform_0, window_bounds = array<i64: 1, 16, 16, 64>}, {pipeline_mode = #tpu.pipeline_mode<synchronous>, transform_indices = @transform_1, window_bounds = array<i64: 64, 16>}, {transform_indices = @transform_2, window_bounds = array<i64: 1, 16, 16, 16>}, {transform_indices = @transform_3, window_bounds = array<i64: 1, 1, 16>}, {transform_indices = @transform_4, window_bounds = array<i64: 1, 1, 16>}]} {
    %c0_i32 = arith.constant 0 : i32
    %0 = arith.cmpi eq, %arg1, %c0_i32 : i32
    %1 = arith.extui %0 : i1 to i32
    %c0_i32_0 = arith.constant 0 : i32
    %2 = arith.cmpi ne, %1, %c0_i32_0 : i32
    scf.if %2 {
      %cst_24 = arith.constant 0.000000e+00 : f32
      %23 = vector.broadcast %cst_24 : f32 to vector<1x1x16xf32>
      %c0_25 = arith.constant 0 : index
      %c0_26 = arith.constant 0 : index
      %c0_27 = arith.constant 0 : index
      %24 = vector.load %arg5[%c0_25, %c0_26, %c0_27] : memref<1x1x16xf32, #tpu.memory_space<vmem>>, vector<1x1x16xf32>
      tpu.vector_store %arg5[%c0_25, %c0_26, %c0_27], %23 {strides = array<i32>} : memref<1x1x16xf32, #tpu.memory_space<vmem>>, vector<1x1x16xf32>,
      %cst_28 = arith.constant 0.000000e+00 : f32
      %25 = vector.broadcast %cst_28 : f32 to vector<1x1x16xf32>
      %c0_29 = arith.constant 0 : index
      %c0_30 = arith.constant 0 : index
      %c0_31 = arith.constant 0 : index
      %26 = vector.load %arg6[%c0_29, %c0_30, %c0_31] : memref<1x1x16xf32, #tpu.memory_space<vmem>>, vector<1x1x16xf32>
      tpu.vector_store %arg6[%c0_29, %c0_30, %c0_31], %25 {strides = array<i32>} : memref<1x1x16xf32, #tpu.memory_space<vmem>>, vector<1x1x16xf32>,
    } else {
    }
    %c0 = arith.constant 0 : index
    %c0_1 = arith.constant 0 : index
    %c0_2 = arith.constant 0 : index
    %c0_3 = arith.constant 0 : index
    %3 = vector.load %arg2[%c0, %c0_1, %c0_2, %c0_3] : memref<1x16x16x64xbf16, #tpu.memory_space<vmem>>, vector<1x16x16x64xbf16>
    %4 = vector.shape_cast %3 : vector<1x16x16x64xbf16> to vector<256x64xbf16>
    %c0_4 = arith.constant 0 : index
    %c0_5 = arith.constant 0 : index
    %5 = vector.load %arg3[%c0_4, %c0_5] : memref<64x16xbf16, #tpu.memory_space<vmem>>, vector<64x16xbf16>
    %cst = arith.constant dense<0.000000e+00> : vector<256x16xf32>
    %6 = tpu.matmul %4, %5, %cst {dimension_numbers = #tpu.dot_dimension_numbers<[1], [0], [0], [1], [0, 0, 1, 1], [], []>} : vector<256x64xbf16>, vector<64x16xbf16>, vector<256x16xf32> -> vector<256x16xf32>
    %7 = vector.shape_cast %6 : vector<256x16xf32> to vector<1x16x16x16xf32>
    %8 = arith.truncf %7 : vector<1x16x16x16xf32> to vector<1x16x16x16xbf16>
    %c0_6 = arith.constant 0 : index
    %c0_7 = arith.constant 0 : index
    %c0_8 = arith.constant 0 : index
    %c0_9 = arith.constant 0 : index
    %9 = vector.load %arg4[%c0_6, %c0_7, %c0_8, %c0_9] : memref<1x16x16x16xbf16, #tpu.memory_space<vmem>>, vector<1x16x16x16xbf16>
    tpu.vector_store %arg4[%c0_6, %c0_7, %c0_8, %c0_9], %8 {strides = array<i32>} : memref<1x16x16x16xbf16, #tpu.memory_space<vmem>>, vector<1x16x16x16xbf16>,
    %c0_10 = arith.constant 0 : index
    %c0_11 = arith.constant 0 : index
    %c0_12 = arith.constant 0 : index
    %10 = vector.load %arg5[%c0_10, %c0_11, %c0_12] : memref<1x1x16xf32, #tpu.memory_space<vmem>>, vector<1x1x16xf32>
    %cst_13 = arith.constant dense<0.000000e+00> : vector<16xf32>
    %11 = vector.multi_reduction <add>, %6, %cst_13 [0] : vector<256x16xf32> to vector<16xf32>
    %12 = vector.shape_cast %11 : vector<16xf32> to vector<1x16xf32>
    %13 = vector.shape_cast %12 : vector<1x16xf32> to vector<1x1x16xf32>
    %14 = arith.addf %10, %13 : vector<1x1x16xf32>
    %c0_14 = arith.constant 0 : index
    %c0_15 = arith.constant 0 : index
    %c0_16 = arith.constant 0 : index
    %15 = vector.load %arg5[%c0_14, %c0_15, %c0_16] : memref<1x1x16xf32, #tpu.memory_space<vmem>>, vector<1x1x16xf32>
    tpu.vector_store %arg5[%c0_14, %c0_15, %c0_16], %14 {strides = array<i32>} : memref<1x1x16xf32, #tpu.memory_space<vmem>>, vector<1x1x16xf32>,
    %c0_17 = arith.constant 0 : index
    %c0_18 = arith.constant 0 : index
    %c0_19 = arith.constant 0 : index
    %16 = vector.load %arg6[%c0_17, %c0_18, %c0_19] : memref<1x1x16xf32, #tpu.memory_space<vmem>>, vector<1x1x16xf32>
    %17 = arith.mulf %6, %6 : vector<256x16xf32>
    %cst_20 = arith.constant dense<0.000000e+00> : vector<16xf32>
    %18 = vector.multi_reduction <add>, %17, %cst_20 [0] : vector<256x16xf32> to vector<16xf32>
    %19 = vector.shape_cast %18 : vector<16xf32> to vector<1x16xf32>
    %20 = vector.shape_cast %19 : vector<1x16xf32> to vector<1x1x16xf32>
    %21 = arith.addf %16, %20 : vector<1x1x16xf32>
    %c0_21 = arith.constant 0 : index
    %c0_22 = arith.constant 0 : index
    %c0_23 = arith.constant 0 : index
    %22 = vector.load %arg6[%c0_21, %c0_22, %c0_23] : memref<1x1x16xf32, #tpu.memory_space<vmem>>, vector<1x1x16xf32>
    tpu.vector_store %arg6[%c0_21, %c0_22, %c0_23], %21 {strides = array<i32>} : memref<1x1x16xf32, #tpu.memory_space<vmem>>, vector<1x1x16xf32>,
    return
  }
  func.func @transform_0(%arg0: i32, %arg1: i32) -> (i32, i32, i32, i32) {
    %c0_i32 = arith.constant 0 : i32
    %c0_i32_0 = arith.constant 0 : i32
    %c0_i32_1 = arith.constant 0 : i32
    return %arg0, %arg1, %c0_i32, %c0_i32_0 : i32, i32, i32, i32
  }
  func.func @transform_1(%arg0: i32, %arg1: i32) -> (i32, i32) {
    %c0_i32 = arith.constant 0 : i32
    %c0_i32_0 = arith.constant 0 : i32
    %c0_i32_1 = arith.constant 0 : i32
    return %c0_i32, %c0_i32_0 : i32, i32
  }
  func.func @transform_2(%arg0: i32, %arg1: i32) -> (i32, i32, i32, i32) {
    %c0_i32 = arith.constant 0 : i32
    %c0_i32_0 = arith.constant 0 : i32
    %c0_i32_1 = arith.constant 0 : i32
    return %arg0, %arg1, %c0_i32, %c0_i32_0 : i32, i32, i32, i32
  }
  func.func @transform_3(%arg0: i32, %arg1: i32) -> (i32, i32, i32) {
    %c0_i32 = arith.constant 0 : i32
    %c0_i32_0 = arith.constant 0 : i32
    %c0_i32_1 = arith.constant 0 : i32
    return %arg0, %c0_i32, %c0_i32_0 : i32, i32, i32
  }
  func.func @transform_4(%arg0: i32, %arg1: i32) -> (i32, i32, i32) {
    %c0_i32 = arith.constant 0 : i32
    %c0_i32_0 = arith.constant 0 : i32
    %c0_i32_1 = arith.constant 0 : i32
    return %arg0, %c0_i32, %c0_i32_0 : i32, i32, i32
  }
}

module attributes {stable_mosaic.version = 11 : i64} {
  func.func @_bn_relu_conv1x1_stats_kernel(%arg0: i32, %arg1: i32, %arg2: memref<1x16x16x16xbf16, #tpu.memory_space<vmem>>, %arg3: memref<1x16xf32, #tpu.memory_space<vmem>>, %arg4: memref<1x16xf32, #tpu.memory_space<vmem>>, %arg5: memref<16x64xbf16, #tpu.memory_space<vmem>>, %arg6: memref<1x16x16x64xbf16, #tpu.memory_space<vmem>>, %arg7: memref<1x1x64xf32, #tpu.memory_space<vmem>>, %arg8: memref<1x1x64xf32, #tpu.memory_space<vmem>>) attributes {dimension_semantics = [#tpu.dimension_semantics<parallel>, #tpu.dimension_semantics<arbitrary>], iteration_bounds = array<i64: 2, 1>, scalar_prefetch = 0 : i64, scratch_operands = 0 : i64, tpu.core_type = #tpu.core_type<tc>, window_params = [{transform_indices = @transform_0, window_bounds = array<i64: 1, 16, 16, 16>}, {pipeline_mode = #tpu.pipeline_mode<synchronous>, transform_indices = @transform_1, window_bounds = array<i64: 1, 16>}, {pipeline_mode = #tpu.pipeline_mode<synchronous>, transform_indices = @transform_2, window_bounds = array<i64: 1, 16>}, {pipeline_mode = #tpu.pipeline_mode<synchronous>, transform_indices = @transform_3, window_bounds = array<i64: 16, 64>}, {transform_indices = @transform_4, window_bounds = array<i64: 1, 16, 16, 64>}, {transform_indices = @transform_5, window_bounds = array<i64: 1, 1, 64>}, {transform_indices = @transform_6, window_bounds = array<i64: 1, 1, 64>}]} {
    %c0_i32 = arith.constant 0 : i32
    %0 = arith.cmpi eq, %arg1, %c0_i32 : i32
    %1 = arith.extui %0 : i1 to i32
    %c0_i32_0 = arith.constant 0 : i32
    %2 = arith.cmpi ne, %1, %c0_i32_0 : i32
    scf.if %2 {
      %cst_29 = arith.constant 0.000000e+00 : f32
      %33 = vector.broadcast %cst_29 : f32 to vector<1x1x64xf32>
      %c0_30 = arith.constant 0 : index
      %c0_31 = arith.constant 0 : index
      %c0_32 = arith.constant 0 : index
      %34 = vector.load %arg7[%c0_30, %c0_31, %c0_32] : memref<1x1x64xf32, #tpu.memory_space<vmem>>, vector<1x1x64xf32>
      tpu.vector_store %arg7[%c0_30, %c0_31, %c0_32], %33 {strides = array<i32>} : memref<1x1x64xf32, #tpu.memory_space<vmem>>, vector<1x1x64xf32>,
      %cst_33 = arith.constant 0.000000e+00 : f32
      %35 = vector.broadcast %cst_33 : f32 to vector<1x1x64xf32>
      %c0_34 = arith.constant 0 : index
      %c0_35 = arith.constant 0 : index
      %c0_36 = arith.constant 0 : index
      %36 = vector.load %arg8[%c0_34, %c0_35, %c0_36] : memref<1x1x64xf32, #tpu.memory_space<vmem>>, vector<1x1x64xf32>
      tpu.vector_store %arg8[%c0_34, %c0_35, %c0_36], %35 {strides = array<i32>} : memref<1x1x64xf32, #tpu.memory_space<vmem>>, vector<1x1x64xf32>,
    } else {
    }
    %c0 = arith.constant 0 : index
    %c0_1 = arith.constant 0 : index
    %c0_2 = arith.constant 0 : index
    %c0_3 = arith.constant 0 : index
    %3 = vector.load %arg2[%c0, %c0_1, %c0_2, %c0_3] : memref<1x16x16x16xbf16, #tpu.memory_space<vmem>>, vector<1x16x16x16xbf16>
    %4 = vector.shape_cast %3 : vector<1x16x16x16xbf16> to vector<256x16xbf16>
    %5 = arith.extf %4 : vector<256x16xbf16> to vector<256x16xf32>
    %c0_4 = arith.constant 0 : index
    %c0_5 = arith.constant 0 : index
    %6 = vector.load %arg3[%c0_4, %c0_5] : memref<1x16xf32, #tpu.memory_space<vmem>>, vector<1x16xf32>
    %7 = vector.broadcast %6 : vector<1x16xf32> to vector<256x16xf32>
    %8 = arith.mulf %5, %7 : vector<256x16xf32>
    %c0_6 = arith.constant 0 : index
    %c0_7 = arith.constant 0 : index
    %9 = vector.load %arg4[%c0_6, %c0_7] : memref<1x16xf32, #tpu.memory_space<vmem>>, vector<1x16xf32>
    %10 = vector.broadcast %9 : vector<1x16xf32> to vector<256x16xf32>
    %11 = arith.addf %8, %10 : vector<256x16xf32>
    %cst = arith.constant 0.000000e+00 : f32
    %12 = vector.broadcast %cst : f32 to vector<256x16xf32>
    %13 = arith.maximumf %11, %12 : vector<256x16xf32>
    %14 = arith.truncf %13 : vector<256x16xf32> to vector<256x16xbf16>
    %c0_8 = arith.constant 0 : index
    %c0_9 = arith.constant 0 : index
    %15 = vector.load %arg5[%c0_8, %c0_9] : memref<16x64xbf16, #tpu.memory_space<vmem>>, vector<16x64xbf16>
    %cst_10 = arith.constant dense<0.000000e+00> : vector<256x64xf32>
    %16 = tpu.matmul %14, %15, %cst_10 {dimension_numbers = #tpu.dot_dimension_numbers<[1], [0], [0], [1], [0, 0, 1, 1], [], []>} : vector<256x16xbf16>, vector<16x64xbf16>, vector<256x64xf32> -> vector<256x64xf32>
    %17 = vector.shape_cast %16 : vector<256x64xf32> to vector<1x16x16x64xf32>
    %18 = arith.truncf %17 : vector<1x16x16x64xf32> to vector<1x16x16x64xbf16>
    %c0_11 = arith.constant 0 : index
    %c0_12 = arith.constant 0 : index
    %c0_13 = arith.constant 0 : index
    %c0_14 = arith.constant 0 : index
    %19 = vector.load %arg6[%c0_11, %c0_12, %c0_13, %c0_14] : memref<1x16x16x64xbf16, #tpu.memory_space<vmem>>, vector<1x16x16x64xbf16>
    tpu.vector_store %arg6[%c0_11, %c0_12, %c0_13, %c0_14], %18 {strides = array<i32>} : memref<1x16x16x64xbf16, #tpu.memory_space<vmem>>, vector<1x16x16x64xbf16>,
    %c0_15 = arith.constant 0 : index
    %c0_16 = arith.constant 0 : index
    %c0_17 = arith.constant 0 : index
    %20 = vector.load %arg7[%c0_15, %c0_16, %c0_17] : memref<1x1x64xf32, #tpu.memory_space<vmem>>, vector<1x1x64xf32>
    %cst_18 = arith.constant dense<0.000000e+00> : vector<64xf32>
    %21 = vector.multi_reduction <add>, %16, %cst_18 [0] : vector<256x64xf32> to vector<64xf32>
    %22 = vector.shape_cast %21 : vector<64xf32> to vector<1x64xf32>
    %23 = vector.shape_cast %22 : vector<1x64xf32> to vector<1x1x64xf32>
    %24 = arith.addf %20, %23 : vector<1x1x64xf32>
    %c0_19 = arith.constant 0 : index
    %c0_20 = arith.constant 0 : index
    %c0_21 = arith.constant 0 : index
    %25 = vector.load %arg7[%c0_19, %c0_20, %c0_21] : memref<1x1x64xf32, #tpu.memory_space<vmem>>, vector<1x1x64xf32>
    tpu.vector_store %arg7[%c0_19, %c0_20, %c0_21], %24 {strides = array<i32>} : memref<1x1x64xf32, #tpu.memory_space<vmem>>, vector<1x1x64xf32>,
    %c0_22 = arith.constant 0 : index
    %c0_23 = arith.constant 0 : index
    %c0_24 = arith.constant 0 : index
    %26 = vector.load %arg8[%c0_22, %c0_23, %c0_24] : memref<1x1x64xf32, #tpu.memory_space<vmem>>, vector<1x1x64xf32>
    %27 = arith.mulf %16, %16 : vector<256x64xf32>
    %cst_25 = arith.constant dense<0.000000e+00> : vector<64xf32>
    %28 = vector.multi_reduction <add>, %27, %cst_25 [0] : vector<256x64xf32> to vector<64xf32>
    %29 = vector.shape_cast %28 : vector<64xf32> to vector<1x64xf32>
    %30 = vector.shape_cast %29 : vector<1x64xf32> to vector<1x1x64xf32>
    %31 = arith.addf %26, %30 : vector<1x1x64xf32>
    %c0_26 = arith.constant 0 : index
    %c0_27 = arith.constant 0 : index
    %c0_28 = arith.constant 0 : index
    %32 = vector.load %arg8[%c0_26, %c0_27, %c0_28] : memref<1x1x64xf32, #tpu.memory_space<vmem>>, vector<1x1x64xf32>
    tpu.vector_store %arg8[%c0_26, %c0_27, %c0_28], %31 {strides = array<i32>} : memref<1x1x64xf32, #tpu.memory_space<vmem>>, vector<1x1x64xf32>,
    return
  }
  func.func @transform_0(%arg0: i32, %arg1: i32) -> (i32, i32, i32, i32) {
    %c0_i32 = arith.constant 0 : i32
    %c0_i32_0 = arith.constant 0 : i32
    %c0_i32_1 = arith.constant 0 : i32
    return %arg0, %arg1, %c0_i32, %c0_i32_0 : i32, i32, i32, i32
  }
  func.func @transform_1(%arg0: i32, %arg1: i32) -> (i32, i32) {
    %c0_i32 = arith.constant 0 : i32
    %c0_i32_0 = arith.constant 0 : i32
    %c0_i32_1 = arith.constant 0 : i32
    return %c0_i32, %c0_i32_0 : i32, i32
  }
  func.func @transform_2(%arg0: i32, %arg1: i32) -> (i32, i32) {
    %c0_i32 = arith.constant 0 : i32
    %c0_i32_0 = arith.constant 0 : i32
    %c0_i32_1 = arith.constant 0 : i32
    return %c0_i32, %c0_i32_0 : i32, i32
  }
  func.func @transform_3(%arg0: i32, %arg1: i32) -> (i32, i32) {
    %c0_i32 = arith.constant 0 : i32
    %c0_i32_0 = arith.constant 0 : i32
    %c0_i32_1 = arith.constant 0 : i32
    return %c0_i32, %c0_i32_0 : i32, i32
  }
  func.func @transform_4(%arg0: i32, %arg1: i32) -> (i32, i32, i32, i32) {
    %c0_i32 = arith.constant 0 : i32
    %c0_i32_0 = arith.constant 0 : i32
    %c0_i32_1 = arith.constant 0 : i32
    return %arg0, %arg1, %c0_i32, %c0_i32_0 : i32, i32, i32, i32
  }
  func.func @transform_5(%arg0: i32, %arg1: i32) -> (i32, i32, i32) {
    %c0_i32 = arith.constant 0 : i32
    %c0_i32_0 = arith.constant 0 : i32
    %c0_i32_1 = arith.constant 0 : i32
    return %arg0, %c0_i32, %c0_i32_0 : i32, i32, i32
  }
  func.func @transform_6(%arg0: i32, %arg1: i32) -> (i32, i32, i32) {
    %c0_i32 = arith.constant 0 : i32
    %c0_i32_0 = arith.constant 0 : i32
    %c0_i32_1 = arith.constant 0 : i32
    return %arg0, %c0_i32, %c0_i32_0 : i32, i32, i32
  }
}

module attributes {stable_mosaic.version = 11 : i64} {
  func.func @_bn_residual_relu_kernel(%arg0: i32, %arg1: i32, %arg2: memref<1x16x16x64xbf16, #tpu.memory_space<vmem>>, %arg3: memref<1x64xf32, #tpu.memory_space<vmem>>, %arg4: memref<1x64xf32, #tpu.memory_space<vmem>>, %arg5: memref<1x16x16x64xbf16, #tpu.memory_space<vmem>>, %arg6: memref<1x16x16x64xbf16, #tpu.memory_space<vmem>>) attributes {dimension_semantics = [#tpu.dimension_semantics<parallel>, #tpu.dimension_semantics<parallel>], iteration_bounds = array<i64: 2, 1>, scalar_prefetch = 0 : i64, scratch_operands = 0 : i64, tpu.core_type = #tpu.core_type<tc>, window_params = [{transform_indices = @transform_0, window_bounds = array<i64: 1, 16, 16, 64>}, {pipeline_mode = #tpu.pipeline_mode<synchronous>, transform_indices = @transform_1, window_bounds = array<i64: 1, 64>}, {pipeline_mode = #tpu.pipeline_mode<synchronous>, transform_indices = @transform_2, window_bounds = array<i64: 1, 64>}, {transform_indices = @transform_3, window_bounds = array<i64: 1, 16, 16, 64>}, {transform_indices = @transform_4, window_bounds = array<i64: 1, 16, 16, 64>}]} {
    %c0 = arith.constant 0 : index
    %c0_0 = arith.constant 0 : index
    %c0_1 = arith.constant 0 : index
    %c0_2 = arith.constant 0 : index
    %0 = vector.load %arg2[%c0, %c0_0, %c0_1, %c0_2] : memref<1x16x16x64xbf16, #tpu.memory_space<vmem>>, vector<1x16x16x64xbf16>
    %1 = vector.shape_cast %0 : vector<1x16x16x64xbf16> to vector<256x64xbf16>
    %2 = arith.extf %1 : vector<256x64xbf16> to vector<256x64xf32>
    %c0_3 = arith.constant 0 : index
    %c0_4 = arith.constant 0 : index
    %c0_5 = arith.constant 0 : index
    %c0_6 = arith.constant 0 : index
    %3 = vector.load %arg5[%c0_3, %c0_4, %c0_5, %c0_6] : memref<1x16x16x64xbf16, #tpu.memory_space<vmem>>, vector<1x16x16x64xbf16>
    %4 = vector.shape_cast %3 : vector<1x16x16x64xbf16> to vector<256x64xbf16>
    %5 = arith.extf %4 : vector<256x64xbf16> to vector<256x64xf32>
    %c0_7 = arith.constant 0 : index
    %c0_8 = arith.constant 0 : index
    %6 = vector.load %arg3[%c0_7, %c0_8] : memref<1x64xf32, #tpu.memory_space<vmem>>, vector<1x64xf32>
    %7 = vector.broadcast %6 : vector<1x64xf32> to vector<256x64xf32>
    %8 = arith.mulf %2, %7 : vector<256x64xf32>
    %c0_9 = arith.constant 0 : index
    %c0_10 = arith.constant 0 : index
    %9 = vector.load %arg4[%c0_9, %c0_10] : memref<1x64xf32, #tpu.memory_space<vmem>>, vector<1x64xf32>
    %10 = vector.broadcast %9 : vector<1x64xf32> to vector<256x64xf32>
    %11 = arith.addf %8, %10 : vector<256x64xf32>
    %12 = arith.addf %11, %5 : vector<256x64xf32>
    %cst = arith.constant 0.000000e+00 : f32
    %13 = vector.broadcast %cst : f32 to vector<256x64xf32>
    %14 = arith.maximumf %12, %13 : vector<256x64xf32>
    %15 = vector.shape_cast %14 : vector<256x64xf32> to vector<1x16x16x64xf32>
    %16 = arith.truncf %15 : vector<1x16x16x64xf32> to vector<1x16x16x64xbf16>
    %c0_11 = arith.constant 0 : index
    %c0_12 = arith.constant 0 : index
    %c0_13 = arith.constant 0 : index
    %c0_14 = arith.constant 0 : index
    %17 = vector.load %arg6[%c0_11, %c0_12, %c0_13, %c0_14] : memref<1x16x16x64xbf16, #tpu.memory_space<vmem>>, vector<1x16x16x64xbf16>
    tpu.vector_store %arg6[%c0_11, %c0_12, %c0_13, %c0_14], %16 {strides = array<i32>} : memref<1x16x16x64xbf16, #tpu.memory_space<vmem>>, vector<1x16x16x64xbf16>,
    return
  }
  func.func @transform_0(%arg0: i32, %arg1: i32) -> (i32, i32, i32, i32) {
    %c0_i32 = arith.constant 0 : i32
    %c0_i32_0 = arith.constant 0 : i32
    %c0_i32_1 = arith.constant 0 : i32
    return %arg0, %arg1, %c0_i32, %c0_i32_0 : i32, i32, i32, i32
  }
  func.func @transform_1(%arg0: i32, %arg1: i32) -> (i32, i32) {
    %c0_i32 = arith.constant 0 : i32
    %c0_i32_0 = arith.constant 0 : i32
    %c0_i32_1 = arith.constant 0 : i32
    return %c0_i32, %c0_i32_0 : i32, i32
  }
  func.func @transform_2(%arg0: i32, %arg1: i32) -> (i32, i32) {
    %c0_i32 = arith.constant 0 : i32
    %c0_i32_0 = arith.constant 0 : i32
    %c0_i32_1 = arith.constant 0 : i32
    return %c0_i32, %c0_i32_0 : i32, i32
  }
  func.func @transform_3(%arg0: i32, %arg1: i32) -> (i32, i32, i32, i32) {
    %c0_i32 = arith.constant 0 : i32
    %c0_i32_0 = arith.constant 0 : i32
    %c0_i32_1 = arith.constant 0 : i32
    return %arg0, %arg1, %c0_i32, %c0_i32_0 : i32, i32, i32, i32
  }
  func.func @transform_4(%arg0: i32, %arg1: i32) -> (i32, i32, i32, i32) {
    %c0_i32 = arith.constant 0 : i32
    %c0_i32_0 = arith.constant 0 : i32
    %c0_i32_1 = arith.constant 0 : i32
    return %arg0, %arg1, %c0_i32, %c0_i32_0 : i32, i32, i32, i32
  }
}

module attributes {stable_mosaic.version = 11 : i64} {
  func.func @kernel(%arg0: i32, %arg1: i32, %arg2: memref<1x16x16x16xbf16, #tpu.memory_space<vmem>>, %arg3: memref<1x1x16x16xbf16, #tpu.memory_space<vmem>>, %arg4: memref<1x1x16x16xbf16, #tpu.memory_space<vmem>>, %arg5: memref<1x16xf32, #tpu.memory_space<vmem>>, %arg6: memref<1x16xf32, #tpu.memory_space<vmem>>, %arg7: memref<9x16x16xbf16, #tpu.memory_space<vmem>>, %arg8: memref<1x16x16x16xbf16, #tpu.memory_space<vmem>>, %arg9: memref<1x1x16xf32, #tpu.memory_space<vmem>>, %arg10: memref<1x1x16xf32, #tpu.memory_space<vmem>>) attributes {dimension_semantics = [#tpu.dimension_semantics<parallel>, #tpu.dimension_semantics<arbitrary>], iteration_bounds = array<i64: 2, 1>, scalar_prefetch = 0 : i64, scratch_operands = 0 : i64, tpu.core_type = #tpu.core_type<tc>, window_params = [{transform_indices = @transform_0, window_bounds = array<i64: 1, 16, 16, 16>}, {transform_indices = @transform_1, window_bounds = array<i64: 1, 1, 16, 16>}, {transform_indices = @transform_2, window_bounds = array<i64: 1, 1, 16, 16>}, {pipeline_mode = #tpu.pipeline_mode<synchronous>, transform_indices = @transform_3, window_bounds = array<i64: 1, 16>}, {pipeline_mode = #tpu.pipeline_mode<synchronous>, transform_indices = @transform_4, window_bounds = array<i64: 1, 16>}, {pipeline_mode = #tpu.pipeline_mode<synchronous>, transform_indices = @transform_5, window_bounds = array<i64: 9, 16, 16>}, {transform_indices = @transform_6, window_bounds = array<i64: 1, 16, 16, 16>}, {transform_indices = @transform_7, window_bounds = array<i64: 1, 1, 16>}, {transform_indices = @transform_8, window_bounds = array<i64: 1, 1, 16>}]} {
    %c0_i32 = arith.constant 0 : i32
    %0 = arith.cmpi eq, %arg1, %c0_i32 : i32
    %1 = arith.extui %0 : i1 to i32
    %c0_i32_0 = arith.constant 0 : i32
    %2 = arith.cmpi ne, %1, %c0_i32_0 : i32
    scf.if %2 {
      %cst_68 = arith.constant 0.000000e+00 : f32
      %125 = vector.broadcast %cst_68 : f32 to vector<1x1x16xf32>
      %c0_69 = arith.constant 0 : index
      %c0_70 = arith.constant 0 : index
      %c0_71 = arith.constant 0 : index
      %126 = vector.load %arg9[%c0_69, %c0_70, %c0_71] : memref<1x1x16xf32, #tpu.memory_space<vmem>>, vector<1x1x16xf32>
      tpu.vector_store %arg9[%c0_69, %c0_70, %c0_71], %125 {strides = array<i32>} : memref<1x1x16xf32, #tpu.memory_space<vmem>>, vector<1x1x16xf32>,
      %cst_72 = arith.constant 0.000000e+00 : f32
      %127 = vector.broadcast %cst_72 : f32 to vector<1x1x16xf32>
      %c0_73 = arith.constant 0 : index
      %c0_74 = arith.constant 0 : index
      %c0_75 = arith.constant 0 : index
      %128 = vector.load %arg10[%c0_73, %c0_74, %c0_75] : memref<1x1x16xf32, #tpu.memory_space<vmem>>, vector<1x1x16xf32>
      tpu.vector_store %arg10[%c0_73, %c0_74, %c0_75], %127 {strides = array<i32>} : memref<1x1x16xf32, #tpu.memory_space<vmem>>, vector<1x1x16xf32>,
    } else {
    }
    %c0 = arith.constant 0 : index
    %c0_1 = arith.constant 0 : index
    %3 = vector.load %arg5[%c0, %c0_1] : memref<1x16xf32, #tpu.memory_space<vmem>>, vector<1x16xf32>
    %c0_2 = arith.constant 0 : index
    %c0_3 = arith.constant 0 : index
    %4 = vector.load %arg6[%c0_2, %c0_3] : memref<1x16xf32, #tpu.memory_space<vmem>>, vector<1x16xf32>
    %c0_4 = arith.constant 0 : index
    %c0_5 = arith.constant 0 : index
    %c0_6 = arith.constant 0 : index
    %c0_7 = arith.constant 0 : index
    %5 = vector.load %arg2[%c0_4, %c0_5, %c0_6, %c0_7] : memref<1x16x16x16xbf16, #tpu.memory_space<vmem>>, vector<1x16x16x16xbf16>
    %6 = vector.shape_cast %5 : vector<1x16x16x16xbf16> to vector<256x16xbf16>
    %7 = arith.extf %6 : vector<256x16xbf16> to vector<256x16xf32>
    %8 = vector.broadcast %3 : vector<1x16xf32> to vector<256x16xf32>
    %9 = arith.mulf %7, %8 : vector<256x16xf32>
    %10 = vector.broadcast %4 : vector<1x16xf32> to vector<256x16xf32>
    %11 = arith.addf %9, %10 : vector<256x16xf32>
    %cst = arith.constant 0.000000e+00 : f32
    %12 = vector.broadcast %cst : f32 to vector<256x16xf32>
    %13 = arith.maximumf %11, %12 : vector<256x16xf32>
    %14 = vector.shape_cast %13 : vector<256x16xf32> to vector<16x16x16xf32>
    %c0_8 = arith.constant 0 : index
    %c0_9 = arith.constant 0 : index
    %c0_10 = arith.constant 0 : index
    %c0_11 = arith.constant 0 : index
    %15 = vector.load %arg3[%c0_8, %c0_9, %c0_10, %c0_11] : memref<1x1x16x16xbf16, #tpu.memory_space<vmem>>, vector<1x1x16x16xbf16>
    %16 = vector.shape_cast %15 : vector<1x1x16x16xbf16> to vector<16x16xbf16>
    %17 = arith.extf %16 : vector<16x16xbf16> to vector<16x16xf32>
    %18 = vector.broadcast %3 : vector<1x16xf32> to vector<16x16xf32>
    %19 = arith.mulf %17, %18 : vector<16x16xf32>
    %20 = vector.broadcast %4 : vector<1x16xf32> to vector<16x16xf32>
    %21 = arith.addf %19, %20 : vector<16x16xf32>
    %cst_12 = arith.constant 0.000000e+00 : f32
    %22 = vector.broadcast %cst_12 : f32 to vector<16x16xf32>
    %23 = arith.maximumf %21, %22 : vector<16x16xf32>
    %24 = vector.shape_cast %23 : vector<16x16xf32> to vector<1x16x16xf32>
    %c0_i32_13 = arith.constant 0 : i32
    %25 = arith.cmpi sgt, %arg1, %c0_i32_13 : i32
    %26 = arith.extui %25 : i1 to i32
    %27 = arith.sitofp %26 : i32 to f32
    %28 = vector.broadcast %27 : f32 to vector<1x16x16xf32>
    %29 = arith.mulf %24, %28 : vector<1x16x16xf32>
    %c0_14 = arith.constant 0 : index
    %c0_15 = arith.constant 0 : index
    %c0_16 = arith.constant 0 : index
    %c0_17 = arith.constant 0 : index
    %30 = vector.load %arg4[%c0_14, %c0_15, %c0_16, %c0_17] : memref<1x1x16x16xbf16, #tpu.memory_space<vmem>>, vector<1x1x16x16xbf16>
    %31 = vector.shape_cast %30 : vector<1x1x16x16xbf16> to vector<16x16xbf16>
    %32 = arith.extf %31 : vector<16x16xbf16> to vector<16x16xf32>
    %33 = vector.broadcast %3 : vector<1x16xf32> to vector<16x16xf32>
    %34 = arith.mulf %32, %33 : vector<16x16xf32>
    %35 = vector.broadcast %4 : vector<1x16xf32> to vector<16x16xf32>
    %36 = arith.addf %34, %35 : vector<16x16xf32>
    %cst_18 = arith.constant 0.000000e+00 : f32
    %37 = vector.broadcast %cst_18 : f32 to vector<16x16xf32>
    %38 = arith.maximumf %36, %37 : vector<16x16xf32>
    %39 = vector.shape_cast %38 : vector<16x16xf32> to vector<1x16x16xf32>
    %c0_i32_19 = arith.constant 0 : i32
    %40 = arith.cmpi slt, %arg1, %c0_i32_19 : i32
    %41 = arith.extui %40 : i1 to i32
    %42 = arith.sitofp %41 : i32 to f32
    %43 = vector.broadcast %42 : f32 to vector<1x16x16xf32>
    %44 = arith.mulf %39, %43 : vector<1x16x16xf32>
    %45 = tpu.concatenate %29, %14, %44 in 0 : vector<1x16x16xf32>, vector<16x16x16xf32>, vector<1x16x16xf32> -> vector<18x16x16xf32>
    %cst_20 = arith.constant 0.000000e+00 : f32
    %46 = vector.broadcast %cst_20 : f32 to vector<18x1x16xf32>
    %47 = tpu.concatenate %46, %45, %46 in 1 : vector<18x1x16xf32>, vector<18x16x16xf32>, vector<18x1x16xf32> -> vector<18x18x16xf32>
    %48 = vector.extract_strided_slice %47 {offsets = [0, 0, 0], sizes = [18, 16, 16], strides = [1, 1, 1]} : vector<18x18x16xf32> to vector<18x16x16xf32>
    %49 = arith.truncf %48 : vector<18x16x16xf32> to vector<18x16x16xbf16>
    %50 = vector.extract_strided_slice %47 {offsets = [0, 1, 0], sizes = [18, 16, 16], strides = [1, 1, 1]} : vector<18x18x16xf32> to vector<18x16x16xf32>
    %51 = arith.truncf %50 : vector<18x16x16xf32> to vector<18x16x16xbf16>
    %52 = vector.extract_strided_slice %47 {offsets = [0, 2, 0], sizes = [18, 16, 16], strides = [1, 1, 1]} : vector<18x18x16xf32> to vector<18x16x16xf32>
    %53 = arith.truncf %52 : vector<18x16x16xf32> to vector<18x16x16xbf16>
    %cst_21 = arith.constant 0.000000e+00 : f32
    %54 = vector.broadcast %cst_21 : f32 to vector<256x16xf32>
    %55 = vector.extract_strided_slice %49 {offsets = [0, 0, 0], sizes = [16, 16, 16], strides = [1, 1, 1]} : vector<18x16x16xbf16> to vector<16x16x16xbf16>
    %56 = vector.shape_cast %55 : vector<16x16x16xbf16> to vector<256x16xbf16>
    %c0_22 = arith.constant 0 : index
    %c0_23 = arith.constant 0 : index
    %c0_24 = arith.constant 0 : index
    %57 = vector.load %arg7[%c0_22, %c0_23, %c0_24] : memref<9x16x16xbf16, #tpu.memory_space<vmem>>, vector<1x16x16xbf16>
    %58 = vector.shape_cast %57 : vector<1x16x16xbf16> to vector<16x16xbf16>
    %cst_25 = arith.constant dense<0.000000e+00> : vector<256x16xf32>
    %59 = tpu.matmul %56, %58, %cst_25 {dimension_numbers = #tpu.dot_dimension_numbers<[1], [0], [0], [1], [0, 0, 1, 1], [], []>} : vector<256x16xbf16>, vector<16x16xbf16>, vector<256x16xf32> -> vector<256x16xf32>
    %60 = arith.addf %54, %59 : vector<256x16xf32>
    %61 = vector.extract_strided_slice %51 {offsets = [0, 0, 0], sizes = [16, 16, 16], strides = [1, 1, 1]} : vector<18x16x16xbf16> to vector<16x16x16xbf16>
    %62 = vector.shape_cast %61 : vector<16x16x16xbf16> to vector<256x16xbf16>
    %c1 = arith.constant 1 : index
    %c0_26 = arith.constant 0 : index
    %c0_27 = arith.constant 0 : index
    %63 = vector.load %arg7[%c1, %c0_26, %c0_27] : memref<9x16x16xbf16, #tpu.memory_space<vmem>>, vector<1x16x16xbf16>
    %64 = vector.shape_cast %63 : vector<1x16x16xbf16> to vector<16x16xbf16>
    %cst_28 = arith.constant dense<0.000000e+00> : vector<256x16xf32>
    %65 = tpu.matmul %62, %64, %cst_28 {dimension_numbers = #tpu.dot_dimension_numbers<[1], [0], [0], [1], [0, 0, 1, 1], [], []>} : vector<256x16xbf16>, vector<16x16xbf16>, vector<256x16xf32> -> vector<256x16xf32>
    %66 = arith.addf %60, %65 : vector<256x16xf32>
    %67 = vector.extract_strided_slice %53 {offsets = [0, 0, 0], sizes = [16, 16, 16], strides = [1, 1, 1]} : vector<18x16x16xbf16> to vector<16x16x16xbf16>
    %68 = vector.shape_cast %67 : vector<16x16x16xbf16> to vector<256x16xbf16>
    %c2 = arith.constant 2 : index
    %c0_29 = arith.constant 0 : index
    %c0_30 = arith.constant 0 : index
    %69 = vector.load %arg7[%c2, %c0_29, %c0_30] : memref<9x16x16xbf16, #tpu.memory_space<vmem>>, vector<1x16x16xbf16>
    %70 = vector.shape_cast %69 : vector<1x16x16xbf16> to vector<16x16xbf16>
    %cst_31 = arith.constant dense<0.000000e+00> : vector<256x16xf32>
    %71 = tpu.matmul %68, %70, %cst_31 {dimension_numbers = #tpu.dot_dimension_numbers<[1], [0], [0], [1], [0, 0, 1, 1], [], []>} : vector<256x16xbf16>, vector<16x16xbf16>, vector<256x16xf32> -> vector<256x16xf32>
    %72 = arith.addf %66, %71 : vector<256x16xf32>
    %73 = vector.extract_strided_slice %49 {offsets = [1, 0, 0], sizes = [16, 16, 16], strides = [1, 1, 1]} : vector<18x16x16xbf16> to vector<16x16x16xbf16>
    %74 = vector.shape_cast %73 : vector<16x16x16xbf16> to vector<256x16xbf16>
    %c3 = arith.constant 3 : index
    %c0_32 = arith.constant 0 : index
    %c0_33 = arith.constant 0 : index
    %75 = vector.load %arg7[%c3, %c0_32, %c0_33] : memref<9x16x16xbf16, #tpu.memory_space<vmem>>, vector<1x16x16xbf16>
    %76 = vector.shape_cast %75 : vector<1x16x16xbf16> to vector<16x16xbf16>
    %cst_34 = arith.constant dense<0.000000e+00> : vector<256x16xf32>
    %77 = tpu.matmul %74, %76, %cst_34 {dimension_numbers = #tpu.dot_dimension_numbers<[1], [0], [0], [1], [0, 0, 1, 1], [], []>} : vector<256x16xbf16>, vector<16x16xbf16>, vector<256x16xf32> -> vector<256x16xf32>
    %78 = arith.addf %72, %77 : vector<256x16xf32>
    %79 = vector.extract_strided_slice %51 {offsets = [1, 0, 0], sizes = [16, 16, 16], strides = [1, 1, 1]} : vector<18x16x16xbf16> to vector<16x16x16xbf16>
    %80 = vector.shape_cast %79 : vector<16x16x16xbf16> to vector<256x16xbf16>
    %c4 = arith.constant 4 : index
    %c0_35 = arith.constant 0 : index
    %c0_36 = arith.constant 0 : index
    %81 = vector.load %arg7[%c4, %c0_35, %c0_36] : memref<9x16x16xbf16, #tpu.memory_space<vmem>>, vector<1x16x16xbf16>
    %82 = vector.shape_cast %81 : vector<1x16x16xbf16> to vector<16x16xbf16>
    %cst_37 = arith.constant dense<0.000000e+00> : vector<256x16xf32>
    %83 = tpu.matmul %80, %82, %cst_37 {dimension_numbers = #tpu.dot_dimension_numbers<[1], [0], [0], [1], [0, 0, 1, 1], [], []>} : vector<256x16xbf16>, vector<16x16xbf16>, vector<256x16xf32> -> vector<256x16xf32>
    %84 = arith.addf %78, %83 : vector<256x16xf32>
    %85 = vector.extract_strided_slice %53 {offsets = [1, 0, 0], sizes = [16, 16, 16], strides = [1, 1, 1]} : vector<18x16x16xbf16> to vector<16x16x16xbf16>
    %86 = vector.shape_cast %85 : vector<16x16x16xbf16> to vector<256x16xbf16>
    %c5 = arith.constant 5 : index
    %c0_38 = arith.constant 0 : index
    %c0_39 = arith.constant 0 : index
    %87 = vector.load %arg7[%c5, %c0_38, %c0_39] : memref<9x16x16xbf16, #tpu.memory_space<vmem>>, vector<1x16x16xbf16>
    %88 = vector.shape_cast %87 : vector<1x16x16xbf16> to vector<16x16xbf16>
    %cst_40 = arith.constant dense<0.000000e+00> : vector<256x16xf32>
    %89 = tpu.matmul %86, %88, %cst_40 {dimension_numbers = #tpu.dot_dimension_numbers<[1], [0], [0], [1], [0, 0, 1, 1], [], []>} : vector<256x16xbf16>, vector<16x16xbf16>, vector<256x16xf32> -> vector<256x16xf32>
    %90 = arith.addf %84, %89 : vector<256x16xf32>
    %91 = vector.extract_strided_slice %49 {offsets = [2, 0, 0], sizes = [16, 16, 16], strides = [1, 1, 1]} : vector<18x16x16xbf16> to vector<16x16x16xbf16>
    %92 = vector.shape_cast %91 : vector<16x16x16xbf16> to vector<256x16xbf16>
    %c6 = arith.constant 6 : index
    %c0_41 = arith.constant 0 : index
    %c0_42 = arith.constant 0 : index
    %93 = vector.load %arg7[%c6, %c0_41, %c0_42] : memref<9x16x16xbf16, #tpu.memory_space<vmem>>, vector<1x16x16xbf16>
    %94 = vector.shape_cast %93 : vector<1x16x16xbf16> to vector<16x16xbf16>
    %cst_43 = arith.constant dense<0.000000e+00> : vector<256x16xf32>
    %95 = tpu.matmul %92, %94, %cst_43 {dimension_numbers = #tpu.dot_dimension_numbers<[1], [0], [0], [1], [0, 0, 1, 1], [], []>} : vector<256x16xbf16>, vector<16x16xbf16>, vector<256x16xf32> -> vector<256x16xf32>
    %96 = arith.addf %90, %95 : vector<256x16xf32>
    %97 = vector.extract_strided_slice %51 {offsets = [2, 0, 0], sizes = [16, 16, 16], strides = [1, 1, 1]} : vector<18x16x16xbf16> to vector<16x16x16xbf16>
    %98 = vector.shape_cast %97 : vector<16x16x16xbf16> to vector<256x16xbf16>
    %c7 = arith.constant 7 : index
    %c0_44 = arith.constant 0 : index
    %c0_45 = arith.constant 0 : index
    %99 = vector.load %arg7[%c7, %c0_44, %c0_45] : memref<9x16x16xbf16, #tpu.memory_space<vmem>>, vector<1x16x16xbf16>
    %100 = vector.shape_cast %99 : vector<1x16x16xbf16> to vector<16x16xbf16>
    %cst_46 = arith.constant dense<0.000000e+00> : vector<256x16xf32>
    %101 = tpu.matmul %98, %100, %cst_46 {dimension_numbers = #tpu.dot_dimension_numbers<[1], [0], [0], [1], [0, 0, 1, 1], [], []>} : vector<256x16xbf16>, vector<16x16xbf16>, vector<256x16xf32> -> vector<256x16xf32>
    %102 = arith.addf %96, %101 : vector<256x16xf32>
    %103 = vector.extract_strided_slice %53 {offsets = [2, 0, 0], sizes = [16, 16, 16], strides = [1, 1, 1]} : vector<18x16x16xbf16> to vector<16x16x16xbf16>
    %104 = vector.shape_cast %103 : vector<16x16x16xbf16> to vector<256x16xbf16>
    %c8 = arith.constant 8 : index
    %c0_47 = arith.constant 0 : index
    %c0_48 = arith.constant 0 : index
    %105 = vector.load %arg7[%c8, %c0_47, %c0_48] : memref<9x16x16xbf16, #tpu.memory_space<vmem>>, vector<1x16x16xbf16>
    %106 = vector.shape_cast %105 : vector<1x16x16xbf16> to vector<16x16xbf16>
    %cst_49 = arith.constant dense<0.000000e+00> : vector<256x16xf32>
    %107 = tpu.matmul %104, %106, %cst_49 {dimension_numbers = #tpu.dot_dimension_numbers<[1], [0], [0], [1], [0, 0, 1, 1], [], []>} : vector<256x16xbf16>, vector<16x16xbf16>, vector<256x16xf32> -> vector<256x16xf32>
    %108 = arith.addf %102, %107 : vector<256x16xf32>
    %109 = vector.shape_cast %108 : vector<256x16xf32> to vector<1x16x16x16xf32>
    %110 = arith.truncf %109 : vector<1x16x16x16xf32> to vector<1x16x16x16xbf16>
    %c0_50 = arith.constant 0 : index
    %c0_51 = arith.constant 0 : index
    %c0_52 = arith.constant 0 : index
    %c0_53 = arith.constant 0 : index
    %111 = vector.load %arg8[%c0_50, %c0_51, %c0_52, %c0_53] : memref<1x16x16x16xbf16, #tpu.memory_space<vmem>>, vector<1x16x16x16xbf16>
    tpu.vector_store %arg8[%c0_50, %c0_51, %c0_52, %c0_53], %110 {strides = array<i32>} : memref<1x16x16x16xbf16, #tpu.memory_space<vmem>>, vector<1x16x16x16xbf16>,
    %c0_54 = arith.constant 0 : index
    %c0_55 = arith.constant 0 : index
    %c0_56 = arith.constant 0 : index
    %112 = vector.load %arg9[%c0_54, %c0_55, %c0_56] : memref<1x1x16xf32, #tpu.memory_space<vmem>>, vector<1x1x16xf32>
    %cst_57 = arith.constant dense<0.000000e+00> : vector<16xf32>
    %113 = vector.multi_reduction <add>, %108, %cst_57 [0] : vector<256x16xf32> to vector<16xf32>
    %114 = vector.shape_cast %113 : vector<16xf32> to vector<1x16xf32>
    %115 = vector.shape_cast %114 : vector<1x16xf32> to vector<1x1x16xf32>
    %116 = arith.addf %112, %115 : vector<1x1x16xf32>
    %c0_58 = arith.constant 0 : index
    %c0_59 = arith.constant 0 : index
    %c0_60 = arith.constant 0 : index
    %117 = vector.load %arg9[%c0_58, %c0_59, %c0_60] : memref<1x1x16xf32, #tpu.memory_space<vmem>>, vector<1x1x16xf32>
    tpu.vector_store %arg9[%c0_58, %c0_59, %c0_60], %116 {strides = array<i32>} : memref<1x1x16xf32, #tpu.memory_space<vmem>>, vector<1x1x16xf32>,
    %c0_61 = arith.constant 0 : index
    %c0_62 = arith.constant 0 : index
    %c0_63 = arith.constant 0 : index
    %118 = vector.load %arg10[%c0_61, %c0_62, %c0_63] : memref<1x1x16xf32, #tpu.memory_space<vmem>>, vector<1x1x16xf32>
    %119 = arith.mulf %108, %108 : vector<256x16xf32>
    %cst_64 = arith.constant dense<0.000000e+00> : vector<16xf32>
    %120 = vector.multi_reduction <add>, %119, %cst_64 [0] : vector<256x16xf32> to vector<16xf32>
    %121 = vector.shape_cast %120 : vector<16xf32> to vector<1x16xf32>
    %122 = vector.shape_cast %121 : vector<1x16xf32> to vector<1x1x16xf32>
    %123 = arith.addf %118, %122 : vector<1x1x16xf32>
    %c0_65 = arith.constant 0 : index
    %c0_66 = arith.constant 0 : index
    %c0_67 = arith.constant 0 : index
    %124 = vector.load %arg10[%c0_65, %c0_66, %c0_67] : memref<1x1x16xf32, #tpu.memory_space<vmem>>, vector<1x1x16xf32>
    tpu.vector_store %arg10[%c0_65, %c0_66, %c0_67], %123 {strides = array<i32>} : memref<1x1x16xf32, #tpu.memory_space<vmem>>, vector<1x1x16xf32>,
    return
  }
  func.func @transform_0(%arg0: i32, %arg1: i32) -> (i32, i32, i32, i32) {
    %c0_i32 = arith.constant 0 : i32
    %c0_i32_0 = arith.constant 0 : i32
    %c0_i32_1 = arith.constant 0 : i32
    return %arg0, %arg1, %c0_i32, %c0_i32_0 : i32, i32, i32, i32
  }
  func.func @transform_1(%arg0: i32, %arg1: i32) -> (i32, i32, i32, i32) {
    %c16_i32 = arith.constant 16 : i32
    %0 = arith.muli %arg1, %c16_i32 : i32
    %c1_i32 = arith.constant 1 : i32
    %1 = arith.subi %0, %c1_i32 : i32
    %c0_i32 = arith.constant 0 : i32
    %2 = arith.maxsi %1, %c0_i32 : i32
    %c0_i32_0 = arith.constant 0 : i32
    %c0_i32_1 = arith.constant 0 : i32
    %c0_i32_2 = arith.constant 0 : i32
    return %arg0, %2, %c0_i32_0, %c0_i32_1 : i32, i32, i32, i32
  }
  func.func @transform_2(%arg0: i32, %arg1: i32) -> (i32, i32, i32, i32) {
    %c1_i32 = arith.constant 1 : i32
    %0 = arith.addi %arg1, %c1_i32 : i32
    %c16_i32 = arith.constant 16 : i32
    %1 = arith.muli %0, %c16_i32 : i32
    %c15_i32 = arith.constant 15 : i32
    %2 = arith.minsi %1, %c15_i32 : i32
    %c0_i32 = arith.constant 0 : i32
    %c0_i32_0 = arith.constant 0 : i32
    %c0_i32_1 = arith.constant 0 : i32
    return %arg0, %2, %c0_i32, %c0_i32_0 : i32, i32, i32, i32
  }
  func.func @transform_3(%arg0: i32, %arg1: i32) -> (i32, i32) {
    %c0_i32 = arith.constant 0 : i32
    %c0_i32_0 = arith.constant 0 : i32
    %c0_i32_1 = arith.constant 0 : i32
    return %c0_i32, %c0_i32_0 : i32, i32
  }
  func.func @transform_4(%arg0: i32, %arg1: i32) -> (i32, i32) {
    %c0_i32 = arith.constant 0 : i32
    %c0_i32_0 = arith.constant 0 : i32
    %c0_i32_1 = arith.constant 0 : i32
    return %c0_i32, %c0_i32_0 : i32, i32
  }
  func.func @transform_5(%arg0: i32, %arg1: i32) -> (i32, i32, i32) {
    %c0_i32 = arith.constant 0 : i32
    %c0_i32_0 = arith.constant 0 : i32
    %c0_i32_1 = arith.constant 0 : i32
    %c0_i32_2 = arith.constant 0 : i32
    return %c0_i32, %c0_i32_0, %c0_i32_1 : i32, i32, i32
  }
  func.func @transform_6(%arg0: i32, %arg1: i32) -> (i32, i32, i32, i32) {
    %c0_i32 = arith.constant 0 : i32
    %c0_i32_0 = arith.constant 0 : i32
    %c0_i32_1 = arith.constant 0 : i32
    return %arg0, %arg1, %c0_i32, %c0_i32_0 : i32, i32, i32, i32
  }
  func.func @transform_7(%arg0: i32, %arg1: i32) -> (i32, i32, i32) {
    %c0_i32 = arith.constant 0 : i32
    %c0_i32_0 = arith.constant 0 : i32
    %c0_i32_1 = arith.constant 0 : i32
    return %arg0, %c0_i32, %c0_i32_0 : i32, i32, i32
  }
  func.func @transform_8(%arg0: i32, %arg1: i32) -> (i32, i32, i32) {
    %c0_i32 = arith.constant 0 : i32
    %c0_i32_0 = arith.constant 0 : i32
    %c0_i32_1 = arith.constant 0 : i32
    return %arg0, %c0_i32, %c0_i32_0 : i32, i32, i32
  }
}

</mosaic_0001>

<llo_original>
// kernel: bottleneck_forward.4
$region0: #{bottleneck_forward.4}
  #allocation0 [shape = 'u32[]', space=smem, size = 0x4, offset = 0x4, fixed_abs, tag = 'smem constant byte address 0x4 - core index']
  #allocation1 [shape = 'u32[72,128]{1,0:T(1,128)}', space=vmem, size = 0x9000, scoped, tag = 'internal scratch']
  %s0 = inlined_call_operand.vmem [shape: bf16[2,16,16,64], index: 0, kind: input, shape index: {}]
  %s1 = inlined_call_operand.vmem [shape: bf16[64,16], index: 1, kind: input, shape index: {}]
  %s2 = inlined_call_operand.vmem [shape: bf16[2,16,16,16], index: 2, kind: output, shape index: {0}]
  %s3 = inlined_call_operand.vmem [shape: f32[2,1,16], index: 3, kind: output, shape index: {1}]
  %s4 = inlined_call_operand.vmem [shape: f32[2,1,16], index: 4, kind: output, shape index: {2}]
  %5 = xla_tuple %s2, %s3, %s4
  %s6 = sld [smem:[#allocation0]]
  $region61: #{bottleneck_forward.4} parent=0
    _
  %s8 = ssub.s32 1, %s6
  %s9 = scalar_select 0, %s8, %s6
  loop: start=0, step=1, limit=4
  $region2: #{bottleneck_forward.4} parent=0 // loop_pre_header
    _
  $region3: #{bottleneck_forward.4} parent=0 // loop_header
    %s11 = sphi 0, %s15
    %p12 = scmp.ge.s32.totalorder %s11, 4
    %s18 = sphi 0, %s30
    %s19 = sphi 0, %s26
    %s20 = sphi 0, %s18
    %s21 = sphi 0, %s19
    %s22 = sphi 0, %s20
    %s23 = sphi 0, %s21
    %s35 = sphi 0, %s37
    %s38 = sphi 0, %s35
    %s39 = sphi 0, %s38
    %s55 = sphi 0, %s39
    %s59 = sphi 0, %s59
    %s61 = sphi 0, %s59
    %s62 = sphi 0, %s61
    %s76 = sphi 0, %s62
    %s84 = sphi 0, %s86
    %s87 = sphi 0, %s84
    %s88 = sphi 0, %s87
    %s104 = sphi 0, %s88
    %s110 = sphi 0, %s112
    %s113 = sphi 0, %s110
    %s114 = sphi 0, %s113
    %s130 = sphi 0, %s114
    %s136 = sphi 0, %s138
    %s139 = sphi 0, %s136
    %s140 = sphi 0, %s139
    %s156 = sphi 0, %s140
  $region4: #{bottleneck_forward.4} parent=0 // loop_header_branch
    %14 = sbr.rel (%p12) target = $region8
  $region5: #{bottleneck_forward.4} parent=0 // loop_body
    %s16 = ssub.s32 %s11, 1
    %s17 = ssub.s32 %s11, 2
    %s24 = sadd.s32 1, %s19
    %p25 = scmp.ge.s32.totalorder %s24, 1
    %s26 = scalar_select %p25, 0, %s24
    %s27 = sadd.s32 1, %s18
    %s28 = scalar_select %p25, %s27, %s18
    %p29 = scmp.ge.s32.totalorder %s28, 2
    %s30 = scalar_select %p29, 0, %s28
    %s31 = ssub.s32 %s18, %s30
    %s32 = ssub.s32 %s19, %s26
    %s33 = sor.u32 %s31, %s32
    %p34 = scmp.eq.s32.totalorder %s33, 0
    %s36 = sadd.s32 %s35, 1
    %s37 = scalar_select %p34, %s35, %s36
    %p40 = pneg %p34
    %p41 = scmp.eq.s32.totalorder %s11, 1
    %p42 = por %p40, %p41
    %p43 = scmp.ne.s32.totalorder %s35, %s38
    %p44 = scmp.eq.s32.totalorder %s11, 0
    %p45 = por %p43, %p44
    %p46 = scmp.ne.s32.totalorder %s35, %s38
    %p47 = scmp.eq.s32.totalorder %s16, 1
    %p48 = por %p46, %p47
    %p49 = scmp.ne.s32.totalorder %s38, %s39
    %p50 = scmp.eq.s32.totalorder %s16, 0
    %p51 = por %p49, %p50
    %p52 = scmp.ne.s32.totalorder %s38, %s39
    %p53 = scmp.eq.s32.totalorder %s17, 1
    %p54 = por %p52, %p53
    %p56 = scmp.ne.s32.totalorder %s39, %s55
    %p57 = scmp.eq.s32.totalorder %s17, 0
    %p58 = por %p56, %p57
    %s60 = sadd.s32 %s59, 1
    %p63 = scmp.eq.s32.totalorder %s11, 1
    %p64 = scmp.ne.s32.totalorder %s59, %s61
    %p65 = scmp.eq.s32.totalorder %s11, 0
    %p66 = por %p64, %p65
    %p67 = scmp.ne.s32.totalorder %s59, %s61
    %p68 = scmp.eq.s32.totalorder %s16, 1
    %p69 = por %p67, %p68
    %p70 = scmp.ne.s32.totalorder %s61, %s62
    %p71 = scmp.eq.s32.totalorder %s16, 0
    %p72 = por %p70, %p71
    %p73 = scmp.ne.s32.totalorder %s61, %s62
    %p74 = scmp.eq.s32.totalorder %s17, 1
    %p75 = por %p73, %p74
    %p77 = scmp.ne.s32.totalorder %s62, %s76
    %p78 = scmp.eq.s32.totalorder %s17, 0
    %p79 = por %p77, %p78
    %s80 = ssub.s32 %s18, %s30
    %s81 = ssub.s32 %s19, %s26
    %s82 = sor.u32 %s80, %s81
    %p83 = scmp.eq.s32.totalorder %s82, 0
    %s85 = sadd.s32 %s84, 1
    %s86 = scalar_select %p83, %s84, %s85
    %p89 = pneg %p83
    %p90 = scmp.eq.s32.totalorder %s11, 1
    %p91 = por %p89, %p90
    %p92 = scmp.ne.s32.totalorder %s84, %s87
    %p93 = scmp.eq.s32.totalorder %s11, 0
    %p94 = por %p92, %p93
    %p95 = scmp.ne.s32.totalorder %s84, %s87
    %p96 = scmp.eq.s32.totalorder %s16, 1
    %p97 = por %p95, %p96
    %p98 = scmp.ne.s32.totalorder %s87, %s88
    %p99 = scmp.eq.s32.totalorder %s16, 0
    %p100 = por %p98, %p99
    %p101 = scmp.ne.s32.totalorder %s87, %s88
    %p102 = scmp.eq.s32.totalorder %s17, 1
    %p103 = por %p101, %p102
    %p105 = scmp.ne.s32.totalorder %s88, %s104
    %p106 = scmp.eq.s32.totalorder %s17, 0
    %p107 = por %p105, %p106
    %s108 = ssub.s32 %s18, %s30
    %p109 = scmp.eq.s32.totalorder %s108, 0
    %s111 = sadd.s32 %s110, 1
    %s112 = scalar_select %p109, %s110, %s111
    %p115 = pneg %p109
    %p116 = scmp.eq.s32.totalorder %s11, 1
    %p117 = por %p115, %p116
    %p118 = scmp.ne.s32.totalorder %s110, %s113
    %p119 = scmp.eq.s32.totalorder %s11, 0
    %p120 = por %p118, %p119
    %p121 = scmp.ne.s32.totalorder %s110, %s113
    %p122 = scmp.eq.s32.totalorder %s16, 1
    %p123 = por %p121, %p122
    %p124 = scmp.ne.s32.totalorder %s113, %s114
    %p125 = scmp.eq.s32.totalorder %s16, 0
    %p126 = por %p124, %p125
    %p127 = scmp.ne.s32.totalorder %s113, %s114
    %p128 = scmp.eq.s32.totalorder %s17, 1
    %p129 = por %p127, %p128
    %p131 = scmp.ne.s32.totalorder %s114, %s130
    %p132 = scmp.eq.s32.totalorder %s17, 0
    %p133 = por %p131, %p132
    %s134 = ssub.s32 %s18, %s30
    %p135 = scmp.eq.s32.totalorder %s134, 0
    %s137 = sadd.s32 %s136, 1
    %s138 = scalar_select %p135, %s136, %s137
    %p141 = pneg %p135
    %p142 = scmp.eq.s32.totalorder %s11, 1
    %p143 = por %p141, %p142
    %p144 = scmp.ne.s32.totalorder %s136, %s139
    %p145 = scmp.eq.s32.totalorder %s11, 0
    %p146 = por %p144, %p145
    %p147 = scmp.ne.s32.totalorder %s136, %s139
    %p148 = scmp.eq.s32.totalorder %s16, 1
    %p149 = por %p147, %p148
    %p150 = scmp.ne.s32.totalorder %s139, %s140
    %p151 = scmp.eq.s32.totalorder %s16, 0
    %p152 = por %p150, %p151
    %p153 = scmp.ne.s32.totalorder %s139, %s140
    %p154 = scmp.eq.s32.totalorder %s17, 1
    %p155 = por %p153, %p154
    %p157 = scmp.ne.s32.totalorder %s140, %s156
    %p158 = scmp.eq.s32.totalorder %s17, 0
    %p159 = por %p157, %p158
    %p160 = scmp.le.s32.totalorder 1, %s11
    %p161 = scmp.lt.s32.totalorder %s11, 3
    %p162 = pnand %p160, %p161
    %p163 = pneg %p162
    // Predicated region
    $region9: #{bottleneck_forward.4} parent=5 // pred_check
      _
    $region10: #{bottleneck_forward.4} parent=5 // pred_check_branch
      %165 = sbr.rel (%p162) target = $region12
    $region11: #{bottleneck_forward.4} parent=5 // pred_region
      %s166 = ssub.s32 %s11, 1
      // Predicated region
      $region13: #{bottleneck_forward.4} parent=11 // pred_check
        %p167 = pneg %p72
      $region14: #{bottleneck_forward.4} parent=11 // pred_check_branch
        %169 = sbr.rel (%p167) target = $region16
      $region15: #{bottleneck_forward.4} parent=11 // pred_region
        _
      $region16: #{bottleneck_forward.4} parent=11 // pred_fallthru
        _
    $region12: #{bottleneck_forward.4} parent=5 // pred_fallthru
      _
    %p170 = scmp.lt.s32.totalorder %s11, 2
    // Predicated region
    $region17: #{bottleneck_forward.4} parent=5 // pred_check
      %p171 = pneg %p170
    $region18: #{bottleneck_forward.4} parent=5 // pred_check_branch
      %173 = sbr.rel (%p171) target = $region20
    $region19: #{bottleneck_forward.4} parent=5 // pred_region
      // Predicated region
      $region21: #{bottleneck_forward.4} parent=19 // pred_check
        %p174 = pneg %p45
      $region22: #{bottleneck_forward.4} parent=19 // pred_check_branch
        %176 = sbr.rel (%p174) target = $region24
      $region23: #{bottleneck_forward.4} parent=19 // pred_region
        %s177 = smul.u32 16, %s19
        %p178 = scmp.lt.s32.totalorder %s18, 1
        %s179 = scalar_select %p178, %s18, 1
        %p180 = scmp.lt.s32.totalorder %s177, 15
        %s181 = scalar_select %p180, %s177, 15
        %s182 = smul.addr %s181, 2
        %s183 = smul.addr %s179, 32
        %s184 = sadd.s32 %s182, %s183
        %s185 = smul.addr %s184, 4
        %s186 = scalar_lea.vmem %s0, %s185
        %s187 = smul.u32 16, %s19
      $region24: #{bottleneck_forward.4} parent=19 // pred_fallthru
        _
    $region20: #{bottleneck_forward.4} parent=5 // pred_fallthru
      _
    %p188 = scmp.le.s32.totalorder 1, %s11
    %p189 = scmp.lt.s32.totalorder %s11, 3
    %p190 = pnand %p188, %p189
    %p191 = pneg %p190
    // Predicated region
    $region25: #{bottleneck_forward.4} parent=5 // pred_check
      _
    $region26: #{bottleneck_forward.4} parent=5 // pred_check_branch
      %193 = sbr.rel (%p190) target = $region28
    $region27: #{bottleneck_forward.4} parent=5 // pred_region
      %s194 = ssub.s32 %s11, 1
      %s195 = smul.u32 16, %s21
      %p196 = scmp.lt.s32.totalorder %s20, 1
      %s197 = scalar_select %p196, %s20, 1
      %p198 = scmp.lt.s32.totalorder %s195, 15
      %s199 = scalar_select %p198, %s195, 15
      %s200 = smul.addr %s199, 2
      %s201 = smul.addr %s197, 32
      %s202 = sadd.s32 %s200, %s201
      %s203 = smul.addr %s202, 4
      %s204 = scalar_lea.vmem %s0, %s203
      %p205 = pneg %p51
      %p206 = pneg %p48
      %p207 = pneg %p72
      %p208 = pneg %p69
      %p209 = pneg %p100
      %p210 = pneg %p97
      %s211 = smul.u32 16, %s21
      %p212 = scmp.lt.s32.totalorder %s20, 1
      %s213 = scalar_select %p212, %s20, 1
      %p214 = scmp.lt.s32.totalorder %s211, 15
      %s215 = scalar_select %p214, %s211, 15
      %s216 = smul.addr %s215, 2
      %s217 = smul.addr %s213, 32
      %s218 = sadd.s32 %s216, %s217
      %s219 = smul.addr %s218, 4
      %s220 = scalar_lea.vmem %s2, %s219
      %p221 = pneg %p126
      %p222 = pneg %p123
      %p223 = scmp.lt.s32.totalorder %s20, 1
      %s224 = scalar_select %p223, %s20, 1
      %s225 = scalar_lea.vmem %s3, %s224
      %p226 = pneg %p152
      %p227 = pneg %p149
      %p228 = scmp.lt.s32.totalorder %s20, 1
      %s229 = scalar_select %p228, %s20, 1
      %s230 = scalar_lea.vmem %s4, %s229
      %s231 = smul.u32 16, %s21
      %p232 = scmp.lt.s32.totalorder %s20, 1
      %s233 = scalar_select %p232, %s20, 1
      %p234 = scmp.lt.s32.totalorder %s231, 15
      %s235 = scalar_select %p234, %s231, 15
      %s236 = smul.addr %s235, 2
      %s237 = smul.addr %s233, 32
      %s238 = sadd.s32 %s236, %s237
      %s239 = smul.addr %s238, 4
      %s240 = scalar_lea.vmem %s0, %s239
      %s241 = smul.u32 16, %s21
      %s242 = smul.u32 16, %s21
      %p243 = scmp.lt.s32.totalorder %s20, 1
      %s244 = scalar_select %p243, %s20, 1
      %p245 = scmp.lt.s32.totalorder %s242, 15
      %s246 = scalar_select %p245, %s242, 15
      %s247 = smul.addr %s246, 2
      %s248 = smul.addr %s244, 32
      %s249 = sadd.s32 %s247, %s248
      %s250 = smul.addr %s249, 4
      %s251 = scalar_lea.vmem %s2, %s250
      %s252 = smul.u32 16, %s21
      %p253 = scmp.lt.s32.totalorder %s20, 1
      %s254 = scalar_select %p253, %s20, 1
      %s255 = scalar_lea.vmem %s3, %s254
      %p256 = scmp.lt.s32.totalorder %s20, 1
      %s257 = scalar_select %p256, %s20, 1
      %s258 = scalar_lea.vmem %s4, %s257
      %p260 = scmp.eq.s32.totalorder %s21, 0
      // Predicated region
      $region29: #{bottleneck_forward.4} parent=27 // pred_check
        %p261 = pneg %p260
      $region30: #{bottleneck_forward.4} parent=27 // pred_check_branch
        %263 = sbr.rel (%p261) target = $region32
      $region31: #{bottleneck_forward.4} parent=27 // pred_region
        %vm264 = vcmask 122880
        %265 = vst.msk [vmem:[%s255] sm:$0x1] %vm264, 0.0
        %266 = vst.msk [vmem:[%s258] sm:$0x1] %vm264, 0.0
      $region32: #{bottleneck_forward.4} parent=27 // pred_fallthru
        _
      %v267 = vld [vmem:[%s240] sm:$0xf]
      %v268 = vld [vmem:[%s240 + $0x4] sm:$0xf]
      %v269 = vld [vmem:[%s240 + $0x8] sm:$0xf]
      %v270 = vld [vmem:[%s240 + $0xc] sm:$0xf]
      %v271 = vld [vmem:[%s240 + $0x10] sm:$0xf]
      %v272 = vld [vmem:[%s240 + $0x14] sm:$0xf]
      %v273 = vld [vmem:[%s240 + $0x18] sm:$0xf]
      %v274 = vld [vmem:[%s240 + $0x1c] sm:$0xf]
      %v275 = vld [vmem:[%s240 + $0x20] sm:$0xf]
      %v276 = vld [vmem:[%s240 + $0x24] sm:$0xf]
      %v277 = vld [vmem:[%s240 + $0x28] sm:$0xf]
      %v278 = vld [vmem:[%s240 + $0x2c] sm:$0xf]
      %v279 = vld [vmem:[%s240 + $0x30] sm:$0xf]
      %v280 = vld [vmem:[%s240 + $0x34] sm:$0xf]
      %v281 = vld [vmem:[%s240 + $0x38] sm:$0xf]
      %v282 = vld [vmem:[%s240 + $0x3c] sm:$0xf]
      %v283 = vld [vmem:[%s240 + $0x40] sm:$0xf]
      %v284 = vld [vmem:[%s240 + $0x44] sm:$0xf]
      %v285 = vld [vmem:[%s240 + $0x48] sm:$0xf]
      %v286 = vld [vmem:[%s240 + $0x4c] sm:$0xf]
      %v287 = vld [vmem:[%s240 + $0x50] sm:$0xf]
      %v288 = vld [vmem:[%s240 + $0x54] sm:$0xf]
      %v289 = vld [vmem:[%s240 + $0x58] sm:$0xf]
      %v290 = vld [vmem:[%s240 + $0x5c] sm:$0xf]
      %v291 = vld [vmem:[%s240 + $0x60] sm:$0xf]
      %v292 = vld [vmem:[%s240 + $0x64] sm:$0xf]
      %v293 = vld [vmem:[%s240 + $0x68] sm:$0xf]
      %v294 = vld [vmem:[%s240 + $0x6c] sm:$0xf]
      %v295 = vld [vmem:[%s240 + $0x70] sm:$0xf]
      %v296 = vld [vmem:[%s240 + $0x74] sm:$0xf]
      %v297 = vld [vmem:[%s240 + $0x78] sm:$0xf]
      %v298 = vld [vmem:[%s240 + $0x7c] sm:$0xf]
      %v299 = vld [vmem:[%s1] sm:$0xf]
      %v300 = vld [vmem:[%s1 + $0x4] sm:$0xf]
      %v301 = vld [vmem:[%s1 + $0x8] sm:$0xf]
      %v302 = vld [vmem:[%s1 + $0xc] sm:$0xf]
      %v303 = vld [vmem:[%s1 + $0x10] sm:$0xf]
      %v304 = vld [vmem:[%s1 + $0x14] sm:$0xf]
      %v305 = vld [vmem:[%s1 + $0x18] sm:$0xf]
      %v306 = vld [vmem:[%s1 + $0x1c] sm:$0xf]
      %v339 = vunpack.c.l.b16 %v267
      %v340 = vunpack.c.l.b16 %v268
      %v341 = vunpack.c.l.b16 %v269
      %v342 = vunpack.c.l.b16 %v270
      %v343 = vunpack.c.l.b16 %v271
      %v344 = vunpack.c.l.b16 %v272
      %v345 = vunpack.c.l.b16 %v273
      %v346 = vunpack.c.l.b16 %v274
      %v347 = vunpack.c.l.b16 %v275
      %v348 = vunpack.c.l.b16 %v276
      %v349 = vunpack.c.l.b16 %v277
      %v350 = vunpack.c.l.b16 %v278
      %v351 = vunpack.c.l.b16 %v279
      %v352 = vunpack.c.l.b16 %v280
      %v353 = vunpack.c.l.b16 %v281
      %v354 = vunpack.c.l.b16 %v282
      %v355 = vunpack.c.l.b16 %v283
      %v356 = vunpack.c.l.b16 %v284
      %v357 = vunpack.c.l.b16 %v285
      %v358 = vunpack.c.l.b16 %v286
      %v359 = vunpack.c.l.b16 %v287
      %v360 = vunpack.c.l.b16 %v288
      %v361 = vunpack.c.l.b16 %v289
      %v362 = vunpack.c.l.b16 %v290
      %v363 = vunpack.c.l.b16 %v291
      %v364 = vunpack.c.l.b16 %v292
      %v365 = vunpack.c.l.b16 %v293
      %v366 = vunpack.c.l.b16 %v294
      %v367 = vunpack.c.l.b16 %v295
      %v368 = vunpack.c.l.b16 %v296
      %v369 = vunpack.c.l.b16 %v297
      %v370 = vunpack.c.l.b16 %v298
      %v371 = vpack.c.b16 %v340, %v339
      %v372 = vpack.c.b16 %v342, %v341
      %v373 = vpack.c.b16 %v344, %v343
      %v374 = vpack.c.b16 %v346, %v345
      %v375 = vpack.c.b16 %v348, %v347
      %v376 = vpack.c.b16 %v350, %v349
      %v377 = vpack.c.b16 %v352, %v351
      %v378 = vpack.c.b16 %v354, %v353
      %v379 = vpack.c.b16 %v356, %v355
      %v380 = vpack.c.b16 %v358, %v357
      %v381 = vpack.c.b16 %v360, %v359
      %v382 = vpack.c.b16 %v362, %v361
      %v383 = vpack.c.b16 %v364, %v363
      %v384 = vpack.c.b16 %v366, %v365
      %v385 = vpack.c.b16 %v368, %v367
      %v386 = vpack.c.b16 %v370, %v369
      %v395 = vunpack.c.l.b16 %v299
      %v396 = vunpack.c.l.b16 %v300
      %v397 = vunpack.c.l.b16 %v301
      %v398 = vunpack.c.l.b16 %v302
      %v399 = vunpack.c.l.b16 %v303
      %v400 = vunpack.c.l.b16 %v304
      %v401 = vunpack.c.l.b16 %v305
      %v402 = vunpack.c.l.b16 %v306
      %v403 = vpack.c.b16 %v396, %v395
      %v404 = vpack.c.b16 %v398, %v397
      %v405 = vpack.c.b16 %v400, %v399
      %v406 = vpack.c.b16 %v402, %v401
      %vm411 = vcmask 523264
      %v413 = vsel %vm411, %v371, 0
      %v416 = vsel %vm411, %v372, 0
      %v419 = vsel %vm411, %v373, 0
      %v422 = vsel %vm411, %v374, 0
      %v425 = vsel %vm411, %v375, 0
      %v428 = vsel %vm411, %v376, 0
      %v431 = vsel %vm411, %v377, 0
      %v434 = vsel %vm411, %v378, 0
      %v437 = vsel %vm411, %v379, 0
      %v440 = vsel %vm411, %v380, 0
      %v443 = vsel %vm411, %v381, 0
      %v446 = vsel %vm411, %v382, 0
      %v449 = vsel %vm411, %v383, 0
      %v452 = vsel %vm411, %v384, 0
      %v455 = vsel %vm411, %v385, 0
      %v458 = vsel %vm411, %v386, 0
      %460 = vmatpush.bf16.msra.mxu0 0
      %461 = vmatpush.bf16.msra.mxu0 0
      %462 = vmatpush.bf16.msra.mxu0 0
      %463 = vmatpush.bf16.msra.mxu0 0
      %464 = vmatpush.bf16.msra.mxu0 %v406
      %465 = vmatpush.bf16.msra.mxu0 %v405
      %466 = vmatpush.bf16.msra.mxu0 %v404
      %467 = vmatpush.bf16.msra.mxu0 %v403
      %468 = vmatmul.bf16.gmra.mxu0 %v413
      %v469 = vpop.f32.mrf.mxu0
      %v470 = vadd.f32 0.0, %v469
      %v471 = vpop.f32.mrf.mxu0
      %v472 = vadd.f32 0.0, %v471
      %473 = vmatmul.bf16.gmra.mxu0 %v416
      %v474 = vpop.f32.mrf.mxu0
      %v475 = vadd.f32 0.0, %v474
      %v476 = vpop.f32.mrf.mxu0
      %v477 = vadd.f32 0.0, %v476
      %478 = vmatmul.bf16.gmra.mxu0 %v419
      %v479 = vpop.f32.mrf.mxu0
      %v480 = vadd.f32 0.0, %v479
      %v481 = vpop.f32.mrf.mxu0
      %v482 = vadd.f32 0.0, %v481
      %483 = vmatmul.bf16.gmra.mxu0 %v422
      %v484 = vpop.f32.mrf.mxu0
      %v485 = vadd.f32 0.0, %v484
      %v486 = vpop.f32.mrf.mxu0
      %v487 = vadd.f32 0.0, %v486
      %488 = vmatmul.bf16.gmra.mxu0 %v425
      %v489 = vpop.f32.mrf.mxu0
      %v490 = vadd.f32 0.0, %v489
      %v491 = vpop.f32.mrf.mxu0
      %v492 = vadd.f32 0.0, %v491
      %493 = vmatmul.bf16.gmra.mxu0 %v428
      %v494 = vpop.f32.mrf.mxu0
      %v495 = vadd.f32 0.0, %v494
      %v496 = vpop.f32.mrf.mxu0
      %v497 = vadd.f32 0.0, %v496
      %498 = vmatmul.bf16.gmra.mxu0 %v431
      %v499 = vpop.f32.mrf.mxu0
      %v500 = vadd.f32 0.0, %v499
      %v501 = vpop.f32.mrf.mxu0
      %v502 = vadd.f32 0.0, %v501
      %503 = vmatmul.bf16.gmra.mxu0 %v434
      %v504 = vpop.f32.mrf.mxu0
      %v505 = vadd.f32 0.0, %v504
      %v506 = vpop.f32.mrf.mxu0
      %v507 = vadd.f32 0.0, %v506
      %508 = vmatmul.bf16.gmra.mxu0 %v437
      %v509 = vpop.f32.mrf.mxu0
      %v510 = vadd.f32 0.0, %v509
      %v511 = vpop.f32.mrf.mxu0
      %v512 = vadd.f32 0.0, %v511
      %513 = vmatmul.bf16.gmra.mxu0 %v440
      %v514 = vpop.f32.mrf.mxu0
      %v515 = vadd.f32 0.0, %v514
      %v516 = vpop.f32.mrf.mxu0
      %v517 = vadd.f32 0.0, %v516
      %518 = vmatmul.bf16.gmra.mxu0 %v443
      %v519 = vpop.f32.mrf.mxu0
      %v520 = vadd.f32 0.0, %v519
      %v521 = vpop.f32.mrf.mxu0
      %v522 = vadd.f32 0.0, %v521
      %523 = vmatmul.bf16.gmra.mxu0 %v446
      %v524 = vpop.f32.mrf.mxu0
      %v525 = vadd.f32 0.0, %v524
      %v526 = vpop.f32.mrf.mxu0
      %v527 = vadd.f32 0.0, %v526
      %528 = vmatmul.bf16.gmra.mxu0 %v449
      %v529 = vpop.f32.mrf.mxu0
      %v530 = vadd.f32 0.0, %v529
      %v531 = vpop.f32.mrf.mxu0
      %v532 = vadd.f32 0.0, %v531
      %533 = vmatmul.bf16.gmra.mxu0 %v452
      %v534 = vpop.f32.mrf.mxu0
      %v535 = vadd.f32 0.0, %v534
      %v536 = vpop.f32.mrf.mxu0
      %v537 = vadd.f32 0.0, %v536
      %538 = vmatmul.bf16.gmra.mxu0 %v455
      %v539 = vpop.f32.mrf.mxu0
      %v540 = vadd.f32 0.0, %v539
      %v541 = vpop.f32.mrf.mxu0
      %v542 = vadd.f32 0.0, %v541
      %543 = vmatmul.bf16.gmra.mxu0 %v458
      %v544 = vpop.f32.mrf.mxu0
      %v545 = vadd.f32 0.0, %v544
      %v546 = vpop.f32.mrf.mxu0
      %v547 = vadd.f32 0.0, %v546
      %548 = vdwg.mxu0
      %v549 = vpack.c.bf16 %v470, %v470
      %v550 = vpack.c.bf16 %v472, %v472
      %v551 = vpack.c.bf16 %v475, %v475
      %v552 = vpack.c.bf16 %v477, %v477
      %v553 = vpack.c.bf16 %v480, %v480
      %v554 = vpack.c.bf16 %v482, %v482
      %v555 = vpack.c.bf16 %v485, %v485
      %v556 = vpack.c.bf16 %v487, %v487
      %v557 = vpack.c.bf16 %v490, %v490
      %v558 = vpack.c.bf16 %v492, %v492
      %v559 = vpack.c.bf16 %v495, %v495
      %v560 = vpack.c.bf16 %v497, %v497
      %v561 = vpack.c.bf16 %v500, %v500
      %v562 = vpack.c.bf16 %v502, %v502
      %v563 = vpack.c.bf16 %v505, %v505
      %v564 = vpack.c.bf16 %v507, %v507
      %v565 = vpack.c.bf16 %v510, %v510
      %v566 = vpack.c.bf16 %v512, %v512
      %v567 = vpack.c.bf16 %v515, %v515
      %v568 = vpack.c.bf16 %v517, %v517
      %v569 = vpack.c.bf16 %v520, %v520
      %v570 = vpack.c.bf16 %v522, %v522
      %v571 = vpack.c.bf16 %v525, %v525
      %v572 = vpack.c.bf16 %v527, %v527
      %v573 = vpack.c.bf16 %v530, %v530
      %v574 = vpack.c.bf16 %v532, %v532
      %v575 = vpack.c.bf16 %v535, %v535
      %v576 = vpack.c.bf16 %v537, %v537
      %v577 = vpack.c.bf16 %v540, %v540
      %v578 = vpack.c.bf16 %v542, %v542
      %v579 = vpack.c.bf16 %v545, %v545
      %v580 = vpack.c.bf16 %v547, %v547
      %vm581 = vcmask 125952
      %582 = vst.msk [vmem:[%s251] sm:$0xf] %vm581, %v549
      %583 = vst.msk [vmem:[%s251 + $0x4] sm:$0xf] %vm581, %v550
      %584 = vst.msk [vmem:[%s251 + $0x8] sm:$0xf] %vm581, %v551
      %585 = vst.msk [vmem:[%s251 + $0xc] sm:$0xf] %vm581, %v552
      %586 = vst.msk [vmem:[%s251 + $0x10] sm:$0xf] %vm581, %v553
      %587 = vst.msk [vmem:[%s251 + $0x14] sm:$0xf] %vm581, %v554
      %588 = vst.msk [vmem:[%s251 + $0x18] sm:$0xf] %vm581, %v555
      %589 = vst.msk [vmem:[%s251 + $0x1c] sm:$0xf] %vm581, %v556
      %590 = vst.msk [vmem:[%s251 + $0x20] sm:$0xf] %vm581, %v557
      %591 = vst.msk [vmem:[%s251 + $0x24] sm:$0xf] %vm581, %v558
      %592 = vst.msk [vmem:[%s251 + $0x28] sm:$0xf] %vm581, %v559
      %593 = vst.msk [vmem:[%s251 + $0x2c] sm:$0xf] %vm581, %v560
      %594 = vst.msk [vmem:[%s251 + $0x30] sm:$0xf] %vm581, %v561
      %595 = vst.msk [vmem:[%s251 + $0x34] sm:$0xf] %vm581, %v562
      %596 = vst.msk [vmem:[%s251 + $0x38] sm:$0xf] %vm581, %v563
      %597 = vst.msk [vmem:[%s251 + $0x3c] sm:$0xf] %vm581, %v564
      %598 = vst.msk [vmem:[%s251 + $0x40] sm:$0xf] %vm581, %v565
      %599 = vst.msk [vmem:[%s251 + $0x44] sm:$0xf] %vm581, %v566
      %600 = vst.msk [vmem:[%s251 + $0x48] sm:$0xf] %vm581, %v567
      %601 = vst.msk [vmem:[%s251 + $0x4c] sm:$0xf] %vm581, %v568
      %602 = vst.msk [vmem:[%s251 + $0x50] sm:$0xf] %vm581, %v569
      %603 = vst.msk [vmem:[%s251 + $0x54] sm:$0xf] %vm581, %v570
      %604 = vst.msk [vmem:[%s251 + $0x58] sm:$0xf] %vm581, %v571
      %605 = vst.msk [vmem:[%s251 + $0x5c] sm:$0xf] %vm581, %v572
      %606 = vst.msk [vmem:[%s251 + $0x60] sm:$0xf] %vm581, %v573
      %607 = vst.msk [vmem:[%s251 + $0x64] sm:$0xf] %vm581, %v574
      %608 = vst.msk [vmem:[%s251 + $0x68] sm:$0xf] %vm581, %v575
      %609 = vst.msk [vmem:[%s251 + $0x6c] sm:$0xf] %vm581, %v576
      %610 = vst.msk [vmem:[%s251 + $0x70] sm:$0xf] %vm581, %v577
      %611 = vst.msk [vmem:[%s251 + $0x74] sm:$0xf] %vm581, %v578
      %612 = vst.msk [vmem:[%s251 + $0x78] sm:$0xf] %vm581, %v579
      %613 = vst.msk [vmem:[%s251 + $0x7c] sm:$0xf] %vm581, %v580
      %v614 = vld [vmem:[%s255] sm:$0x1]
      %vm615 = vcmask 130048
      %v616 = vsel %vm615, %v470, 0.0
      %v617 = vsel %vm615, %v472, 0.0
      %v618 = vadd.f32 %v616, %v617
      %v619 = vsel %vm615, %v475, 0.0
      %v620 = vadd.f32 %v618, %v619
      %v621 = vsel %vm615, %v477, 0.0
      %v622 = vadd.f32 %v620, %v621
      %v623 = vsel %vm615, %v480, 0.0
      %v624 = vadd.f32 %v622, %v623
      %v625 = vsel %vm615, %v482, 0.0
      %v626 = vadd.f32 %v624, %v625
      %v627 = vsel %vm615, %v485, 0.0
      %v628 = vadd.f32 %v626, %v627
      %v629 = vsel %vm615, %v487, 0.0
      %v630 = vadd.f32 %v628, %v629
      %v631 = vsel %vm615, %v490, 0.0
      %v632 = vadd.f32 %v630, %v631
      %v633 = vsel %vm615, %v492, 0.0
      %v634 = vadd.f32 %v632, %v633
      %v635 = vsel %vm615, %v495, 0.0
      %v636 = vadd.f32 %v634, %v635
      %v637 = vsel %vm615, %v497, 0.0
      %v638 = vadd.f32 %v636, %v637
      %v639 = vsel %vm615, %v500, 0.0
      %v640 = vadd.f32 %v638, %v639
      %v641 = vsel %vm615, %v502, 0.0
      %v642 = vadd.f32 %v640, %v641
      %v643 = vsel %vm615, %v505, 0.0
      %v644 = vadd.f32 %v642, %v643
      %v645 = vsel %vm615, %v507, 0.0
      %v646 = vadd.f32 %v644, %v645
      %v647 = vsel %vm615, %v510, 0.0
      %v648 = vadd.f32 %v646, %v647
      %v649 = vsel %vm615, %v512, 0.0
      %v650 = vadd.f32 %v648, %v649
      %v651 = vsel %vm615, %v515, 0.0
      %v652 = vadd.f32 %v650, %v651
      %v653 = vsel %vm615, %v517, 0.0
      %v654 = vadd.f32 %v652, %v653
      %v655 = vsel %vm615, %v520, 0.0
      %v656 = vadd.f32 %v654, %v655
      %v657 = vsel %vm615, %v522, 0.0
      %v658 = vadd.f32 %v656, %v657
      %v659 = vsel %vm615, %v525, 0.0
      %v660 = vadd.f32 %v658, %v659
      %v661 = vsel %vm615, %v527, 0.0
      %v662 = vadd.f32 %v660, %v661
      %v663 = vsel %vm615, %v530, 0.0
      %v664 = vadd.f32 %v662, %v663
      %v665 = vsel %vm615, %v532, 0.0
      %v666 = vadd.f32 %v664, %v665
      %v667 = vsel %vm615, %v535, 0.0
      %v668 = vadd.f32 %v666, %v667
      %v669 = vsel %vm615, %v537, 0.0
      %v670 = vadd.f32 %v668, %v669
      %v671 = vsel %vm615, %v540, 0.0
      %v672 = vadd.f32 %v670, %v671
      %v673 = vsel %vm615, %v542, 0.0
      %v674 = vadd.f32 %v672, %v673
      %v675 = vsel %vm615, %v545, 0.0
      %v676 = vadd.f32 %v674, %v675
      %v677 = vsel %vm615, %v547, 0.0
      %v678 = vadd.f32 %v676, %v677
      %v679 = vrot.slane %v678, 4
      %v680 = vadd.f32 %v678, %v679
      %v681 = vrot.slane %v680, 2
      %v682 = vadd.f32 %v680, %v681
      %v683 = vrot.slane %v682, 1
      %v684 = vadd.f32 %v682, %v683
      %v685 = vadd.f32 %v614, %v684
      %vm686 = vcmask 122880
      %687 = vst.msk [vmem:[%s255] sm:$0x1] %vm686, %v685
      %v688 = vld [vmem:[%s258] sm:$0x1]
      %v689 = vmul.f32 %v470, %v470
      %v690 = vmul.f32 %v472, %v472
      %v691 = vmul.f32 %v475, %v475
      %v692 = vmul.f32 %v477, %v477
      %v693 = vmul.f32 %v480, %v480
      %v694 = vmul.f32 %v482, %v482
      %v695 = vmul.f32 %v485, %v485
      %v696 = vmul.f32 %v487, %v487
      %v697 = vmul.f32 %v490, %v490
      %v698 = vmul.f32 %v492, %v492
      %v699 = vmul.f32 %v495, %v495
      %v700 = vmul.f32 %v497, %v497
      %v701 = vmul.f32 %v500, %v500
      %v702 = vmul.f32 %v502, %v502
      %v703 = vmul.f32 %v505, %v505
      %v704 = vmul.f32 %v507, %v507
      %v705 = vmul.f32 %v510, %v510
      %v706 = vmul.f32 %v512, %v512
      %v707 = vmul.f32 %v515, %v515
      %v708 = vmul.f32 %v517, %v517
      %v709 = vmul.f32 %v520, %v520
      %v710 = vmul.f32 %v522, %v522
      %v711 = vmul.f32 %v525, %v525
      %v712 = vmul.f32 %v527, %v527
      %v713 = vmul.f32 %v530, %v530
      %v714 = vmul.f32 %v532, %v532
      %v715 = vmul.f32 %v535, %v535
      %v716 = vmul.f32 %v537, %v537
      %v717 = vmul.f32 %v540, %v540
      %v718 = vmul.f32 %v542, %v542
      %v719 = vmul.f32 %v545, %v545
      %v720 = vmul.f32 %v547, %v547
      %v721 = vsel %vm615, %v689, 0.0
      %v722 = vsel %vm615, %v690, 0.0
      %v723 = vadd.f32 %v721, %v722
      %v724 = vsel %vm615, %v691, 0.0
      %v725 = vadd.f32 %v723, %v724
      %v726 = vsel %vm615, %v692, 0.0
      %v727 = vadd.f32 %v725, %v726
      %v728 = vsel %vm615, %v693, 0.0
      %v729 = vadd.f32 %v727, %v728
      %v730 = vsel %vm615, %v694, 0.0
      %v731 = vadd.f32 %v729, %v730
      %v732 = vsel %vm615, %v695, 0.0
      %v733 = vadd.f32 %v731, %v732
      %v734 = vsel %vm615, %v696, 0.0
      %v735 = vadd.f32 %v733, %v734
      %v736 = vsel %vm615, %v697, 0.0
      %v737 = vadd.f32 %v735, %v736
      %v738 = vsel %vm615, %v698, 0.0
      %v739 = vadd.f32 %v737, %v738
      %v740 = vsel %vm615, %v699, 0.0
      %v741 = vadd.f32 %v739, %v740
      %v742 = vsel %vm615, %v700, 0.0
      %v743 = vadd.f32 %v741, %v742
      %v744 = vsel %vm615, %v701, 0.0
      %v745 = vadd.f32 %v743, %v744
      %v746 = vsel %vm615, %v702, 0.0
      %v747 = vadd.f32 %v745, %v746
      %v748 = vsel %vm615, %v703, 0.0
      %v749 = vadd.f32 %v747, %v748
      %v750 = vsel %vm615, %v704, 0.0
      %v751 = vadd.f32 %v749, %v750
      %v752 = vsel %vm615, %v705, 0.0
      %v753 = vadd.f32 %v751, %v752
      %v754 = vsel %vm615, %v706, 0.0
      %v755 = vadd.f32 %v753, %v754
      %v756 = vsel %vm615, %v707, 0.0
      %v757 = vadd.f32 %v755, %v756
      %v758 = vsel %vm615, %v708, 0.0
      %v759 = vadd.f32 %v757, %v758
      %v760 = vsel %vm615, %v709, 0.0
      %v761 = vadd.f32 %v759, %v760
      %v762 = vsel %vm615, %v710, 0.0
      %v763 = vadd.f32 %v761, %v762
      %v764 = vsel %vm615, %v711, 0.0
      %v765 = vadd.f32 %v763, %v764
      %v766 = vsel %vm615, %v712, 0.0
      %v767 = vadd.f32 %v765, %v766
      %v768 = vsel %vm615, %v713, 0.0
      %v769 = vadd.f32 %v767, %v768
      %v770 = vsel %vm615, %v714, 0.0
      %v771 = vadd.f32 %v769, %v770
      %v772 = vsel %vm615, %v715, 0.0
      %v773 = vadd.f32 %v771, %v772
      %v774 = vsel %vm615, %v716, 0.0
      %v775 = vadd.f32 %v773, %v774
      %v776 = vsel %vm615, %v717, 0.0
      %v777 = vadd.f32 %v775, %v776
      %v778 = vsel %vm615, %v718, 0.0
      %v779 = vadd.f32 %v777, %v778
      %v780 = vsel %vm615, %v719, 0.0
      %v781 = vadd.f32 %v779, %v780
      %v782 = vsel %vm615, %v720, 0.0
      %v783 = vadd.f32 %v781, %v782
      %v784 = vrot.slane %v783, 4
      %v785 = vadd.f32 %v783, %v784
      %v786 = vrot.slane %v785, 2
      %v787 = vadd.f32 %v785, %v786
      %v788 = vrot.slane %v787, 1
      %v789 = vadd.f32 %v787, %v788
      %v790 = vadd.f32 %v688, %v789
      %791 = vst.msk [vmem:[%s258] sm:$0x1] %vm686, %v790
      %s792 = smul.u32 16, %s21
      %p793 = scmp.lt.s32.totalorder %s20, 1
      %s794 = scalar_select %p793, %s20, 1
      %p795 = scmp.lt.s32.totalorder %s792, 15
      %s796 = scalar_select %p795, %s792, 15
      %s797 = smul.addr %s796, 2
      %s798 = smul.addr %s794, 32
      %s799 = sadd.s32 %s797, %s798
      %s800 = smul.addr %s799, 4
      %s801 = scalar_lea.vmem %s2, %s800
      %p802 = scmp.lt.s32.totalorder %s20, 1
      %s803 = scalar_select %p802, %s20, 1
      %s804 = scalar_lea.vmem %s3, %s803
      %p805 = scmp.lt.s32.totalorder %s20, 1
      %s806 = scalar_select %p805, %s20, 1
      %s807 = scalar_lea.vmem %s4, %s806
      // Predicated region
      $region33: #{bottleneck_forward.4} parent=27 // pred_check
        %p808 = pneg %p97
      $region34: #{bottleneck_forward.4} parent=27 // pred_check_branch
        %810 = sbr.rel (%p808) target = $region36
      $region35: #{bottleneck_forward.4} parent=27 // pred_region
        %s811 = smul.u32 16, %s21
      $region36: #{bottleneck_forward.4} parent=27 // pred_fallthru
        _
      // Predicated region
      $region37: #{bottleneck_forward.4} parent=27 // pred_check
        %p812 = pneg %p123
      $region38: #{bottleneck_forward.4} parent=27 // pred_check_branch
        %814 = sbr.rel (%p812) target = $region40
      $region39: #{bottleneck_forward.4} parent=27 // pred_region
        _
      $region40: #{bottleneck_forward.4} parent=27 // pred_fallthru
        _
      // Predicated region
      $region41: #{bottleneck_forward.4} parent=27 // pred_check
        %p815 = pneg %p149
      $region42: #{bottleneck_forward.4} parent=27 // pred_check_branch
        %817 = sbr.rel (%p815) target = $region44
      $region43: #{bottleneck_forward.4} parent=27 // pred_region
        _
      $region44: #{bottleneck_forward.4} parent=27 // pred_fallthru
        _
    $region28: #{bottleneck_forward.4} parent=5 // pred_fallthru
      _
    %p818 = scmp.le.s32.totalorder 2, %s11
    // Predicated region
    $region45: #{bottleneck_forward.4} parent=5 // pred_check
      %p819 = pneg %p818
    $region46: #{bottleneck_forward.4} parent=5 // pred_check_branch
      %821 = sbr.rel (%p819) target = $region48
    $region47: #{bottleneck_forward.4} parent=5 // pred_region
      %s822 = ssub.s32 %s11, 2
      // Predicated region
      $region49: #{bottleneck_forward.4} parent=47 // pred_check
        %p823 = pneg %p103
      $region50: #{bottleneck_forward.4} parent=47 // pred_check_branch
        %825 = sbr.rel (%p823) target = $region52
      $region51: #{bottleneck_forward.4} parent=47 // pred_region
        %s826 = smul.u32 16, %s23
        %p827 = scmp.lt.s32.totalorder %s22, 1
        %s828 = scalar_select %p827, %s22, 1
        %p829 = scmp.lt.s32.totalorder %s826, 15
        %s830 = scalar_select %p829, %s826, 15
        %s831 = smul.addr %s830, 2
        %s832 = smul.addr %s828, 32
        %s833 = sadd.s32 %s831, %s832
        %s834 = smul.addr %s833, 4
        %s835 = scalar_lea.vmem %s2, %s834
      $region52: #{bottleneck_forward.4} parent=47 // pred_fallthru
        _
      // Predicated region
      $region53: #{bottleneck_forward.4} parent=47 // pred_check
        %p836 = pneg %p129
      $region54: #{bottleneck_forward.4} parent=47 // pred_check_branch
        %838 = sbr.rel (%p836) target = $region56
      $region55: #{bottleneck_forward.4} parent=47 // pred_region
        %p839 = scmp.lt.s32.totalorder %s22, 1
        %s840 = scalar_select %p839, %s22, 1
        %s841 = scalar_lea.vmem %s3, %s840
      $region56: #{bottleneck_forward.4} parent=47 // pred_fallthru
        _
      // Predicated region
      $region57: #{bottleneck_forward.4} parent=47 // pred_check
        %p842 = pneg %p155
      $region58: #{bottleneck_forward.4} parent=47 // pred_check_branch
        %844 = sbr.rel (%p842) target = $region60
      $region59: #{bottleneck_forward.4} parent=47 // pred_region
        %p845 = scmp.lt.s32.totalorder %s22, 1
        %s846 = scalar_select %p845, %s22, 1
        %s847 = scalar_lea.vmem %s4, %s846
      $region60: #{bottleneck_forward.4} parent=47 // pred_fallthru
        _
    $region48: #{bottleneck_forward.4} parent=5 // pred_fallthru
      _
  $region6: #{bottleneck_forward.4} parent=0 // loop_footer
    %s15 = sadd.s32 1, %s11
  $region7: #{bottleneck_forward.4} parent=0 // loop_footer_branch
    %10 = sbr.rel target = $region3
  $region8: #{bottleneck_forward.4} parent=0 // loop_exit
    _

// kernel: bottleneck_forward.7
$region0: #{bottleneck_forward.7}
  #allocation0 [shape = 'u32[]', space=smem, size = 0x4, offset = 0x4, fixed_abs, tag = 'smem constant byte address 0x4 - core index']
  #allocation1 [shape = 'u32[72,128]{1,0:T(1,128)}', space=vmem, size = 0x9000, scoped, tag = 'internal scratch']
  %s0 = inlined_call_operand.vmem [shape: bf16[2,16,16,64], index: 0, kind: input, shape index: {}]
  %s1 = inlined_call_operand.vmem [shape: f32[1,64], index: 1, kind: input, shape index: {}]
  %s2 = inlined_call_operand.vmem [shape: f32[1,64], index: 2, kind: input, shape index: {}]
  %s3 = inlined_call_operand.vmem [shape: bf16[2,16,16,64], index: 3, kind: input, shape index: {}]
  %s4 = inlined_call_operand.vmem [shape: bf16[2,16,16,64], index: 4, kind: output, shape index: {}]
  %s5 = sld [smem:[#allocation0]]
  $region49: #{bottleneck_forward.7} parent=0
    _
  %s7 = ssub.s32 1, %s5
  %s8 = scalar_select 0, %s7, %s5
  loop: start=0, step=1, limit=4
  $region2: #{bottleneck_forward.7} parent=0 // loop_pre_header
    _
  $region3: #{bottleneck_forward.7} parent=0 // loop_header
    %s10 = sphi 0, %s14
    %p11 = scmp.ge.s32.totalorder %s10, 4
    %s17 = sphi 0, %s29
    %s18 = sphi 0, %s25
    %s19 = sphi 0, %s17
    %s20 = sphi 0, %s18
    %s21 = sphi 0, %s19
    %s22 = sphi 0, %s20
    %s34 = sphi 0, %s36
    %s37 = sphi 0, %s34
    %s38 = sphi 0, %s37
    %s54 = sphi 0, %s38
    %s58 = sphi 0, %s58
    %s60 = sphi 0, %s58
    %s61 = sphi 0, %s60
    %s75 = sphi 0, %s61
    %s79 = sphi 0, %s79
    %s81 = sphi 0, %s79
    %s82 = sphi 0, %s81
    %s96 = sphi 0, %s82
    %s104 = sphi 0, %s106
    %s107 = sphi 0, %s104
    %s108 = sphi 0, %s107
    %s124 = sphi 0, %s108
    %s132 = sphi 0, %s134
    %s135 = sphi 0, %s132
    %s136 = sphi 0, %s135
    %s152 = sphi 0, %s136
  $region4: #{bottleneck_forward.7} parent=0 // loop_header_branch
    %13 = sbr.rel (%p11) target = $region8
  $region5: #{bottleneck_forward.7} parent=0 // loop_body
    %s15 = ssub.s32 %s10, 1
    %s16 = ssub.s32 %s10, 2
    %s23 = sadd.s32 1, %s18
    %p24 = scmp.ge.s32.totalorder %s23, 1
    %s25 = scalar_select %p24, 0, %s23
    %s26 = sadd.s32 1, %s17
    %s27 = scalar_select %p24, %s26, %s17
    %p28 = scmp.ge.s32.totalorder %s27, 2
    %s29 = scalar_select %p28, 0, %s27
    %s30 = ssub.s32 %s17, %s29
    %s31 = ssub.s32 %s18, %s25
    %s32 = sor.u32 %s30, %s31
    %p33 = scmp.eq.s32.totalorder %s32, 0
    %s35 = sadd.s32 %s34, 1
    %s36 = scalar_select %p33, %s34, %s35
    %p39 = pneg %p33
    %p40 = scmp.eq.s32.totalorder %s10, 1
    %p41 = por %p39, %p40
    %p42 = scmp.ne.s32.totalorder %s34, %s37
    %p43 = scmp.eq.s32.totalorder %s10, 0
    %p44 = por %p42, %p43
    %p45 = scmp.ne.s32.totalorder %s34, %s37
    %p46 = scmp.eq.s32.totalorder %s15, 1
    %p47 = por %p45, %p46
    %p48 = scmp.ne.s32.totalorder %s37, %s38
    %p49 = scmp.eq.s32.totalorder %s15, 0
    %p50 = por %p48, %p49
    %p51 = scmp.ne.s32.totalorder %s37, %s38
    %p52 = scmp.eq.s32.totalorder %s16, 1
    %p53 = por %p51, %p52
    %p55 = scmp.ne.s32.totalorder %s38, %s54
    %p56 = scmp.eq.s32.totalorder %s16, 0
    %p57 = por %p55, %p56
    %s59 = sadd.s32 %s58, 1
    %p62 = scmp.eq.s32.totalorder %s10, 1
    %p63 = scmp.ne.s32.totalorder %s58, %s60
    %p64 = scmp.eq.s32.totalorder %s10, 0
    %p65 = por %p63, %p64
    %p66 = scmp.ne.s32.totalorder %s58, %s60
    %p67 = scmp.eq.s32.totalorder %s15, 1
    %p68 = por %p66, %p67
    %p69 = scmp.ne.s32.totalorder %s60, %s61
    %p70 = scmp.eq.s32.totalorder %s15, 0
    %p71 = por %p69, %p70
    %p72 = scmp.ne.s32.totalorder %s60, %s61
    %p73 = scmp.eq.s32.totalorder %s16, 1
    %p74 = por %p72, %p73
    %p76 = scmp.ne.s32.totalorder %s61, %s75
    %p77 = scmp.eq.s32.totalorder %s16, 0
    %p78 = por %p76, %p77
    %s80 = sadd.s32 %s79, 1
    %p83 = scmp.eq.s32.totalorder %s10, 1
    %p84 = scmp.ne.s32.totalorder %s79, %s81
    %p85 = scmp.eq.s32.totalorder %s10, 0
    %p86 = por %p84, %p85
    %p87 = scmp.ne.s32.totalorder %s79, %s81
    %p88 = scmp.eq.s32.totalorder %s15, 1
    %p89 = por %p87, %p88
    %p90 = scmp.ne.s32.totalorder %s81, %s82
    %p91 = scmp.eq.s32.totalorder %s15, 0
    %p92 = por %p90, %p91
    %p93 = scmp.ne.s32.totalorder %s81, %s82
    %p94 = scmp.eq.s32.totalorder %s16, 1
    %p95 = por %p93, %p94
    %p97 = scmp.ne.s32.totalorder %s82, %s96
    %p98 = scmp.eq.s32.totalorder %s16, 0
    %p99 = por %p97, %p98
    %s100 = ssub.s32 %s17, %s29
    %s101 = ssub.s32 %s18, %s25
    %s102 = sor.u32 %s100, %s101
    %p103 = scmp.eq.s32.totalorder %s102, 0
    %s105 = sadd.s32 %s104, 1
    %s106 = scalar_select %p103, %s104, %s105
    %p109 = pneg %p103
    %p110 = scmp.eq.s32.totalorder %s10, 1
    %p111 = por %p109, %p110
    %p112 = scmp.ne.s32.totalorder %s104, %s107
    %p113 = scmp.eq.s32.totalorder %s10, 0
    %p114 = por %p112, %p113
    %p115 = scmp.ne.s32.totalorder %s104, %s107
    %p116 = scmp.eq.s32.totalorder %s15, 1
    %p117 = por %p115, %p116
    %p118 = scmp.ne.s32.totalorder %s107, %s108
    %p119 = scmp.eq.s32.totalorder %s15, 0
    %p120 = por %p118, %p119
    %p121 = scmp.ne.s32.totalorder %s107, %s108
    %p122 = scmp.eq.s32.totalorder %s16, 1
    %p123 = por %p121, %p122
    %p125 = scmp.ne.s32.totalorder %s108, %s124
    %p126 = scmp.eq.s32.totalorder %s16, 0
    %p127 = por %p125, %p126
    %s128 = ssub.s32 %s17, %s29
    %s129 = ssub.s32 %s18, %s25
    %s130 = sor.u32 %s128, %s129
    %p131 = scmp.eq.s32.totalorder %s130, 0
    %s133 = sadd.s32 %s132, 1
    %s134 = scalar_select %p131, %s132, %s133
    %p137 = pneg %p131
    %p138 = scmp.eq.s32.totalorder %s10, 1
    %p139 = por %p137, %p138
    %p140 = scmp.ne.s32.totalorder %s132, %s135
    %p141 = scmp.eq.s32.totalorder %s10, 0
    %p142 = por %p140, %p141
    %p143 = scmp.ne.s32.totalorder %s132, %s135
    %p144 = scmp.eq.s32.totalorder %s15, 1
    %p145 = por %p143, %p144
    %p146 = scmp.ne.s32.totalorder %s135, %s136
    %p147 = scmp.eq.s32.totalorder %s15, 0
    %p148 = por %p146, %p147
    %p149 = scmp.ne.s32.totalorder %s135, %s136
    %p150 = scmp.eq.s32.totalorder %s16, 1
    %p151 = por %p149, %p150
    %p153 = scmp.ne.s32.totalorder %s136, %s152
    %p154 = scmp.eq.s32.totalorder %s16, 0
    %p155 = por %p153, %p154
    %p156 = scmp.le.s32.totalorder 1, %s10
    %p157 = scmp.lt.s32.totalorder %s10, 3
    %p158 = pnand %p156, %p157
    %p159 = pneg %p158
    // Predicated region
    $region9: #{bottleneck_forward.7} parent=5 // pred_check
      _
    $region10: #{bottleneck_forward.7} parent=5 // pred_check_branch
      %161 = sbr.rel (%p158) target = $region12
    $region11: #{bottleneck_forward.7} parent=5 // pred_region
      %s162 = ssub.s32 %s10, 1
      // Predicated region
      $region13: #{bottleneck_forward.7} parent=11 // pred_check
        %p163 = pneg %p71
      $region14: #{bottleneck_forward.7} parent=11 // pred_check_branch
        %165 = sbr.rel (%p163) target = $region16
      $region15: #{bottleneck_forward.7} parent=11 // pred_region
        _
      $region16: #{bottleneck_forward.7} parent=11 // pred_fallthru
        _
      // Predicated region
      $region17: #{bottleneck_forward.7} parent=11 // pred_check
        %p166 = pneg %p92
      $region18: #{bottleneck_forward.7} parent=11 // pred_check_branch
        %168 = sbr.rel (%p166) target = $region20
      $region19: #{bottleneck_forward.7} parent=11 // pred_region
        _
      $region20: #{bottleneck_forward.7} parent=11 // pred_fallthru
        _
    $region12: #{bottleneck_forward.7} parent=5 // pred_fallthru
      _
    %p169 = scmp.lt.s32.totalorder %s10, 2
    // Predicated region
    $region21: #{bottleneck_forward.7} parent=5 // pred_check
      %p170 = pneg %p169
    $region22: #{bottleneck_forward.7} parent=5 // pred_check_branch
      %172 = sbr.rel (%p170) target = $region24
    $region23: #{bottleneck_forward.7} parent=5 // pred_region
      // Predicated region
      $region25: #{bottleneck_forward.7} parent=23 // pred_check
        %p173 = pneg %p44
      $region26: #{bottleneck_forward.7} parent=23 // pred_check_branch
        %175 = sbr.rel (%p173) target = $region28
      $region27: #{bottleneck_forward.7} parent=23 // pred_region
        %s176 = smul.u32 16, %s18
        %p177 = scmp.lt.s32.totalorder %s17, 1
        %s178 = scalar_select %p177, %s17, 1
        %p179 = scmp.lt.s32.totalorder %s176, 15
        %s180 = scalar_select %p179, %s176, 15
        %s181 = smul.addr %s180, 2
        %s182 = smul.addr %s178, 32
        %s183 = sadd.s32 %s181, %s182
        %s184 = smul.addr %s183, 4
        %s185 = scalar_lea.vmem %s0, %s184
        %s186 = smul.u32 16, %s18
      $region28: #{bottleneck_forward.7} parent=23 // pred_fallthru
        _
      // Predicated region
      $region29: #{bottleneck_forward.7} parent=23 // pred_check
        %p187 = pneg %p114
      $region30: #{bottleneck_forward.7} parent=23 // pred_check_branch
        %189 = sbr.rel (%p187) target = $region32
      $region31: #{bottleneck_forward.7} parent=23 // pred_region
        %s190 = smul.u32 16, %s18
        %p191 = scmp.lt.s32.totalorder %s17, 1
        %s192 = scalar_select %p191, %s17, 1
        %p193 = scmp.lt.s32.totalorder %s190, 15
        %s194 = scalar_select %p193, %s190, 15
        %s195 = smul.addr %s194, 2
        %s196 = smul.addr %s192, 32
        %s197 = sadd.s32 %s195, %s196
        %s198 = smul.addr %s197, 4
        %s199 = scalar_lea.vmem %s3, %s198
        %s200 = smul.u32 16, %s18
      $region32: #{bottleneck_forward.7} parent=23 // pred_fallthru
        _
    $region24: #{bottleneck_forward.7} parent=5 // pred_fallthru
      _
    %p201 = scmp.le.s32.totalorder 1, %s10
    %p202 = scmp.lt.s32.totalorder %s10, 3
    %p203 = pnand %p201, %p202
    %p204 = pneg %p203
    // Predicated region
    $region33: #{bottleneck_forward.7} parent=5 // pred_check
      _
    $region34: #{bottleneck_forward.7} parent=5 // pred_check_branch
      %206 = sbr.rel (%p203) target = $region36
    $region35: #{bottleneck_forward.7} parent=5 // pred_region
      %s207 = ssub.s32 %s10, 1
      %s208 = smul.u32 16, %s20
      %p209 = scmp.lt.s32.totalorder %s19, 1
      %s210 = scalar_select %p209, %s19, 1
      %p211 = scmp.lt.s32.totalorder %s208, 15
      %s212 = scalar_select %p211, %s208, 15
      %s213 = smul.addr %s212, 2
      %s214 = smul.addr %s210, 32
      %s215 = sadd.s32 %s213, %s214
      %s216 = smul.addr %s215, 4
      %s217 = scalar_lea.vmem %s0, %s216
      %p218 = pneg %p50
      %p219 = pneg %p47
      %p220 = pneg %p71
      %p221 = pneg %p68
      %p222 = pneg %p92
      %p223 = pneg %p89
      %s224 = smul.u32 16, %s20
      %p225 = scmp.lt.s32.totalorder %s19, 1
      %s226 = scalar_select %p225, %s19, 1
      %p227 = scmp.lt.s32.totalorder %s224, 15
      %s228 = scalar_select %p227, %s224, 15
      %s229 = smul.addr %s228, 2
      %s230 = smul.addr %s226, 32
      %s231 = sadd.s32 %s229, %s230
      %s232 = smul.addr %s231, 4
      %s233 = scalar_lea.vmem %s3, %s232
      %p234 = pneg %p120
      %p235 = pneg %p117
      %p236 = pneg %p148
      %p237 = pneg %p145
      %s238 = smul.u32 16, %s20
      %p239 = scmp.lt.s32.totalorder %s19, 1
      %s240 = scalar_select %p239, %s19, 1
      %p241 = scmp.lt.s32.totalorder %s238, 15
      %s242 = scalar_select %p241, %s238, 15
      %s243 = smul.addr %s242, 2
      %s244 = smul.addr %s240, 32
      %s245 = sadd.s32 %s243, %s244
      %s246 = smul.addr %s245, 4
      %s247 = scalar_lea.vmem %s4, %s246
      %s248 = smul.u32 16, %s20
      %p249 = scmp.lt.s32.totalorder %s19, 1
      %s250 = scalar_select %p249, %s19, 1
      %p251 = scmp.lt.s32.totalorder %s248, 15
      %s252 = scalar_select %p251, %s248, 15
      %s253 = smul.addr %s252, 2
      %s254 = smul.addr %s250, 32
      %s255 = sadd.s32 %s253, %s254
      %s256 = smul.addr %s255, 4
      %s257 = scalar_lea.vmem %s0, %s256
      %s258 = smul.u32 16, %s20
      %s259 = smul.u32 16, %s20
      %p260 = scmp.lt.s32.totalorder %s19, 1
      %s261 = scalar_select %p260, %s19, 1
      %p262 = scmp.lt.s32.totalorder %s259, 15
      %s263 = scalar_select %p262, %s259, 15
      %s264 = smul.addr %s263, 2
      %s265 = smul.addr %s261, 32
      %s266 = sadd.s32 %s264, %s265
      %s267 = smul.addr %s266, 4
      %s268 = scalar_lea.vmem %s3, %s267
      %s269 = smul.u32 16, %s20
      %s270 = smul.u32 16, %s20
      %p271 = scmp.lt.s32.totalorder %s19, 1
      %s272 = scalar_select %p271, %s19, 1
      %p273 = scmp.lt.s32.totalorder %s270, 15
      %s274 = scalar_select %p273, %s270, 15
      %s275 = smul.addr %s274, 2
      %s276 = smul.addr %s272, 32
      %s277 = sadd.s32 %s275, %s276
      %s278 = smul.addr %s277, 4
      %s279 = scalar_lea.vmem %s4, %s278
      %s280 = smul.u32 16, %s20
      %v281 = vld [vmem:[%s257] sm:$0xf]
      %v282 = vld [vmem:[%s257 + $0x4] sm:$0xf]
      %v283 = vld [vmem:[%s257 + $0x8] sm:$0xf]
      %v284 = vld [vmem:[%s257 + $0xc] sm:$0xf]
      %v285 = vld [vmem:[%s257 + $0x10] sm:$0xf]
      %v286 = vld [vmem:[%s257 + $0x14] sm:$0xf]
      %v287 = vld [vmem:[%s257 + $0x18] sm:$0xf]
      %v288 = vld [vmem:[%s257 + $0x1c] sm:$0xf]
      %v289 = vld [vmem:[%s257 + $0x20] sm:$0xf]
      %v290 = vld [vmem:[%s257 + $0x24] sm:$0xf]
      %v291 = vld [vmem:[%s257 + $0x28] sm:$0xf]
      %v292 = vld [vmem:[%s257 + $0x2c] sm:$0xf]
      %v293 = vld [vmem:[%s257 + $0x30] sm:$0xf]
      %v294 = vld [vmem:[%s257 + $0x34] sm:$0xf]
      %v295 = vld [vmem:[%s257 + $0x38] sm:$0xf]
      %v296 = vld [vmem:[%s257 + $0x3c] sm:$0xf]
      %v297 = vld [vmem:[%s257 + $0x40] sm:$0xf]
      %v298 = vld [vmem:[%s257 + $0x44] sm:$0xf]
      %v299 = vld [vmem:[%s257 + $0x48] sm:$0xf]
      %v300 = vld [vmem:[%s257 + $0x4c] sm:$0xf]
      %v301 = vld [vmem:[%s257 + $0x50] sm:$0xf]
      %v302 = vld [vmem:[%s257 + $0x54] sm:$0xf]
      %v303 = vld [vmem:[%s257 + $0x58] sm:$0xf]
      %v304 = vld [vmem:[%s257 + $0x5c] sm:$0xf]
      %v305 = vld [vmem:[%s257 + $0x60] sm:$0xf]
      %v306 = vld [vmem:[%s257 + $0x64] sm:$0xf]
      %v307 = vld [vmem:[%s257 + $0x68] sm:$0xf]
      %v308 = vld [vmem:[%s257 + $0x6c] sm:$0xf]
      %v309 = vld [vmem:[%s257 + $0x70] sm:$0xf]
      %v310 = vld [vmem:[%s257 + $0x74] sm:$0xf]
      %v311 = vld [vmem:[%s257 + $0x78] sm:$0xf]
      %v312 = vld [vmem:[%s257 + $0x7c] sm:$0xf]
      %v313 = vunpack.c.l.bf16 %v281
      %v314 = vunpack.c.l.bf16 %v282
      %v315 = vunpack.c.l.bf16 %v283
      %v316 = vunpack.c.l.bf16 %v284
      %v317 = vunpack.c.l.bf16 %v285
      %v318 = vunpack.c.l.bf16 %v286
      %v319 = vunpack.c.l.bf16 %v287
      %v320 = vunpack.c.l.bf16 %v288
      %v321 = vunpack.c.l.bf16 %v289
      %v322 = vunpack.c.l.bf16 %v290
      %v323 = vunpack.c.l.bf16 %v291
      %v324 = vunpack.c.l.bf16 %v292
      %v325 = vunpack.c.l.bf16 %v293
      %v326 = vunpack.c.l.bf16 %v294
      %v327 = vunpack.c.l.bf16 %v295
      %v328 = vunpack.c.l.bf16 %v296
      %v329 = vunpack.c.l.bf16 %v297
      %v330 = vunpack.c.l.bf16 %v298
      %v331 = vunpack.c.l.bf16 %v299
      %v332 = vunpack.c.l.bf16 %v300
      %v333 = vunpack.c.l.bf16 %v301
      %v334 = vunpack.c.l.bf16 %v302
      %v335 = vunpack.c.l.bf16 %v303
      %v336 = vunpack.c.l.bf16 %v304
      %v337 = vunpack.c.l.bf16 %v305
      %v338 = vunpack.c.l.bf16 %v306
      %v339 = vunpack.c.l.bf16 %v307
      %v340 = vunpack.c.l.bf16 %v308
      %v341 = vunpack.c.l.bf16 %v309
      %v342 = vunpack.c.l.bf16 %v310
      %v343 = vunpack.c.l.bf16 %v311
      %v344 = vunpack.c.l.bf16 %v312
      %v345 = vld [vmem:[%s268] sm:$0xf]
      %v346 = vld [vmem:[%s268 + $0x4] sm:$0xf]
      %v347 = vld [vmem:[%s268 + $0x8] sm:$0xf]
      %v348 = vld [vmem:[%s268 + $0xc] sm:$0xf]
      %v349 = vld [vmem:[%s268 + $0x10] sm:$0xf]
      %v350 = vld [vmem:[%s268 + $0x14] sm:$0xf]
      %v351 = vld [vmem:[%s268 + $0x18] sm:$0xf]
      %v352 = vld [vmem:[%s268 + $0x1c] sm:$0xf]
      %v353 = vld [vmem:[%s268 + $0x20] sm:$0xf]
      %v354 = vld [vmem:[%s268 + $0x24] sm:$0xf]
      %v355 = vld [vmem:[%s268 + $0x28] sm:$0xf]
      %v356 = vld [vmem:[%s268 + $0x2c] sm:$0xf]
      %v357 = vld [vmem:[%s268 + $0x30] sm:$0xf]
      %v358 = vld [vmem:[%s268 + $0x34] sm:$0xf]
      %v359 = vld [vmem:[%s268 + $0x38] sm:$0xf]
      %v360 = vld [vmem:[%s268 + $0x3c] sm:$0xf]
      %v361 = vld [vmem:[%s268 + $0x40] sm:$0xf]
      %v362 = vld [vmem:[%s268 + $0x44] sm:$0xf]
      %v363 = vld [vmem:[%s268 + $0x48] sm:$0xf]
      %v364 = vld [vmem:[%s268 + $0x4c] sm:$0xf]
      %v365 = vld [vmem:[%s268 + $0x50] sm:$0xf]
      %v366 = vld [vmem:[%s268 + $0x54] sm:$0xf]
      %v367 = vld [vmem:[%s268 + $0x58] sm:$0xf]
      %v368 = vld [vmem:[%s268 + $0x5c] sm:$0xf]
      %v369 = vld [vmem:[%s268 + $0x60] sm:$0xf]
      %v370 = vld [vmem:[%s268 + $0x64] sm:$0xf]
      %v371 = vld [vmem:[%s268 + $0x68] sm:$0xf]
      %v372 = vld [vmem:[%s268 + $0x6c] sm:$0xf]
      %v373 = vld [vmem:[%s268 + $0x70] sm:$0xf]
      %v374 = vld [vmem:[%s268 + $0x74] sm:$0xf]
      %v375 = vld [vmem:[%s268 + $0x78] sm:$0xf]
      %v376 = vld [vmem:[%s268 + $0x7c] sm:$0xf]
      %v377 = vunpack.c.l.bf16 %v345
      %v378 = vunpack.c.l.bf16 %v346
      %v379 = vunpack.c.l.bf16 %v347
      %v380 = vunpack.c.l.bf16 %v348
      %v381 = vunpack.c.l.bf16 %v349
      %v382 = vunpack.c.l.bf16 %v350
      %v383 = vunpack.c.l.bf16 %v351
      %v384 = vunpack.c.l.bf16 %v352
      %v385 = vunpack.c.l.bf16 %v353
      %v386 = vunpack.c.l.bf16 %v354
      %v387 = vunpack.c.l.bf16 %v355
      %v388 = vunpack.c.l.bf16 %v356
      %v389 = vunpack.c.l.bf16 %v357
      %v390 = vunpack.c.l.bf16 %v358
      %v391 = vunpack.c.l.bf16 %v359
      %v392 = vunpack.c.l.bf16 %v360
      %v393 = vunpack.c.l.bf16 %v361
      %v394 = vunpack.c.l.bf16 %v362
      %v395 = vunpack.c.l.bf16 %v363
      %v396 = vunpack.c.l.bf16 %v364
      %v397 = vunpack.c.l.bf16 %v365
      %v398 = vunpack.c.l.bf16 %v366
      %v399 = vunpack.c.l.bf16 %v367
      %v400 = vunpack.c.l.bf16 %v368
      %v401 = vunpack.c.l.bf16 %v369
      %v402 = vunpack.c.l.bf16 %v370
      %v403 = vunpack.c.l.bf16 %v371
      %v404 = vunpack.c.l.bf16 %v372
      %v405 = vunpack.c.l.bf16 %v373
      %v406 = vunpack.c.l.bf16 %v374
      %v407 = vunpack.c.l.bf16 %v375
      %v408 = vunpack.c.l.bf16 %v376
      %v409 = vld [vmem:[%s1] sm:$0x1]
      %v411 = vperm.slane %v409, 0
      %v413 = vmul.f32 %v313, %v411
      %v414 = vmul.f32 %v314, %v411
      %v415 = vmul.f32 %v315, %v411
      %v416 = vmul.f32 %v316, %v411
      %v417 = vmul.f32 %v317, %v411
      %v418 = vmul.f32 %v318, %v411
      %v419 = vmul.f32 %v319, %v411
      %v420 = vmul.f32 %v320, %v411
      %v421 = vmul.f32 %v321, %v411
      %v422 = vmul.f32 %v322, %v411
      %v423 = vmul.f32 %v323, %v411
      %v424 = vmul.f32 %v324, %v411
      %v425 = vmul.f32 %v325, %v411
      %v426 = vmul.f32 %v326, %v411
      %v427 = vmul.f32 %v327, %v411
      %v428 = vmul.f32 %v328, %v411
      %v429 = vmul.f32 %v329, %v411
      %v430 = vmul.f32 %v330, %v411
      %v431 = vmul.f32 %v331, %v411
      %v432 = vmul.f32 %v332, %v411
      %v433 = vmul.f32 %v333, %v411
      %v434 = vmul.f32 %v334, %v411
      %v435 = vmul.f32 %v335, %v411
      %v436 = vmul.f32 %v336, %v411
      %v437 = vmul.f32 %v337, %v411
      %v438 = vmul.f32 %v338, %v411
      %v439 = vmul.f32 %v339, %v411
      %v440 = vmul.f32 %v340, %v411
      %v441 = vmul.f32 %v341, %v411
      %v442 = vmul.f32 %v342, %v411
      %v443 = vmul.f32 %v343, %v411
      %v444 = vmul.f32 %v344, %v411
      %v445 = vld [vmem:[%s2] sm:$0x1]
      %v447 = vperm.slane %v445, 0
      %v449 = vadd.f32 %v413, %v447
      %v450 = vadd.f32 %v414, %v447
      %v451 = vadd.f32 %v415, %v447
      %v452 = vadd.f32 %v416, %v447
      %v453 = vadd.f32 %v417, %v447
      %v454 = vadd.f32 %v418, %v447
      %v455 = vadd.f32 %v419, %v447
      %v456 = vadd.f32 %v420, %v447
      %v457 = vadd.f32 %v421, %v447
      %v458 = vadd.f32 %v422, %v447
      %v459 = vadd.f32 %v423, %v447
      %v460 = vadd.f32 %v424, %v447
      %v461 = vadd.f32 %v425, %v447
      %v462 = vadd.f32 %v426, %v447
      %v463 = vadd.f32 %v427, %v447
      %v464 = vadd.f32 %v428, %v447
      %v465 = vadd.f32 %v429, %v447
      %v466 = vadd.f32 %v430, %v447
      %v467 = vadd.f32 %v431, %v447
      %v468 = vadd.f32 %v432, %v447
      %v469 = vadd.f32 %v433, %v447
      %v470 = vadd.f32 %v434, %v447
      %v471 = vadd.f32 %v435, %v447
      %v472 = vadd.f32 %v436, %v447
      %v473 = vadd.f32 %v437, %v447
      %v474 = vadd.f32 %v438, %v447
      %v475 = vadd.f32 %v439, %v447
      %v476 = vadd.f32 %v440, %v447
      %v477 = vadd.f32 %v441, %v447
      %v478 = vadd.f32 %v442, %v447
      %v479 = vadd.f32 %v443, %v447
      %v480 = vadd.f32 %v444, %v447
      %v481 = vadd.f32 %v449, %v377
      %v482 = vadd.f32 %v450, %v378
      %v483 = vadd.f32 %v451, %v379
      %v484 = vadd.f32 %v452, %v380
      %v485 = vadd.f32 %v453, %v381
      %v486 = vadd.f32 %v454, %v382
      %v487 = vadd.f32 %v455, %v383
      %v488 = vadd.f32 %v456, %v384
      %v489 = vadd.f32 %v457, %v385
      %v490 = vadd.f32 %v458, %v386
      %v491 = vadd.f32 %v459, %v387
      %v492 = vadd.f32 %v460, %v388
      %v493 = vadd.f32 %v461, %v389
      %v494 = vadd.f32 %v462, %v390
      %v495 = vadd.f32 %v463, %v391
      %v496 = vadd.f32 %v464, %v392
      %v497 = vadd.f32 %v465, %v393
      %v498 = vadd.f32 %v466, %v394
      %v499 = vadd.f32 %v467, %v395
      %v500 = vadd.f32 %v468, %v396
      %v501 = vadd.f32 %v469, %v397
      %v502 = vadd.f32 %v470, %v398
      %v503 = vadd.f32 %v471, %v399
      %v504 = vadd.f32 %v472, %v400
      %v505 = vadd.f32 %v473, %v401
      %v506 = vadd.f32 %v474, %v402
      %v507 = vadd.f32 %v475, %v403
      %v508 = vadd.f32 %v476, %v404
      %v509 = vadd.f32 %v477, %v405
      %v510 = vadd.f32 %v478, %v406
      %v511 = vadd.f32 %v479, %v407
      %v512 = vadd.f32 %v480, %v408
      %v513 = vmax.f32 %v481, 0.0
      %v514 = vmax.f32 %v482, 0.0
      %v515 = vmax.f32 %v483, 0.0
      %v516 = vmax.f32 %v484, 0.0
      %v517 = vmax.f32 %v485, 0.0
      %v518 = vmax.f32 %v486, 0.0
      %v519 = vmax.f32 %v487, 0.0
      %v520 = vmax.f32 %v488, 0.0
      %v521 = vmax.f32 %v489, 0.0
      %v522 = vmax.f32 %v490, 0.0
      %v523 = vmax.f32 %v491, 0.0
      %v524 = vmax.f32 %v492, 0.0
      %v525 = vmax.f32 %v493, 0.0
      %v526 = vmax.f32 %v494, 0.0
      %v527 = vmax.f32 %v495, 0.0
      %v528 = vmax.f32 %v496, 0.0
      %v529 = vmax.f32 %v497, 0.0
      %v530 = vmax.f32 %v498, 0.0
      %v531 = vmax.f32 %v499, 0.0
      %v532 = vmax.f32 %v500, 0.0
      %v533 = vmax.f32 %v501, 0.0
      %v534 = vmax.f32 %v502, 0.0
      %v535 = vmax.f32 %v503, 0.0
      %v536 = vmax.f32 %v504, 0.0
      %v537 = vmax.f32 %v505, 0.0
      %v538 = vmax.f32 %v506, 0.0
      %v539 = vmax.f32 %v507, 0.0
      %v540 = vmax.f32 %v508, 0.0
      %v541 = vmax.f32 %v509, 0.0
      %v542 = vmax.f32 %v510, 0.0
      %v543 = vmax.f32 %v511, 0.0
      %v544 = vmax.f32 %v512, 0.0
      %v545 = vpack.c.bf16 %v513, %v513
      %v546 = vpack.c.bf16 %v514, %v514
      %v547 = vpack.c.bf16 %v515, %v515
      %v548 = vpack.c.bf16 %v516, %v516
      %v549 = vpack.c.bf16 %v517, %v517
      %v550 = vpack.c.bf16 %v518, %v518
      %v551 = vpack.c.bf16 %v519, %v519
      %v552 = vpack.c.bf16 %v520, %v520
      %v553 = vpack.c.bf16 %v521, %v521
      %v554 = vpack.c.bf16 %v522, %v522
      %v555 = vpack.c.bf16 %v523, %v523
      %v556 = vpack.c.bf16 %v524, %v524
      %v557 = vpack.c.bf16 %v525, %v525
      %v558 = vpack.c.bf16 %v526, %v526
      %v559 = vpack.c.bf16 %v527, %v527
      %v560 = vpack.c.bf16 %v528, %v528
      %v561 = vpack.c.bf16 %v529, %v529
      %v562 = vpack.c.bf16 %v530, %v530
      %v563 = vpack.c.bf16 %v531, %v531
      %v564 = vpack.c.bf16 %v532, %v532
      %v565 = vpack.c.bf16 %v533, %v533
      %v566 = vpack.c.bf16 %v534, %v534
      %v567 = vpack.c.bf16 %v535, %v535
      %v568 = vpack.c.bf16 %v536, %v536
      %v569 = vpack.c.bf16 %v537, %v537
      %v570 = vpack.c.bf16 %v538, %v538
      %v571 = vpack.c.bf16 %v539, %v539
      %v572 = vpack.c.bf16 %v540, %v540
      %v573 = vpack.c.bf16 %v541, %v541
      %v574 = vpack.c.bf16 %v542, %v542
      %v575 = vpack.c.bf16 %v543, %v543
      %v576 = vpack.c.bf16 %v544, %v544
      %vm577 = vcmask 519168
      %578 = vst.msk [vmem:[%s279] sm:$0xf] %vm577, %v545
      %579 = vst.msk [vmem:[%s279 + $0x4] sm:$0xf] %vm577, %v546
      %580 = vst.msk [vmem:[%s279 + $0x8] sm:$0xf] %vm577, %v547
      %581 = vst.msk [vmem:[%s279 + $0xc] sm:$0xf] %vm577, %v548
      %582 = vst.msk [vmem:[%s279 + $0x10] sm:$0xf] %vm577, %v549
      %583 = vst.msk [vmem:[%s279 + $0x14] sm:$0xf] %vm577, %v550
      %584 = vst.msk [vmem:[%s279 + $0x18] sm:$0xf] %vm577, %v551
      %585 = vst.msk [vmem:[%s279 + $0x1c] sm:$0xf] %vm577, %v552
      %586 = vst.msk [vmem:[%s279 + $0x20] sm:$0xf] %vm577, %v553
      %587 = vst.msk [vmem:[%s279 + $0x24] sm:$0xf] %vm577, %v554
      %588 = vst.msk [vmem:[%s279 + $0x28] sm:$0xf] %vm577, %v555
      %589 = vst.msk [vmem:[%s279 + $0x2c] sm:$0xf] %vm577, %v556
      %590 = vst.msk [vmem:[%s279 + $0x30] sm:$0xf] %vm577, %v557
      %591 = vst.msk [vmem:[%s279 + $0x34] sm:$0xf] %vm577, %v558
      %592 = vst.msk [vmem:[%s279 + $0x38] sm:$0xf] %vm577, %v559
      %593 = vst.msk [vmem:[%s279 + $0x3c] sm:$0xf] %vm577, %v560
      %594 = vst.msk [vmem:[%s279 + $0x40] sm:$0xf] %vm577, %v561
      %595 = vst.msk [vmem:[%s279 + $0x44] sm:$0xf] %vm577, %v562
      %596 = vst.msk [vmem:[%s279 + $0x48] sm:$0xf] %vm577, %v563
      %597 = vst.msk [vmem:[%s279 + $0x4c] sm:$0xf] %vm577, %v564
      %598 = vst.msk [vmem:[%s279 + $0x50] sm:$0xf] %vm577, %v565
      %599 = vst.msk [vmem:[%s279 + $0x54] sm:$0xf] %vm577, %v566
      %600 = vst.msk [vmem:[%s279 + $0x58] sm:$0xf] %vm577, %v567
      %601 = vst.msk [vmem:[%s279 + $0x5c] sm:$0xf] %vm577, %v568
      %602 = vst.msk [vmem:[%s279 + $0x60] sm:$0xf] %vm577, %v569
      %603 = vst.msk [vmem:[%s279 + $0x64] sm:$0xf] %vm577, %v570
      %604 = vst.msk [vmem:[%s279 + $0x68] sm:$0xf] %vm577, %v571
      %605 = vst.msk [vmem:[%s279 + $0x6c] sm:$0xf] %vm577, %v572
      %606 = vst.msk [vmem:[%s279 + $0x70] sm:$0xf] %vm577, %v573
      %607 = vst.msk [vmem:[%s279 + $0x74] sm:$0xf] %vm577, %v574
      %608 = vst.msk [vmem:[%s279 + $0x78] sm:$0xf] %vm577, %v575
      %609 = vst.msk [vmem:[%s279 + $0x7c] sm:$0xf] %vm577, %v576
      %s610 = smul.u32 16, %s20
      %p611 = scmp.lt.s32.totalorder %s19, 1
      %s612 = scalar_select %p611, %s19, 1
      %p613 = scmp.lt.s32.totalorder %s610, 15
      %s614 = scalar_select %p613, %s610, 15
      %s615 = smul.addr %s614, 2
      %s616 = smul.addr %s612, 32
      %s617 = sadd.s32 %s615, %s616
      %s618 = smul.addr %s617, 4
      %s619 = scalar_lea.vmem %s4, %s618
      // Predicated region
      $region37: #{bottleneck_forward.7} parent=35 // pred_check
        %p620 = pneg %p145
      $region38: #{bottleneck_forward.7} parent=35 // pred_check_branch
        %622 = sbr.rel (%p620) target = $region40
      $region39: #{bottleneck_forward.7} parent=35 // pred_region
        %s623 = smul.u32 16, %s20
      $region40: #{bottleneck_forward.7} parent=35 // pred_fallthru
        _
    $region36: #{bottleneck_forward.7} parent=5 // pred_fallthru
      _
    %p624 = scmp.le.s32.totalorder 2, %s10
    // Predicated region
    $region41: #{bottleneck_forward.7} parent=5 // pred_check
      %p625 = pneg %p624
    $region42: #{bottleneck_forward.7} parent=5 // pred_check_branch
      %627 = sbr.rel (%p625) target = $region44
    $region43: #{bottleneck_forward.7} parent=5 // pred_region
      %s628 = ssub.s32 %s10, 2
      // Predicated region
      $region45: #{bottleneck_forward.7} parent=43 // pred_check
        %p629 = pneg %p151
      $region46: #{bottleneck_forward.7} parent=43 // pred_check_branch
        %631 = sbr.rel (%p629) target = $region48
      $region47: #{bottleneck_forward.7} parent=43 // pred_region
        %s632 = smul.u32 16, %s22
        %p633 = scmp.lt.s32.totalorder %s21, 1
        %s634 = scalar_select %p633, %s21, 1
        %p635 = scmp.lt.s32.totalorder %s632, 15
        %s636 = scalar_select %p635, %s632, 15
        %s637 = smul.addr %s636, 2
        %s638 = smul.addr %s634, 32
        %s639 = sadd.s32 %s637, %s638
        %s640 = smul.addr %s639, 4
        %s641 = scalar_lea.vmem %s4, %s640
      $region48: #{bottleneck_forward.7} parent=43 // pred_fallthru
        _
    $region44: #{bottleneck_forward.7} parent=5 // pred_fallthru
      _
  $region6: #{bottleneck_forward.7} parent=0 // loop_footer
    %s14 = sadd.s32 1, %s10
  $region7: #{bottleneck_forward.7} parent=0 // loop_footer_branch
    %9 = sbr.rel target = $region3
  $region8: #{bottleneck_forward.7} parent=0 // loop_exit
    _

// kernel: bottleneck_forward.6
$region0: #{bottleneck_forward.6}
  #allocation0 [shape = 'u32[]', space=smem, size = 0x4, offset = 0x4, fixed_abs, tag = 'smem constant byte address 0x4 - core index']
  #allocation1 [shape = 'u32[72,128]{1,0:T(1,128)}', space=vmem, size = 0x9000, scoped, tag = 'internal scratch']
  %s0 = inlined_call_operand.vmem [shape: bf16[2,16,16,16], index: 0, kind: input, shape index: {}]
  %s1 = inlined_call_operand.vmem [shape: f32[1,16], index: 1, kind: input, shape index: {}]
  %s2 = inlined_call_operand.vmem [shape: f32[1,16], index: 2, kind: input, shape index: {}]
  %s3 = inlined_call_operand.vmem [shape: bf16[16,64], index: 3, kind: input, shape index: {}]
  %s4 = inlined_call_operand.vmem [shape: bf16[2,16,16,64], index: 4, kind: output, shape index: {0}]
  %s5 = inlined_call_operand.vmem [shape: f32[2,1,64], index: 5, kind: output, shape index: {1}]
  %s6 = inlined_call_operand.vmem [shape: f32[2,1,64], index: 6, kind: output, shape index: {2}]
  %7 = xla_tuple %s4, %s5, %s6
  %s8 = sld [smem:[#allocation0]]
  $region69: #{bottleneck_forward.6} parent=0
    _
  %s10 = ssub.s32 1, %s8
  %s11 = scalar_select 0, %s10, %s8
  loop: start=0, step=1, limit=4
  $region2: #{bottleneck_forward.6} parent=0 // loop_pre_header
    _
  $region3: #{bottleneck_forward.6} parent=0 // loop_header
    %s13 = sphi 0, %s17
    %p14 = scmp.ge.s32.totalorder %s13, 4
    %s20 = sphi 0, %s32
    %s21 = sphi 0, %s28
    %s22 = sphi 0, %s20
    %s23 = sphi 0, %s21
    %s24 = sphi 0, %s22
    %s25 = sphi 0, %s23
    %s37 = sphi 0, %s39
    %s40 = sphi 0, %s37
    %s41 = sphi 0, %s40
    %s57 = sphi 0, %s41
    %s61 = sphi 0, %s61
    %s63 = sphi 0, %s61
    %s64 = sphi 0, %s63
    %s78 = sphi 0, %s64
    %s82 = sphi 0, %s82
    %s84 = sphi 0, %s82
    %s85 = sphi 0, %s84
    %s99 = sphi 0, %s85
    %s103 = sphi 0, %s103
    %s105 = sphi 0, %s103
    %s106 = sphi 0, %s105
    %s120 = sphi 0, %s106
    %s128 = sphi 0, %s130
    %s131 = sphi 0, %s128
    %s132 = sphi 0, %s131
    %s148 = sphi 0, %s132
    %s154 = sphi 0, %s156
    %s157 = sphi 0, %s154
    %s158 = sphi 0, %s157
    %s174 = sphi 0, %s158
    %s180 = sphi 0, %s182
    %s183 = sphi 0, %s180
    %s184 = sphi 0, %s183
    %s200 = sphi 0, %s184
  $region4: #{bottleneck_forward.6} parent=0 // loop_header_branch
    %16 = sbr.rel (%p14) target = $region8
  $region5: #{bottleneck_forward.6} parent=0 // loop_body
    %s18 = ssub.s32 %s13, 1
    %s19 = ssub.s32 %s13, 2
    %s26 = sadd.s32 1, %s21
    %p27 = scmp.ge.s32.totalorder %s26, 1
    %s28 = scalar_select %p27, 0, %s26
    %s29 = sadd.s32 1, %s20
    %s30 = scalar_select %p27, %s29, %s20
    %p31 = scmp.ge.s32.totalorder %s30, 2
    %s32 = scalar_select %p31, 0, %s30
    %s33 = ssub.s32 %s20, %s32
    %s34 = ssub.s32 %s21, %s28
    %s35 = sor.u32 %s33, %s34
    %p36 = scmp.eq.s32.totalorder %s35, 0
    %s38 = sadd.s32 %s37, 1
    %s39 = scalar_select %p36, %s37, %s38
    %p42 = pneg %p36
    %p43 = scmp.eq.s32.totalorder %s13, 1
    %p44 = por %p42, %p43
    %p45 = scmp.ne.s32.totalorder %s37, %s40
    %p46 = scmp.eq.s32.totalorder %s13, 0
    %p47 = por %p45, %p46
    %p48 = scmp.ne.s32.totalorder %s37, %s40
    %p49 = scmp.eq.s32.totalorder %s18, 1
    %p50 = por %p48, %p49
    %p51 = scmp.ne.s32.totalorder %s40, %s41
    %p52 = scmp.eq.s32.totalorder %s18, 0
    %p53 = por %p51, %p52
    %p54 = scmp.ne.s32.totalorder %s40, %s41
    %p55 = scmp.eq.s32.totalorder %s19, 1
    %p56 = por %p54, %p55
    %p58 = scmp.ne.s32.totalorder %s41, %s57
    %p59 = scmp.eq.s32.totalorder %s19, 0
    %p60 = por %p58, %p59
    %s62 = sadd.s32 %s61, 1
    %p65 = scmp.eq.s32.totalorder %s13, 1
    %p66 = scmp.ne.s32.totalorder %s61, %s63
    %p67 = scmp.eq.s32.totalorder %s13, 0
    %p68 = por %p66, %p67
    %p69 = scmp.ne.s32.totalorder %s61, %s63
    %p70 = scmp.eq.s32.totalorder %s18, 1
    %p71 = por %p69, %p70
    %p72 = scmp.ne.s32.totalorder %s63, %s64
    %p73 = scmp.eq.s32.totalorder %s18, 0
    %p74 = por %p72, %p73
    %p75 = scmp.ne.s32.totalorder %s63, %s64
    %p76 = scmp.eq.s32.totalorder %s19, 1
    %p77 = por %p75, %p76
    %p79 = scmp.ne.s32.totalorder %s64, %s78
    %p80 = scmp.eq.s32.totalorder %s19, 0
    %p81 = por %p79, %p80
    %s83 = sadd.s32 %s82, 1
    %p86 = scmp.eq.s32.totalorder %s13, 1
    %p87 = scmp.ne.s32.totalorder %s82, %s84
    %p88 = scmp.eq.s32.totalorder %s13, 0
    %p89 = por %p87, %p88
    %p90 = scmp.ne.s32.totalorder %s82, %s84
    %p91 = scmp.eq.s32.totalorder %s18, 1
    %p92 = por %p90, %p91
    %p93 = scmp.ne.s32.totalorder %s84, %s85
    %p94 = scmp.eq.s32.totalorder %s18, 0
    %p95 = por %p93, %p94
    %p96 = scmp.ne.s32.totalorder %s84, %s85
    %p97 = scmp.eq.s32.totalorder %s19, 1
    %p98 = por %p96, %p97
    %p100 = scmp.ne.s32.totalorder %s85, %s99
    %p101 = scmp.eq.s32.totalorder %s19, 0
    %p102 = por %p100, %p101
    %s104 = sadd.s32 %s103, 1
    %p107 = scmp.eq.s32.totalorder %s13, 1
    %p108 = scmp.ne.s32.totalorder %s103, %s105
    %p109 = scmp.eq.s32.totalorder %s13, 0
    %p110 = por %p108, %p109
    %p111 = scmp.ne.s32.totalorder %s103, %s105
    %p112 = scmp.eq.s32.totalorder %s18, 1
    %p113 = por %p111, %p112
    %p114 = scmp.ne.s32.totalorder %s105, %s106
    %p115 = scmp.eq.s32.totalorder %s18, 0
    %p116 = por %p114, %p115
    %p117 = scmp.ne.s32.totalorder %s105, %s106
    %p118 = scmp.eq.s32.totalorder %s19, 1
    %p119 = por %p117, %p118
    %p121 = scmp.ne.s32.totalorder %s106, %s120
    %p122 = scmp.eq.s32.totalorder %s19, 0
    %p123 = por %p121, %p122
    %s124 = ssub.s32 %s20, %s32
    %s125 = ssub.s32 %s21, %s28
    %s126 = sor.u32 %s124, %s125
    %p127 = scmp.eq.s32.totalorder %s126, 0
    %s129 = sadd.s32 %s128, 1
    %s130 = scalar_select %p127, %s128, %s129
    %p133 = pneg %p127
    %p134 = scmp.eq.s32.totalorder %s13, 1
    %p135 = por %p133, %p134
    %p136 = scmp.ne.s32.totalorder %s128, %s131
    %p137 = scmp.eq.s32.totalorder %s13, 0
    %p138 = por %p136, %p137
    %p139 = scmp.ne.s32.totalorder %s128, %s131
    %p140 = scmp.eq.s32.totalorder %s18, 1
    %p141 = por %p139, %p140
    %p142 = scmp.ne.s32.totalorder %s131, %s132
    %p143 = scmp.eq.s32.totalorder %s18, 0
    %p144 = por %p142, %p143
    %p145 = scmp.ne.s32.totalorder %s131, %s132
    %p146 = scmp.eq.s32.totalorder %s19, 1
    %p147 = por %p145, %p146
    %p149 = scmp.ne.s32.totalorder %s132, %s148
    %p150 = scmp.eq.s32.totalorder %s19, 0
    %p151 = por %p149, %p150
    %s152 = ssub.s32 %s20, %s32
    %p153 = scmp.eq.s32.totalorder %s152, 0
    %s155 = sadd.s32 %s154, 1
    %s156 = scalar_select %p153, %s154, %s155
    %p159 = pneg %p153
    %p160 = scmp.eq.s32.totalorder %s13, 1
    %p161 = por %p159, %p160
    %p162 = scmp.ne.s32.totalorder %s154, %s157
    %p163 = scmp.eq.s32.totalorder %s13, 0
    %p164 = por %p162, %p163
    %p165 = scmp.ne.s32.totalorder %s154, %s157
    %p166 = scmp.eq.s32.totalorder %s18, 1
    %p167 = por %p165, %p166
    %p168 = scmp.ne.s32.totalorder %s157, %s158
    %p169 = scmp.eq.s32.totalorder %s18, 0
    %p170 = por %p168, %p169
    %p171 = scmp.ne.s32.totalorder %s157, %s158
    %p172 = scmp.eq.s32.totalorder %s19, 1
    %p173 = por %p171, %p172
    %p175 = scmp.ne.s32.totalorder %s158, %s174
    %p176 = scmp.eq.s32.totalorder %s19, 0
    %p177 = por %p175, %p176
    %s178 = ssub.s32 %s20, %s32
    %p179 = scmp.eq.s32.totalorder %s178, 0
    %s181 = sadd.s32 %s180, 1
    %s182 = scalar_select %p179, %s180, %s181
    %p185 = pneg %p179
    %p186 = scmp.eq.s32.totalorder %s13, 1
    %p187 = por %p185, %p186
    %p188 = scmp.ne.s32.totalorder %s180, %s183
    %p189 = scmp.eq.s32.totalorder %s13, 0
    %p190 = por %p188, %p189
    %p191 = scmp.ne.s32.totalorder %s180, %s183
    %p192 = scmp.eq.s32.totalorder %s18, 1
    %p193 = por %p191, %p192
    %p194 = scmp.ne.s32.totalorder %s183, %s184
    %p195 = scmp.eq.s32.totalorder %s18, 0
    %p196 = por %p194, %p195
    %p197 = scmp.ne.s32.totalorder %s183, %s184
    %p198 = scmp.eq.s32.totalorder %s19, 1
    %p199 = por %p197, %p198
    %p201 = scmp.ne.s32.totalorder %s184, %s200
    %p202 = scmp.eq.s32.totalorder %s19, 0
    %p203 = por %p201, %p202
    %p204 = scmp.le.s32.totalorder 1, %s13
    %p205 = scmp.lt.s32.totalorder %s13, 3
    %p206 = pnand %p204, %p205
    %p207 = pneg %p206
    // Predicated region
    $region9: #{bottleneck_forward.6} parent=5 // pred_check
      _
    $region10: #{bottleneck_forward.6} parent=5 // pred_check_branch
      %209 = sbr.rel (%p206) target = $region12
    $region11: #{bottleneck_forward.6} parent=5 // pred_region
      %s210 = ssub.s32 %s13, 1
      // Predicated region
      $region13: #{bottleneck_forward.6} parent=11 // pred_check
        %p211 = pneg %p74
      $region14: #{bottleneck_forward.6} parent=11 // pred_check_branch
        %213 = sbr.rel (%p211) target = $region16
      $region15: #{bottleneck_forward.6} parent=11 // pred_region
        _
      $region16: #{bottleneck_forward.6} parent=11 // pred_fallthru
        _
      // Predicated region
      $region17: #{bottleneck_forward.6} parent=11 // pred_check
        %p214 = pneg %p95
      $region18: #{bottleneck_forward.6} parent=11 // pred_check_branch
        %216 = sbr.rel (%p214) target = $region20
      $region19: #{bottleneck_forward.6} parent=11 // pred_region
        _
      $region20: #{bottleneck_forward.6} parent=11 // pred_fallthru
        _
      // Predicated region
      $region21: #{bottleneck_forward.6} parent=11 // pred_check
        %p217 = pneg %p116
      $region22: #{bottleneck_forward.6} parent=11 // pred_check_branch
        %219 = sbr.rel (%p217) target = $region24
      $region23: #{bottleneck_forward.6} parent=11 // pred_region
        _
      $region24: #{bottleneck_forward.6} parent=11 // pred_fallthru
        _
    $region12: #{bottleneck_forward.6} parent=5 // pred_fallthru
      _
    %p220 = scmp.lt.s32.totalorder %s13, 2
    // Predicated region
    $region25: #{bottleneck_forward.6} parent=5 // pred_check
      %p221 = pneg %p220
    $region26: #{bottleneck_forward.6} parent=5 // pred_check_branch
      %223 = sbr.rel (%p221) target = $region28
    $region27: #{bottleneck_forward.6} parent=5 // pred_region
      // Predicated region
      $region29: #{bottleneck_forward.6} parent=27 // pred_check
        %p224 = pneg %p47
      $region30: #{bottleneck_forward.6} parent=27 // pred_check_branch
        %226 = sbr.rel (%p224) target = $region32
      $region31: #{bottleneck_forward.6} parent=27 // pred_region
        %s227 = smul.u32 16, %s21
        %p228 = scmp.lt.s32.totalorder %s20, 1
        %s229 = scalar_select %p228, %s20, 1
        %p230 = scmp.lt.s32.totalorder %s227, 15
        %s231 = scalar_select %p230, %s227, 15
        %s232 = smul.addr %s231, 2
        %s233 = smul.addr %s229, 32
        %s234 = sadd.s32 %s232, %s233
        %s235 = smul.addr %s234, 4
        %s236 = scalar_lea.vmem %s0, %s235
        %s237 = smul.u32 16, %s21
      $region32: #{bottleneck_forward.6} parent=27 // pred_fallthru
        _
    $region28: #{bottleneck_forward.6} parent=5 // pred_fallthru
      _
    %p238 = scmp.le.s32.totalorder 1, %s13
    %p239 = scmp.lt.s32.totalorder %s13, 3
    %p240 = pnand %p238, %p239
    %p241 = pneg %p240
    // Predicated region
    $region33: #{bottleneck_forward.6} parent=5 // pred_check
      _
    $region34: #{bottleneck_forward.6} parent=5 // pred_check_branch
      %243 = sbr.rel (%p240) target = $region36
    $region35: #{bottleneck_forward.6} parent=5 // pred_region
      %s244 = ssub.s32 %s13, 1
      %s245 = smul.u32 16, %s23
      %p246 = scmp.lt.s32.totalorder %s22, 1
      %s247 = scalar_select %p246, %s22, 1
      %p248 = scmp.lt.s32.totalorder %s245, 15
      %s249 = scalar_select %p248, %s245, 15
      %s250 = smul.addr %s249, 2
      %s251 = smul.addr %s247, 32
      %s252 = sadd.s32 %s250, %s251
      %s253 = smul.addr %s252, 4
      %s254 = scalar_lea.vmem %s0, %s253
      %p255 = pneg %p53
      %p256 = pneg %p50
      %p257 = pneg %p74
      %p258 = pneg %p71
      %p259 = pneg %p95
      %p260 = pneg %p92
      %p261 = pneg %p116
      %p262 = pneg %p113
      %p263 = pneg %p144
      %p264 = pneg %p141
      %s265 = smul.u32 16, %s23
      %p266 = scmp.lt.s32.totalorder %s22, 1
      %s267 = scalar_select %p266, %s22, 1
      %p268 = scmp.lt.s32.totalorder %s265, 15
      %s269 = scalar_select %p268, %s265, 15
      %s270 = smul.addr %s269, 2
      %s271 = smul.addr %s267, 32
      %s272 = sadd.s32 %s270, %s271
      %s273 = smul.addr %s272, 4
      %s274 = scalar_lea.vmem %s4, %s273
      %p275 = pneg %p170
      %p276 = pneg %p167
      %p277 = scmp.lt.s32.totalorder %s22, 1
      %s278 = scalar_select %p277, %s22, 1
      %s279 = scalar_lea.vmem %s5, %s278
      %p280 = pneg %p196
      %p281 = pneg %p193
      %p282 = scmp.lt.s32.totalorder %s22, 1
      %s283 = scalar_select %p282, %s22, 1
      %s284 = scalar_lea.vmem %s6, %s283
      %s285 = smul.u32 16, %s23
      %p286 = scmp.lt.s32.totalorder %s22, 1
      %s287 = scalar_select %p286, %s22, 1
      %p288 = scmp.lt.s32.totalorder %s285, 15
      %s289 = scalar_select %p288, %s285, 15
      %s290 = smul.addr %s289, 2
      %s291 = smul.addr %s287, 32
      %s292 = sadd.s32 %s290, %s291
      %s293 = smul.addr %s292, 4
      %s294 = scalar_lea.vmem %s0, %s293
      %s295 = smul.u32 16, %s23
      %s296 = smul.u32 16, %s23
      %p297 = scmp.lt.s32.totalorder %s22, 1
      %s298 = scalar_select %p297, %s22, 1
      %p299 = scmp.lt.s32.totalorder %s296, 15
      %s300 = scalar_select %p299, %s296, 15
      %s301 = smul.addr %s300, 2
      %s302 = smul.addr %s298, 32
      %s303 = sadd.s32 %s301, %s302
      %s304 = smul.addr %s303, 4
      %s305 = scalar_lea.vmem %s4, %s304
      %s306 = smul.u32 16, %s23
      %p307 = scmp.lt.s32.totalorder %s22, 1
      %s308 = scalar_select %p307, %s22, 1
      %s309 = scalar_lea.vmem %s5, %s308
      %p310 = scmp.lt.s32.totalorder %s22, 1
      %s311 = scalar_select %p310, %s22, 1
      %s312 = scalar_lea.vmem %s6, %s311
      %p314 = scmp.eq.s32.totalorder %s23, 0
      // Predicated region
      $region37: #{bottleneck_forward.6} parent=35 // pred_check
        %p315 = pneg %p314
      $region38: #{bottleneck_forward.6} parent=35 // pred_check_branch
        %317 = sbr.rel (%p315) target = $region40
      $region39: #{bottleneck_forward.6} parent=35 // pred_region
        %vm318 = vcmask 516096
        %319 = vst.msk [vmem:[%s309] sm:$0x1] %vm318, 0.0
        %320 = vst.msk [vmem:[%s312] sm:$0x1] %vm318, 0.0
      $region40: #{bottleneck_forward.6} parent=35 // pred_fallthru
        _
      %v321 = vld [vmem:[%s294] sm:$0xf]
      %v322 = vld [vmem:[%s294 + $0x4] sm:$0xf]
      %v323 = vld [vmem:[%s294 + $0x8] sm:$0xf]
      %v324 = vld [vmem:[%s294 + $0xc] sm:$0xf]
      %v325 = vld [vmem:[%s294 + $0x10] sm:$0xf]
      %v326 = vld [vmem:[%s294 + $0x14] sm:$0xf]
      %v327 = vld [vmem:[%s294 + $0x18] sm:$0xf]
      %v328 = vld [vmem:[%s294 + $0x1c] sm:$0xf]
      %v329 = vld [vmem:[%s294 + $0x20] sm:$0xf]
      %v330 = vld [vmem:[%s294 + $0x24] sm:$0xf]
      %v331 = vld [vmem:[%s294 + $0x28] sm:$0xf]
      %v332 = vld [vmem:[%s294 + $0x2c] sm:$0xf]
      %v333 = vld [vmem:[%s294 + $0x30] sm:$0xf]
      %v334 = vld [vmem:[%s294 + $0x34] sm:$0xf]
      %v335 = vld [vmem:[%s294 + $0x38] sm:$0xf]
      %v336 = vld [vmem:[%s294 + $0x3c] sm:$0xf]
      %v337 = vld [vmem:[%s294 + $0x40] sm:$0xf]
      %v338 = vld [vmem:[%s294 + $0x44] sm:$0xf]
      %v339 = vld [vmem:[%s294 + $0x48] sm:$0xf]
      %v340 = vld [vmem:[%s294 + $0x4c] sm:$0xf]
      %v341 = vld [vmem:[%s294 + $0x50] sm:$0xf]
      %v342 = vld [vmem:[%s294 + $0x54] sm:$0xf]
      %v343 = vld [vmem:[%s294 + $0x58] sm:$0xf]
      %v344 = vld [vmem:[%s294 + $0x5c] sm:$0xf]
      %v345 = vld [vmem:[%s294 + $0x60] sm:$0xf]
      %v346 = vld [vmem:[%s294 + $0x64] sm:$0xf]
      %v347 = vld [vmem:[%s294 + $0x68] sm:$0xf]
      %v348 = vld [vmem:[%s294 + $0x6c] sm:$0xf]
      %v349 = vld [vmem:[%s294 + $0x70] sm:$0xf]
      %v350 = vld [vmem:[%s294 + $0x74] sm:$0xf]
      %v351 = vld [vmem:[%s294 + $0x78] sm:$0xf]
      %v352 = vld [vmem:[%s294 + $0x7c] sm:$0xf]
      %v353 = vunpack.c.l.bf16 %v321
      %v354 = vunpack.c.l.bf16 %v322
      %v355 = vunpack.c.l.bf16 %v323
      %v356 = vunpack.c.l.bf16 %v324
      %v357 = vunpack.c.l.bf16 %v325
      %v358 = vunpack.c.l.bf16 %v326
      %v359 = vunpack.c.l.bf16 %v327
      %v360 = vunpack.c.l.bf16 %v328
      %v361 = vunpack.c.l.bf16 %v329
      %v362 = vunpack.c.l.bf16 %v330
      %v363 = vunpack.c.l.bf16 %v331
      %v364 = vunpack.c.l.bf16 %v332
      %v365 = vunpack.c.l.bf16 %v333
      %v366 = vunpack.c.l.bf16 %v334
      %v367 = vunpack.c.l.bf16 %v335
      %v368 = vunpack.c.l.bf16 %v336
      %v369 = vunpack.c.l.bf16 %v337
      %v370 = vunpack.c.l.bf16 %v338
      %v371 = vunpack.c.l.bf16 %v339
      %v372 = vunpack.c.l.bf16 %v340
      %v373 = vunpack.c.l.bf16 %v341
      %v374 = vunpack.c.l.bf16 %v342
      %v375 = vunpack.c.l.bf16 %v343
      %v376 = vunpack.c.l.bf16 %v344
      %v377 = vunpack.c.l.bf16 %v345
      %v378 = vunpack.c.l.bf16 %v346
      %v379 = vunpack.c.l.bf16 %v347
      %v380 = vunpack.c.l.bf16 %v348
      %v381 = vunpack.c.l.bf16 %v349
      %v382 = vunpack.c.l.bf16 %v350
      %v383 = vunpack.c.l.bf16 %v351
      %v384 = vunpack.c.l.bf16 %v352
      %v385 = vld [vmem:[%s1] sm:$0x1]
      %v387 = vperm.slane %v385, 0
      %v389 = vmul.f32 %v353, %v387
      %v390 = vmul.f32 %v354, %v387
      %v391 = vmul.f32 %v355, %v387
      %v392 = vmul.f32 %v356, %v387
      %v393 = vmul.f32 %v357, %v387
      %v394 = vmul.f32 %v358, %v387
      %v395 = vmul.f32 %v359, %v387
      %v396 = vmul.f32 %v360, %v387
      %v397 = vmul.f32 %v361, %v387
      %v398 = vmul.f32 %v362, %v387
      %v399 = vmul.f32 %v363, %v387
      %v400 = vmul.f32 %v364, %v387
      %v401 = vmul.f32 %v365, %v387
      %v402 = vmul.f32 %v366, %v387
      %v403 = vmul.f32 %v367, %v387
      %v404 = vmul.f32 %v368, %v387
      %v405 = vmul.f32 %v369, %v387
      %v406 = vmul.f32 %v370, %v387
      %v407 = vmul.f32 %v371, %v387
      %v408 = vmul.f32 %v372, %v387
      %v409 = vmul.f32 %v373, %v387
      %v410 = vmul.f32 %v374, %v387
      %v411 = vmul.f32 %v375, %v387
      %v412 = vmul.f32 %v376, %v387
      %v413 = vmul.f32 %v377, %v387
      %v414 = vmul.f32 %v378, %v387
      %v415 = vmul.f32 %v379, %v387
      %v416 = vmul.f32 %v380, %v387
      %v417 = vmul.f32 %v381, %v387
      %v418 = vmul.f32 %v382, %v387
      %v419 = vmul.f32 %v383, %v387
      %v420 = vmul.f32 %v384, %v387
      %v421 = vld [vmem:[%s2] sm:$0x1]
      %v423 = vperm.slane %v421, 0
      %v425 = vadd.f32 %v389, %v423
      %v426 = vadd.f32 %v390, %v423
      %v427 = vadd.f32 %v391, %v423
      %v428 = vadd.f32 %v392, %v423
      %v429 = vadd.f32 %v393, %v423
      %v430 = vadd.f32 %v394, %v423
      %v431 = vadd.f32 %v395, %v423
      %v432 = vadd.f32 %v396, %v423
      %v433 = vadd.f32 %v397, %v423
      %v434 = vadd.f32 %v398, %v423
      %v435 = vadd.f32 %v399, %v423
      %v436 = vadd.f32 %v400, %v423
      %v437 = vadd.f32 %v401, %v423
      %v438 = vadd.f32 %v402, %v423
      %v439 = vadd.f32 %v403, %v423
      %v440 = vadd.f32 %v404, %v423
      %v441 = vadd.f32 %v405, %v423
      %v442 = vadd.f32 %v406, %v423
      %v443 = vadd.f32 %v407, %v423
      %v444 = vadd.f32 %v408, %v423
      %v445 = vadd.f32 %v409, %v423
      %v446 = vadd.f32 %v410, %v423
      %v447 = vadd.f32 %v411, %v423
      %v448 = vadd.f32 %v412, %v423
      %v449 = vadd.f32 %v413, %v423
      %v450 = vadd.f32 %v414, %v423
      %v451 = vadd.f32 %v415, %v423
      %v452 = vadd.f32 %v416, %v423
      %v453 = vadd.f32 %v417, %v423
      %v454 = vadd.f32 %v418, %v423
      %v455 = vadd.f32 %v419, %v423
      %v456 = vadd.f32 %v420, %v423
      %v457 = vmax.f32 %v425, 0.0
      %v458 = vmax.f32 %v426, 0.0
      %v459 = vmax.f32 %v427, 0.0
      %v460 = vmax.f32 %v428, 0.0
      %v461 = vmax.f32 %v429, 0.0
      %v462 = vmax.f32 %v430, 0.0
      %v463 = vmax.f32 %v431, 0.0
      %v464 = vmax.f32 %v432, 0.0
      %v465 = vmax.f32 %v433, 0.0
      %v466 = vmax.f32 %v434, 0.0
      %v467 = vmax.f32 %v435, 0.0
      %v468 = vmax.f32 %v436, 0.0
      %v469 = vmax.f32 %v437, 0.0
      %v470 = vmax.f32 %v438, 0.0
      %v471 = vmax.f32 %v439, 0.0
      %v472 = vmax.f32 %v440, 0.0
      %v473 = vmax.f32 %v441, 0.0
      %v474 = vmax.f32 %v442, 0.0
      %v475 = vmax.f32 %v443, 0.0
      %v476 = vmax.f32 %v444, 0.0
      %v477 = vmax.f32 %v445, 0.0
      %v478 = vmax.f32 %v446, 0.0
      %v479 = vmax.f32 %v447, 0.0
      %v480 = vmax.f32 %v448, 0.0
      %v481 = vmax.f32 %v449, 0.0
      %v482 = vmax.f32 %v450, 0.0
      %v483 = vmax.f32 %v451, 0.0
      %v484 = vmax.f32 %v452, 0.0
      %v485 = vmax.f32 %v453, 0.0
      %v486 = vmax.f32 %v454, 0.0
      %v487 = vmax.f32 %v455, 0.0
      %v488 = vmax.f32 %v456, 0.0
      %v489 = vpack.c.bf16 %v458, %v457
      %v490 = vpack.c.bf16 %v460, %v459
      %v491 = vpack.c.bf16 %v462, %v461
      %v492 = vpack.c.bf16 %v464, %v463
      %v493 = vpack.c.bf16 %v466, %v465
      %v494 = vpack.c.bf16 %v468, %v467
      %v495 = vpack.c.bf16 %v470, %v469
      %v496 = vpack.c.bf16 %v472, %v471
      %v497 = vpack.c.bf16 %v474, %v473
      %v498 = vpack.c.bf16 %v476, %v475
      %v499 = vpack.c.bf16 %v478, %v477
      %v500 = vpack.c.bf16 %v480, %v479
      %v501 = vpack.c.bf16 %v482, %v481
      %v502 = vpack.c.bf16 %v484, %v483
      %v503 = vpack.c.bf16 %v486, %v485
      %v504 = vpack.c.bf16 %v488, %v487
      %v505 = vld [vmem:[%s3] sm:$0xf]
      %v506 = vld [vmem:[%s3 + $0x4] sm:$0xf]
      %v509 = vunpack.c.l.b16 %v505
      %v510 = vunpack.c.l.b16 %v506
      %v511 = vpack.c.b16 %v510, %v509
      %vm513 = vcmask 130048
      %v515 = vsel %vm513, %v489, 0
      %v518 = vsel %vm513, %v490, 0
      %v521 = vsel %vm513, %v491, 0
      %v524 = vsel %vm513, %v492, 0
      %v527 = vsel %vm513, %v493, 0
      %v530 = vsel %vm513, %v494, 0
      %v533 = vsel %vm513, %v495, 0
      %v536 = vsel %vm513, %v496, 0
      %v539 = vsel %vm513, %v497, 0
      %v542 = vsel %vm513, %v498, 0
      %v545 = vsel %vm513, %v499, 0
      %v548 = vsel %vm513, %v500, 0
      %v551 = vsel %vm513, %v501, 0
      %v554 = vsel %vm513, %v502, 0
      %v557 = vsel %vm513, %v503, 0
      %v560 = vsel %vm513, %v504, 0
      %562 = vmatpush.bf16.msra.mxu0 0
      %563 = vmatpush.bf16.msra.mxu0 0
      %564 = vmatpush.bf16.msra.mxu0 0
      %565 = vmatpush.bf16.msra.mxu0 0
      %566 = vmatpush.bf16.msra.mxu0 0
      %567 = vmatpush.bf16.msra.mxu0 0
      %568 = vmatpush.bf16.msra.mxu0 0
      %569 = vmatpush.bf16.msra.mxu0 %v511
      %570 = vmatmul.bf16.gmra.mxu0 %v515
      %v571 = vpop.f32.mrf.mxu0
      %v572 = vadd.f32 0.0, %v571
      %v573 = vpop.f32.mrf.mxu0
      %v574 = vadd.f32 0.0, %v573
      %575 = vmatmul.bf16.gmra.mxu0 %v518
      %v576 = vpop.f32.mrf.mxu0
      %v577 = vadd.f32 0.0, %v576
      %v578 = vpop.f32.mrf.mxu0
      %v579 = vadd.f32 0.0, %v578
      %580 = vmatmul.bf16.gmra.mxu0 %v521
      %v581 = vpop.f32.mrf.mxu0
      %v582 = vadd.f32 0.0, %v581
      %v583 = vpop.f32.mrf.mxu0
      %v584 = vadd.f32 0.0, %v583
      %585 = vmatmul.bf16.gmra.mxu0 %v524
      %v586 = vpop.f32.mrf.mxu0
      %v587 = vadd.f32 0.0, %v586
      %v588 = vpop.f32.mrf.mxu0
      %v589 = vadd.f32 0.0, %v588
      %590 = vmatmul.bf16.gmra.mxu0 %v527
      %v591 = vpop.f32.mrf.mxu0
      %v592 = vadd.f32 0.0, %v591
      %v593 = vpop.f32.mrf.mxu0
      %v594 = vadd.f32 0.0, %v593
      %595 = vmatmul.bf16.gmra.mxu0 %v530
      %v596 = vpop.f32.mrf.mxu0
      %v597 = vadd.f32 0.0, %v596
      %v598 = vpop.f32.mrf.mxu0
      %v599 = vadd.f32 0.0, %v598
      %600 = vmatmul.bf16.gmra.mxu0 %v533
      %v601 = vpop.f32.mrf.mxu0
      %v602 = vadd.f32 0.0, %v601
      %v603 = vpop.f32.mrf.mxu0
      %v604 = vadd.f32 0.0, %v603
      %605 = vmatmul.bf16.gmra.mxu0 %v536
      %v606 = vpop.f32.mrf.mxu0
      %v607 = vadd.f32 0.0, %v606
      %v608 = vpop.f32.mrf.mxu0
      %v609 = vadd.f32 0.0, %v608
      %610 = vmatmul.bf16.gmra.mxu0 %v539
      %v611 = vpop.f32.mrf.mxu0
      %v612 = vadd.f32 0.0, %v611
      %v613 = vpop.f32.mrf.mxu0
      %v614 = vadd.f32 0.0, %v613
      %615 = vmatmul.bf16.gmra.mxu0 %v542
      %v616 = vpop.f32.mrf.mxu0
      %v617 = vadd.f32 0.0, %v616
      %v618 = vpop.f32.mrf.mxu0
      %v619 = vadd.f32 0.0, %v618
      %620 = vmatmul.bf16.gmra.mxu0 %v545
      %v621 = vpop.f32.mrf.mxu0
      %v622 = vadd.f32 0.0, %v621
      %v623 = vpop.f32.mrf.mxu0
      %v624 = vadd.f32 0.0, %v623
      %625 = vmatmul.bf16.gmra.mxu0 %v548
      %v626 = vpop.f32.mrf.mxu0
      %v627 = vadd.f32 0.0, %v626
      %v628 = vpop.f32.mrf.mxu0
      %v629 = vadd.f32 0.0, %v628
      %630 = vmatmul.bf16.gmra.mxu0 %v551
      %v631 = vpop.f32.mrf.mxu0
      %v632 = vadd.f32 0.0, %v631
      %v633 = vpop.f32.mrf.mxu0
      %v634 = vadd.f32 0.0, %v633
      %635 = vmatmul.bf16.gmra.mxu0 %v554
      %v636 = vpop.f32.mrf.mxu0
      %v637 = vadd.f32 0.0, %v636
      %v638 = vpop.f32.mrf.mxu0
      %v639 = vadd.f32 0.0, %v638
      %640 = vmatmul.bf16.gmra.mxu0 %v557
      %v641 = vpop.f32.mrf.mxu0
      %v642 = vadd.f32 0.0, %v641
      %v643 = vpop.f32.mrf.mxu0
      %v644 = vadd.f32 0.0, %v643
      %645 = vmatmul.bf16.gmra.mxu0 %v560
      %v646 = vpop.f32.mrf.mxu0
      %v647 = vadd.f32 0.0, %v646
      %v648 = vpop.f32.mrf.mxu0
      %v649 = vadd.f32 0.0, %v648
      %650 = vdwg.mxu0
      %v651 = vpack.c.bf16 %v572, %v572
      %v652 = vpack.c.bf16 %v574, %v574
      %v653 = vpack.c.bf16 %v577, %v577
      %v654 = vpack.c.bf16 %v579, %v579
      %v655 = vpack.c.bf16 %v582, %v582
      %v656 = vpack.c.bf16 %v584, %v584
      %v657 = vpack.c.bf16 %v587, %v587
      %v658 = vpack.c.bf16 %v589, %v589
      %v659 = vpack.c.bf16 %v592, %v592
      %v660 = vpack.c.bf16 %v594, %v594
      %v661 = vpack.c.bf16 %v597, %v597
      %v662 = vpack.c.bf16 %v599, %v599
      %v663 = vpack.c.bf16 %v602, %v602
      %v664 = vpack.c.bf16 %v604, %v604
      %v665 = vpack.c.bf16 %v607, %v607
      %v666 = vpack.c.bf16 %v609, %v609
      %v667 = vpack.c.bf16 %v612, %v612
      %v668 = vpack.c.bf16 %v614, %v614
      %v669 = vpack.c.bf16 %v617, %v617
      %v670 = vpack.c.bf16 %v619, %v619
      %v671 = vpack.c.bf16 %v622, %v622
      %v672 = vpack.c.bf16 %v624, %v624
      %v673 = vpack.c.bf16 %v627, %v627
      %v674 = vpack.c.bf16 %v629, %v629
      %v675 = vpack.c.bf16 %v632, %v632
      %v676 = vpack.c.bf16 %v634, %v634
      %v677 = vpack.c.bf16 %v637, %v637
      %v678 = vpack.c.bf16 %v639, %v639
      %v679 = vpack.c.bf16 %v642, %v642
      %v680 = vpack.c.bf16 %v644, %v644
      %v681 = vpack.c.bf16 %v647, %v647
      %v682 = vpack.c.bf16 %v649, %v649
      %vm683 = vcmask 519168
      %684 = vst.msk [vmem:[%s305] sm:$0xf] %vm683, %v651
      %685 = vst.msk [vmem:[%s305 + $0x4] sm:$0xf] %vm683, %v652
      %686 = vst.msk [vmem:[%s305 + $0x8] sm:$0xf] %vm683, %v653
      %687 = vst.msk [vmem:[%s305 + $0xc] sm:$0xf] %vm683, %v654
      %688 = vst.msk [vmem:[%s305 + $0x10] sm:$0xf] %vm683, %v655
      %689 = vst.msk [vmem:[%s305 + $0x14] sm:$0xf] %vm683, %v656
      %690 = vst.msk [vmem:[%s305 + $0x18] sm:$0xf] %vm683, %v657
      %691 = vst.msk [vmem:[%s305 + $0x1c] sm:$0xf] %vm683, %v658
      %692 = vst.msk [vmem:[%s305 + $0x20] sm:$0xf] %vm683, %v659
      %693 = vst.msk [vmem:[%s305 + $0x24] sm:$0xf] %vm683, %v660
      %694 = vst.msk [vmem:[%s305 + $0x28] sm:$0xf] %vm683, %v661
      %695 = vst.msk [vmem:[%s305 + $0x2c] sm:$0xf] %vm683, %v662
      %696 = vst.msk [vmem:[%s305 + $0x30] sm:$0xf] %vm683, %v663
      %697 = vst.msk [vmem:[%s305 + $0x34] sm:$0xf] %vm683, %v664
      %698 = vst.msk [vmem:[%s305 + $0x38] sm:$0xf] %vm683, %v665
      %699 = vst.msk [vmem:[%s305 + $0x3c] sm:$0xf] %vm683, %v666
      %700 = vst.msk [vmem:[%s305 + $0x40] sm:$0xf] %vm683, %v667
      %701 = vst.msk [vmem:[%s305 + $0x44] sm:$0xf] %vm683, %v668
      %702 = vst.msk [vmem:[%s305 + $0x48] sm:$0xf] %vm683, %v669
      %703 = vst.msk [vmem:[%s305 + $0x4c] sm:$0xf] %vm683, %v670
      %704 = vst.msk [vmem:[%s305 + $0x50] sm:$0xf] %vm683, %v671
      %705 = vst.msk [vmem:[%s305 + $0x54] sm:$0xf] %vm683, %v672
      %706 = vst.msk [vmem:[%s305 + $0x58] sm:$0xf] %vm683, %v673
      %707 = vst.msk [vmem:[%s305 + $0x5c] sm:$0xf] %vm683, %v674
      %708 = vst.msk [vmem:[%s305 + $0x60] sm:$0xf] %vm683, %v675
      %709 = vst.msk [vmem:[%s305 + $0x64] sm:$0xf] %vm683, %v676
      %710 = vst.msk [vmem:[%s305 + $0x68] sm:$0xf] %vm683, %v677
      %711 = vst.msk [vmem:[%s305 + $0x6c] sm:$0xf] %vm683, %v678
      %712 = vst.msk [vmem:[%s305 + $0x70] sm:$0xf] %vm683, %v679
      %713 = vst.msk [vmem:[%s305 + $0x74] sm:$0xf] %vm683, %v680
      %714 = vst.msk [vmem:[%s305 + $0x78] sm:$0xf] %vm683, %v681
      %715 = vst.msk [vmem:[%s305 + $0x7c] sm:$0xf] %vm683, %v682
      %v716 = vld [vmem:[%s309] sm:$0x1]
      %vm717 = vcmask 523264
      %v718 = vsel %vm717, %v572, 0.0
      %v719 = vsel %vm717, %v574, 0.0
      %v720 = vadd.f32 %v718, %v719
      %v721 = vsel %vm717, %v577, 0.0
      %v722 = vadd.f32 %v720, %v721
      %v723 = vsel %vm717, %v579, 0.0
      %v724 = vadd.f32 %v722, %v723
      %v725 = vsel %vm717, %v582, 0.0
      %v726 = vadd.f32 %v724, %v725
      %v727 = vsel %vm717, %v584, 0.0
      %v728 = vadd.f32 %v726, %v727
      %v729 = vsel %vm717, %v587, 0.0
      %v730 = vadd.f32 %v728, %v729
      %v731 = vsel %vm717, %v589, 0.0
      %v732 = vadd.f32 %v730, %v731
      %v733 = vsel %vm717, %v592, 0.0
      %v734 = vadd.f32 %v732, %v733
      %v735 = vsel %vm717, %v594, 0.0
      %v736 = vadd.f32 %v734, %v735
      %v737 = vsel %vm717, %v597, 0.0
      %v738 = vadd.f32 %v736, %v737
      %v739 = vsel %vm717, %v599, 0.0
      %v740 = vadd.f32 %v738, %v739
      %v741 = vsel %vm717, %v602, 0.0
      %v742 = vadd.f32 %v740, %v741
      %v743 = vsel %vm717, %v604, 0.0
      %v744 = vadd.f32 %v742, %v743
      %v745 = vsel %vm717, %v607, 0.0
      %v746 = vadd.f32 %v744, %v745
      %v747 = vsel %vm717, %v609, 0.0
      %v748 = vadd.f32 %v746, %v747
      %v749 = vsel %vm717, %v612, 0.0
      %v750 = vadd.f32 %v748, %v749
      %v751 = vsel %vm717, %v614, 0.0
      %v752 = vadd.f32 %v750, %v751
      %v753 = vsel %vm717, %v617, 0.0
      %v754 = vadd.f32 %v752, %v753
      %v755 = vsel %vm717, %v619, 0.0
      %v756 = vadd.f32 %v754, %v755
      %v757 = vsel %vm717, %v622, 0.0
      %v758 = vadd.f32 %v756, %v757
      %v759 = vsel %vm717, %v624, 0.0
      %v760 = vadd.f32 %v758, %v759
      %v761 = vsel %vm717, %v627, 0.0
      %v762 = vadd.f32 %v760, %v761
      %v763 = vsel %vm717, %v629, 0.0
      %v764 = vadd.f32 %v762, %v763
      %v765 = vsel %vm717, %v632, 0.0
      %v766 = vadd.f32 %v764, %v765
      %v767 = vsel %vm717, %v634, 0.0
      %v768 = vadd.f32 %v766, %v767
      %v769 = vsel %vm717, %v637, 0.0
      %v770 = vadd.f32 %v768, %v769
      %v771 = vsel %vm717, %v639, 0.0
      %v772 = vadd.f32 %v770, %v771
      %v773 = vsel %vm717, %v642, 0.0
      %v774 = vadd.f32 %v772, %v773
      %v775 = vsel %vm717, %v644, 0.0
      %v776 = vadd.f32 %v774, %v775
      %v777 = vsel %vm717, %v647, 0.0
      %v778 = vadd.f32 %v776, %v777
      %v779 = vsel %vm717, %v649, 0.0
      %v780 = vadd.f32 %v778, %v779
      %v781 = vrot.slane %v780, 4
      %v782 = vadd.f32 %v780, %v781
      %v783 = vrot.slane %v782, 2
      %v784 = vadd.f32 %v782, %v783
      %v785 = vrot.slane %v784, 1
      %v786 = vadd.f32 %v784, %v785
      %v787 = vadd.f32 %v716, %v786
      %vm788 = vcmask 516096
      %789 = vst.msk [vmem:[%s309] sm:$0x1] %vm788, %v787
      %v790 = vld [vmem:[%s312] sm:$0x1]
      %v791 = vmul.f32 %v572, %v572
      %v792 = vmul.f32 %v574, %v574
      %v793 = vmul.f32 %v577, %v577
      %v794 = vmul.f32 %v579, %v579
      %v795 = vmul.f32 %v582, %v582
      %v796 = vmul.f32 %v584, %v584
      %v797 = vmul.f32 %v587, %v587
      %v798 = vmul.f32 %v589, %v589
      %v799 = vmul.f32 %v592, %v592
      %v800 = vmul.f32 %v594, %v594
      %v801 = vmul.f32 %v597, %v597
      %v802 = vmul.f32 %v599, %v599
      %v803 = vmul.f32 %v602, %v602
      %v804 = vmul.f32 %v604, %v604
      %v805 = vmul.f32 %v607, %v607
      %v806 = vmul.f32 %v609, %v609
      %v807 = vmul.f32 %v612, %v612
      %v808 = vmul.f32 %v614, %v614
      %v809 = vmul.f32 %v617, %v617
      %v810 = vmul.f32 %v619, %v619
      %v811 = vmul.f32 %v622, %v622
      %v812 = vmul.f32 %v624, %v624
      %v813 = vmul.f32 %v627, %v627
      %v814 = vmul.f32 %v629, %v629
      %v815 = vmul.f32 %v632, %v632
      %v816 = vmul.f32 %v634, %v634
      %v817 = vmul.f32 %v637, %v637
      %v818 = vmul.f32 %v639, %v639
      %v819 = vmul.f32 %v642, %v642
      %v820 = vmul.f32 %v644, %v644
      %v821 = vmul.f32 %v647, %v647
      %v822 = vmul.f32 %v649, %v649
      %v823 = vsel %vm717, %v791, 0.0
      %v824 = vsel %vm717, %v792, 0.0
      %v825 = vadd.f32 %v823, %v824
      %v826 = vsel %vm717, %v793, 0.0
      %v827 = vadd.f32 %v825, %v826
      %v828 = vsel %vm717, %v794, 0.0
      %v829 = vadd.f32 %v827, %v828
      %v830 = vsel %vm717, %v795, 0.0
      %v831 = vadd.f32 %v829, %v830
      %v832 = vsel %vm717, %v796, 0.0
      %v833 = vadd.f32 %v831, %v832
      %v834 = vsel %vm717, %v797, 0.0
      %v835 = vadd.f32 %v833, %v834
      %v836 = vsel %vm717, %v798, 0.0
      %v837 = vadd.f32 %v835, %v836
      %v838 = vsel %vm717, %v799, 0.0
      %v839 = vadd.f32 %v837, %v838
      %v840 = vsel %vm717, %v800, 0.0
      %v841 = vadd.f32 %v839, %v840
      %v842 = vsel %vm717, %v801, 0.0
      %v843 = vadd.f32 %v841, %v842
      %v844 = vsel %vm717, %v802, 0.0
      %v845 = vadd.f32 %v843, %v844
      %v846 = vsel %vm717, %v803, 0.0
      %v847 = vadd.f32 %v845, %v846
      %v848 = vsel %vm717, %v804, 0.0
      %v849 = vadd.f32 %v847, %v848
      %v850 = vsel %vm717, %v805, 0.0
      %v851 = vadd.f32 %v849, %v850
      %v852 = vsel %vm717, %v806, 0.0
      %v853 = vadd.f32 %v851, %v852
      %v854 = vsel %vm717, %v807, 0.0
      %v855 = vadd.f32 %v853, %v854
      %v856 = vsel %vm717, %v808, 0.0
      %v857 = vadd.f32 %v855, %v856
      %v858 = vsel %vm717, %v809, 0.0
      %v859 = vadd.f32 %v857, %v858
      %v860 = vsel %vm717, %v810, 0.0
      %v861 = vadd.f32 %v859, %v860
      %v862 = vsel %vm717, %v811, 0.0
      %v863 = vadd.f32 %v861, %v862
      %v864 = vsel %vm717, %v812, 0.0
      %v865 = vadd.f32 %v863, %v864
      %v866 = vsel %vm717, %v813, 0.0
      %v867 = vadd.f32 %v865, %v866
      %v868 = vsel %vm717, %v814, 0.0
      %v869 = vadd.f32 %v867, %v868
      %v870 = vsel %vm717, %v815, 0.0
      %v871 = vadd.f32 %v869, %v870
      %v872 = vsel %vm717, %v816, 0.0
      %v873 = vadd.f32 %v871, %v872
      %v874 = vsel %vm717, %v817, 0.0
      %v875 = vadd.f32 %v873, %v874
      %v876 = vsel %vm717, %v818, 0.0
      %v877 = vadd.f32 %v875, %v876
      %v878 = vsel %vm717, %v819, 0.0
      %v879 = vadd.f32 %v877, %v878
      %v880 = vsel %vm717, %v820, 0.0
      %v881 = vadd.f32 %v879, %v880
      %v882 = vsel %vm717, %v821, 0.0
      %v883 = vadd.f32 %v881, %v882
      %v884 = vsel %vm717, %v822, 0.0
      %v885 = vadd.f32 %v883, %v884
      %v886 = vrot.slane %v885, 4
      %v887 = vadd.f32 %v885, %v886
      %v888 = vrot.slane %v887, 2
      %v889 = vadd.f32 %v887, %v888
      %v890 = vrot.slane %v889, 1
      %v891 = vadd.f32 %v889, %v890
      %v892 = vadd.f32 %v790, %v891
      %893 = vst.msk [vmem:[%s312] sm:$0x1] %vm788, %v892
      %s894 = smul.u32 16, %s23
      %p895 = scmp.lt.s32.totalorder %s22, 1
      %s896 = scalar_select %p895, %s22, 1
      %p897 = scmp.lt.s32.totalorder %s894, 15
      %s898 = scalar_select %p897, %s894, 15
      %s899 = smul.addr %s898, 2
      %s900 = smul.addr %s896, 32
      %s901 = sadd.s32 %s899, %s900
      %s902 = smul.addr %s901, 4
      %s903 = scalar_lea.vmem %s4, %s902
      %p904 = scmp.lt.s32.totalorder %s22, 1
      %s905 = scalar_select %p904, %s22, 1
      %s906 = scalar_lea.vmem %s5, %s905
      %p907 = scmp.lt.s32.totalorder %s22, 1
      %s908 = scalar_select %p907, %s22, 1
      %s909 = scalar_lea.vmem %s6, %s908
      // Predicated region
      $region41: #{bottleneck_forward.6} parent=35 // pred_check
        %p910 = pneg %p141
      $region42: #{bottleneck_forward.6} parent=35 // pred_check_branch
        %912 = sbr.rel (%p910) target = $region44
      $region43: #{bottleneck_forward.6} parent=35 // pred_region
        %s913 = smul.u32 16, %s23
      $region44: #{bottleneck_forward.6} parent=35 // pred_fallthru
        _
      // Predicated region
      $region45: #{bottleneck_forward.6} parent=35 // pred_check
        %p914 = pneg %p167
      $region46: #{bottleneck_forward.6} parent=35 // pred_check_branch
        %916 = sbr.rel (%p914) target = $region48
      $region47: #{bottleneck_forward.6} parent=35 // pred_region
        _
      $region48: #{bottleneck_forward.6} parent=35 // pred_fallthru
        _
      // Predicated region
      $region49: #{bottleneck_forward.6} parent=35 // pred_check
        %p917 = pneg %p193
      $region50: #{bottleneck_forward.6} parent=35 // pred_check_branch
        %919 = sbr.rel (%p917) target = $region52
      $region51: #{bottleneck_forward.6} parent=35 // pred_region
        _
      $region52: #{bottleneck_forward.6} parent=35 // pred_fallthru
        _
    $region36: #{bottleneck_forward.6} parent=5 // pred_fallthru
      _
    %p920 = scmp.le.s32.totalorder 2, %s13
    // Predicated region
    $region53: #{bottleneck_forward.6} parent=5 // pred_check
      %p921 = pneg %p920
    $region54: #{bottleneck_forward.6} parent=5 // pred_check_branch
      %923 = sbr.rel (%p921) target = $region56
    $region55: #{bottleneck_forward.6} parent=5 // pred_region
      %s924 = ssub.s32 %s13, 2
      // Predicated region
      $region57: #{bottleneck_forward.6} parent=55 // pred_check
        %p925 = pneg %p147
      $region58: #{bottleneck_forward.6} parent=55 // pred_check_branch
        %927 = sbr.rel (%p925) target = $region60
      $region59: #{bottleneck_forward.6} parent=55 // pred_region
        %s928 = smul.u32 16, %s25
        %p929 = scmp.lt.s32.totalorder %s24, 1
        %s930 = scalar_select %p929, %s24, 1
        %p931 = scmp.lt.s32.totalorder %s928, 15
        %s932 = scalar_select %p931, %s928, 15
        %s933 = smul.addr %s932, 2
        %s934 = smul.addr %s930, 32
        %s935 = sadd.s32 %s933, %s934
        %s936 = smul.addr %s935, 4
        %s937 = scalar_lea.vmem %s4, %s936
      $region60: #{bottleneck_forward.6} parent=55 // pred_fallthru
        _
      // Predicated region
      $region61: #{bottleneck_forward.6} parent=55 // pred_check
        %p938 = pneg %p173
      $region62: #{bottleneck_forward.6} parent=55 // pred_check_branch
        %940 = sbr.rel (%p938) target = $region64
      $region63: #{bottleneck_forward.6} parent=55 // pred_region
        %p941 = scmp.lt.s32.totalorder %s24, 1
        %s942 = scalar_select %p941, %s24, 1
        %s943 = scalar_lea.vmem %s5, %s942
      $region64: #{bottleneck_forward.6} parent=55 // pred_fallthru
        _
      // Predicated region
      $region65: #{bottleneck_forward.6} parent=55 // pred_check
        %p944 = pneg %p199
      $region66: #{bottleneck_forward.6} parent=55 // pred_check_branch
        %946 = sbr.rel (%p944) target = $region68
      $region67: #{bottleneck_forward.6} parent=55 // pred_region
        %p947 = scmp.lt.s32.totalorder %s24, 1
        %s948 = scalar_select %p947, %s24, 1
        %s949 = scalar_lea.vmem %s6, %s948
      $region68: #{bottleneck_forward.6} parent=55 // pred_fallthru
        _
    $region56: #{bottleneck_forward.6} parent=5 // pred_fallthru
      _
  $region6: #{bottleneck_forward.6} parent=0 // loop_footer
    %s17 = sadd.s32 1, %s13
  $region7: #{bottleneck_forward.6} parent=0 // loop_footer_branch
    %12 = sbr.rel target = $region3
  $region8: #{bottleneck_forward.6} parent=0 // loop_exit
    _

// kernel: bottleneck_forward.5
$region0: #{bottleneck_forward.5}
  #allocation0 [shape = 'u32[]', space=smem, size = 0x4, offset = 0x4, fixed_abs, tag = 'smem constant byte address 0x4 - core index']
  #allocation1 [shape = 'u32[72,128]{1,0:T(1,128)}', space=vmem, size = 0x9000, scoped, tag = 'internal scratch']
  %s0 = inlined_call_operand.vmem [shape: bf16[2,16,16,16], index: 0, kind: input, shape index: {}, may-alias: {0,1,2}]
  %s1 = inlined_call_operand.vmem [shape: bf16[2,16,16,16], index: 1, kind: input, shape index: {}, may-alias: {0,1,2}]
  %s2 = inlined_call_operand.vmem [shape: bf16[2,16,16,16], index: 2, kind: input, shape index: {}, may-alias: {0,1,2}]
  %s3 = inlined_call_operand.vmem [shape: f32[1,16], index: 3, kind: input, shape index: {}]
  %s4 = inlined_call_operand.vmem [shape: f32[1,16], index: 4, kind: input, shape index: {}]
  %s5 = inlined_call_operand.vmem [shape: bf16[9,16,16], index: 5, kind: input, shape index: {}]
  %s6 = inlined_call_operand.vmem [shape: bf16[2,16,16,16], index: 6, kind: output, shape index: {0}]
  %s7 = inlined_call_operand.vmem [shape: f32[2,1,16], index: 7, kind: output, shape index: {1}]
  %s8 = inlined_call_operand.vmem [shape: f32[2,1,16], index: 8, kind: output, shape index: {2}]
  %9 = xla_tuple %s6, %s7, %s8
  %s10 = sld [smem:[#allocation0]]
  $region77: #{bottleneck_forward.5} parent=0
    _
  %s12 = ssub.s32 1, %s10
  %s13 = scalar_select 0, %s12, %s10
  loop: start=0, step=1, limit=4
  $region2: #{bottleneck_forward.5} parent=0 // loop_pre_header
    _
  $region3: #{bottleneck_forward.5} parent=0 // loop_header
    %s15 = sphi 0, %s19
    %p16 = scmp.ge.s32.totalorder %s15, 4
    %s22 = sphi 0, %s34
    %s23 = sphi 0, %s30
    %s24 = sphi 0, %s22
    %s25 = sphi 0, %s23
    %s26 = sphi 0, %s24
    %s27 = sphi 0, %s25
    %s39 = sphi 0, %s41
    %s42 = sphi 0, %s39
    %s43 = sphi 0, %s42
    %s59 = sphi 0, %s43
    %s75 = sphi 0, %s77
    %s78 = sphi 0, %s75
    %s79 = sphi 0, %s78
    %s95 = sphi 0, %s79
    %s111 = sphi 0, %s113
    %s114 = sphi 0, %s111
    %s115 = sphi 0, %s114
    %s131 = sphi 0, %s115
    %s135 = sphi 0, %s135
    %s137 = sphi 0, %s135
    %s138 = sphi 0, %s137
    %s152 = sphi 0, %s138
    %s156 = sphi 0, %s156
    %s158 = sphi 0, %s156
    %s159 = sphi 0, %s158
    %s173 = sphi 0, %s159
    %s177 = sphi 0, %s177
    %s179 = sphi 0, %s177
    %s180 = sphi 0, %s179
    %s194 = sphi 0, %s180
    %s202 = sphi 0, %s204
    %s205 = sphi 0, %s202
    %s206 = sphi 0, %s205
    %s222 = sphi 0, %s206
    %s228 = sphi 0, %s230
    %s231 = sphi 0, %s228
    %s232 = sphi 0, %s231
    %s248 = sphi 0, %s232
    %s254 = sphi 0, %s256
    %s257 = sphi 0, %s254
    %s258 = sphi 0, %s257
    %s274 = sphi 0, %s258
  $region4: #{bottleneck_forward.5} parent=0 // loop_header_branch
    %18 = sbr.rel (%p16) target = $region8
  $region5: #{bottleneck_forward.5} parent=0 // loop_body
    %s20 = ssub.s32 %s15, 1
    %s21 = ssub.s32 %s15, 2
    %s28 = sadd.s32 1, %s23
    %p29 = scmp.ge.s32.totalorder %s28, 1
    %s30 = scalar_select %p29, 0, %s28
    %s31 = sadd.s32 1, %s22
    %s32 = scalar_select %p29, %s31, %s22
    %p33 = scmp.ge.s32.totalorder %s32, 2
    %s34 = scalar_select %p33, 0, %s32
    %s35 = ssub.s32 %s22, %s34
    %s36 = ssub.s32 %s23, %s30
    %s37 = sor.u32 %s35, %s36
    %p38 = scmp.eq.s32.totalorder %s37, 0
    %s40 = sadd.s32 %s39, 1
    %s41 = scalar_select %p38, %s39, %s40
    %p44 = pneg %p38
    %p45 = scmp.eq.s32.totalorder %s15, 1
    %p46 = por %p44, %p45
    %p47 = scmp.ne.s32.totalorder %s39, %s42
    %p48 = scmp.eq.s32.totalorder %s15, 0
    %p49 = por %p47, %p48
    %p50 = scmp.ne.s32.totalorder %s39, %s42
    %p51 = scmp.eq.s32.totalorder %s20, 1
    %p52 = por %p50, %p51
    %p53 = scmp.ne.s32.totalorder %s42, %s43
    %p54 = scmp.eq.s32.totalorder %s20, 0
    %p55 = por %p53, %p54
    %p56 = scmp.ne.s32.totalorder %s42, %s43
    %p57 = scmp.eq.s32.totalorder %s21, 1
    %p58 = por %p56, %p57
    %p60 = scmp.ne.s32.totalorder %s43, %s59
    %p61 = scmp.eq.s32.totalorder %s21, 0
    %p62 = por %p60, %p61
    %s63 = smul.u32 %s23, 16
    %s64 = ssub.s32 %s63, 1
    %p65 = scmp.gt.s32.totalorder %s64, 0
    %s66 = scalar_select %p65, %s64, 0
    %s67 = smul.u32 %s30, 16
    %s68 = ssub.s32 %s67, 1
    %p69 = scmp.gt.s32.totalorder %s68, 0
    %s70 = scalar_select %p69, %s68, 0
    %s71 = ssub.s32 %s22, %s34
    %s72 = ssub.s32 %s66, %s70
    %s73 = sor.u32 %s71, %s72
    %p74 = scmp.eq.s32.totalorder %s73, 0
    %s76 = sadd.s32 %s75, 1
    %s77 = scalar_select %p74, %s75, %s76
    %p80 = pneg %p74
    %p81 = scmp.eq.s32.totalorder %s15, 1
    %p82 = por %p80, %p81
    %p83 = scmp.ne.s32.totalorder %s75, %s78
    %p84 = scmp.eq.s32.totalorder %s15, 0
    %p85 = por %p83, %p84
    %p86 = scmp.ne.s32.totalorder %s75, %s78
    %p87 = scmp.eq.s32.totalorder %s20, 1
    %p88 = por %p86, %p87
    %p89 = scmp.ne.s32.totalorder %s78, %s79
    %p90 = scmp.eq.s32.totalorder %s20, 0
    %p91 = por %p89, %p90
    %p92 = scmp.ne.s32.totalorder %s78, %s79
    %p93 = scmp.eq.s32.totalorder %s21, 1
    %p94 = por %p92, %p93
    %p96 = scmp.ne.s32.totalorder %s79, %s95
    %p97 = scmp.eq.s32.totalorder %s21, 0
    %p98 = por %p96, %p97
    %s99 = sadd.s32 %s23, 1
    %s100 = smul.u32 %s99, 16
    %p101 = scmp.lt.s32.totalorder %s100, 15
    %s102 = scalar_select %p101, %s100, 15
    %s103 = sadd.s32 %s30, 1
    %s104 = smul.u32 %s103, 16
    %p105 = scmp.lt.s32.totalorder %s104, 15
    %s106 = scalar_select %p105, %s104, 15
    %s107 = ssub.s32 %s22, %s34
    %s108 = ssub.s32 %s102, %s106
    %s109 = sor.u32 %s107, %s108
    %p110 = scmp.eq.s32.totalorder %s109, 0
    %s112 = sadd.s32 %s111, 1
    %s113 = scalar_select %p110, %s111, %s112
    %p116 = pneg %p110
    %p117 = scmp.eq.s32.totalorder %s15, 1
    %p118 = por %p116, %p117
    %p119 = scmp.ne.s32.totalorder %s111, %s114
    %p120 = scmp.eq.s32.totalorder %s15, 0
    %p121 = por %p119, %p120
    %p122 = scmp.ne.s32.totalorder %s111, %s114
    %p123 = scmp.eq.s32.totalorder %s20, 1
    %p124 = por %p122, %p123
    %p125 = scmp.ne.s32.totalorder %s114, %s115
    %p126 = scmp.eq.s32.totalorder %s20, 0
    %p127 = por %p125, %p126
    %p128 = scmp.ne.s32.totalorder %s114, %s115
    %p129 = scmp.eq.s32.totalorder %s21, 1
    %p130 = por %p128, %p129
    %p132 = scmp.ne.s32.totalorder %s115, %s131
    %p133 = scmp.eq.s32.totalorder %s21, 0
    %p134 = por %p132, %p133
    %s136 = sadd.s32 %s135, 1
    %p139 = scmp.eq.s32.totalorder %s15, 1
    %p140 = scmp.ne.s32.totalorder %s135, %s137
    %p141 = scmp.eq.s32.totalorder %s15, 0
    %p142 = por %p140, %p141
    %p143 = scmp.ne.s32.totalorder %s135, %s137
    %p144 = scmp.eq.s32.totalorder %s20, 1
    %p145 = por %p143, %p144
    %p146 = scmp.ne.s32.totalorder %s137, %s138
    %p147 = scmp.eq.s32.totalorder %s20, 0
    %p148 = por %p146, %p147
    %p149 = scmp.ne.s32.totalorder %s137, %s138
    %p150 = scmp.eq.s32.totalorder %s21, 1
    %p151 = por %p149, %p150
    %p153 = scmp.ne.s32.totalorder %s138, %s152
    %p154 = scmp.eq.s32.totalorder %s21, 0
    %p155 = por %p153, %p154
    %s157 = sadd.s32 %s156, 1
    %p160 = scmp.eq.s32.totalorder %s15, 1
    %p161 = scmp.ne.s32.totalorder %s156, %s158
    %p162 = scmp.eq.s32.totalorder %s15, 0
    %p163 = por %p161, %p162
    %p164 = scmp.ne.s32.totalorder %s156, %s158
    %p165 = scmp.eq.s32.totalorder %s20, 1
    %p166 = por %p164, %p165
    %p167 = scmp.ne.s32.totalorder %s158, %s159
    %p168 = scmp.eq.s32.totalorder %s20, 0
    %p169 = por %p167, %p168
    %p170 = scmp.ne.s32.totalorder %s158, %s159
    %p171 = scmp.eq.s32.totalorder %s21, 1
    %p172 = por %p170, %p171
    %p174 = scmp.ne.s32.totalorder %s159, %s173
    %p175 = scmp.eq.s32.totalorder %s21, 0
    %p176 = por %p174, %p175
    %s178 = sadd.s32 %s177, 1
    %p181 = scmp.eq.s32.totalorder %s15, 1
    %p182 = scmp.ne.s32.totalorder %s177, %s179
    %p183 = scmp.eq.s32.totalorder %s15, 0
    %p184 = por %p182, %p183
    %p185 = scmp.ne.s32.totalorder %s177, %s179
    %p186 = scmp.eq.s32.totalorder %s20, 1
    %p187 = por %p185, %p186
    %p188 = scmp.ne.s32.totalorder %s179, %s180
    %p189 = scmp.eq.s32.totalorder %s20, 0
    %p190 = por %p188, %p189
    %p191 = scmp.ne.s32.totalorder %s179, %s180
    %p192 = scmp.eq.s32.totalorder %s21, 1
    %p193 = por %p191, %p192
    %p195 = scmp.ne.s32.totalorder %s180, %s194
    %p196 = scmp.eq.s32.totalorder %s21, 0
    %p197 = por %p195, %p196
    %s198 = ssub.s32 %s22, %s34
    %s199 = ssub.s32 %s23, %s30
    %s200 = sor.u32 %s198, %s199
    %p201 = scmp.eq.s32.totalorder %s200, 0
    %s203 = sadd.s32 %s202, 1
    %s204 = scalar_select %p201, %s202, %s203
    %p207 = pneg %p201
    %p208 = scmp.eq.s32.totalorder %s15, 1
    %p209 = por %p207, %p208
    %p210 = scmp.ne.s32.totalorder %s202, %s205
    %p211 = scmp.eq.s32.totalorder %s15, 0
    %p212 = por %p210, %p211
    %p213 = scmp.ne.s32.totalorder %s202, %s205
    %p214 = scmp.eq.s32.totalorder %s20, 1
    %p215 = por %p213, %p214
    %p216 = scmp.ne.s32.totalorder %s205, %s206
    %p217 = scmp.eq.s32.totalorder %s20, 0
    %p218 = por %p216, %p217
    %p219 = scmp.ne.s32.totalorder %s205, %s206
    %p220 = scmp.eq.s32.totalorder %s21, 1
    %p221 = por %p219, %p220
    %p223 = scmp.ne.s32.totalorder %s206, %s222
    %p224 = scmp.eq.s32.totalorder %s21, 0
    %p225 = por %p223, %p224
    %s226 = ssub.s32 %s22, %s34
    %p227 = scmp.eq.s32.totalorder %s226, 0
    %s229 = sadd.s32 %s228, 1
    %s230 = scalar_select %p227, %s228, %s229
    %p233 = pneg %p227
    %p234 = scmp.eq.s32.totalorder %s15, 1
    %p235 = por %p233, %p234
    %p236 = scmp.ne.s32.totalorder %s228, %s231
    %p237 = scmp.eq.s32.totalorder %s15, 0
    %p238 = por %p236, %p237
    %p239 = scmp.ne.s32.totalorder %s228, %s231
    %p240 = scmp.eq.s32.totalorder %s20, 1
    %p241 = por %p239, %p240
    %p242 = scmp.ne.s32.totalorder %s231, %s232
    %p243 = scmp.eq.s32.totalorder %s20, 0
    %p244 = por %p242, %p243
    %p245 = scmp.ne.s32.totalorder %s231, %s232
    %p246 = scmp.eq.s32.totalorder %s21, 1
    %p247 = por %p245, %p246
    %p249 = scmp.ne.s32.totalorder %s232, %s248
    %p250 = scmp.eq.s32.totalorder %s21, 0
    %p251 = por %p249, %p250
    %s252 = ssub.s32 %s22, %s34
    %p253 = scmp.eq.s32.totalorder %s252, 0
    %s255 = sadd.s32 %s254, 1
    %s256 = scalar_select %p253, %s254, %s255
    %p259 = pneg %p253
    %p260 = scmp.eq.s32.totalorder %s15, 1
    %p261 = por %p259, %p260
    %p262 = scmp.ne.s32.totalorder %s254, %s257
    %p263 = scmp.eq.s32.totalorder %s15, 0
    %p264 = por %p262, %p263
    %p265 = scmp.ne.s32.totalorder %s254, %s257
    %p266 = scmp.eq.s32.totalorder %s20, 1
    %p267 = por %p265, %p266
    %p268 = scmp.ne.s32.totalorder %s257, %s258
    %p269 = scmp.eq.s32.totalorder %s20, 0
    %p270 = por %p268, %p269
    %p271 = scmp.ne.s32.totalorder %s257, %s258
    %p272 = scmp.eq.s32.totalorder %s21, 1
    %p273 = por %p271, %p272
    %p275 = scmp.ne.s32.totalorder %s258, %s274
    %p276 = scmp.eq.s32.totalorder %s21, 0
    %p277 = por %p275, %p276
    %p278 = scmp.le.s32.totalorder 1, %s15
    %p279 = scmp.lt.s32.totalorder %s15, 3
    %p280 = pnand %p278, %p279
    %p281 = pneg %p280
    // Predicated region
    $region9: #{bottleneck_forward.5} parent=5 // pred_check
      _
    $region10: #{bottleneck_forward.5} parent=5 // pred_check_branch
      %283 = sbr.rel (%p280) target = $region12
    $region11: #{bottleneck_forward.5} parent=5 // pred_region
      %s284 = ssub.s32 %s15, 1
      // Predicated region
      $region13: #{bottleneck_forward.5} parent=11 // pred_check
        %p285 = pneg %p148
      $region14: #{bottleneck_forward.5} parent=11 // pred_check_branch
        %287 = sbr.rel (%p285) target = $region16
      $region15: #{bottleneck_forward.5} parent=11 // pred_region
        _
      $region16: #{bottleneck_forward.5} parent=11 // pred_fallthru
        _
      // Predicated region
      $region17: #{bottleneck_forward.5} parent=11 // pred_check
        %p288 = pneg %p169
      $region18: #{bottleneck_forward.5} parent=11 // pred_check_branch
        %290 = sbr.rel (%p288) target = $region20
      $region19: #{bottleneck_forward.5} parent=11 // pred_region
        _
      $region20: #{bottleneck_forward.5} parent=11 // pred_fallthru
        _
      // Predicated region
      $region21: #{bottleneck_forward.5} parent=11 // pred_check
        %p291 = pneg %p190
      $region22: #{bottleneck_forward.5} parent=11 // pred_check_branch
        %293 = sbr.rel (%p291) target = $region24
      $region23: #{bottleneck_forward.5} parent=11 // pred_region
        _
      $region24: #{bottleneck_forward.5} parent=11 // pred_fallthru
        _
    $region12: #{bottleneck_forward.5} parent=5 // pred_fallthru
      _
    %p294 = scmp.lt.s32.totalorder %s15, 2
    // Predicated region
    $region25: #{bottleneck_forward.5} parent=5 // pred_check
      %p295 = pneg %p294
    $region26: #{bottleneck_forward.5} parent=5 // pred_check_branch
      %297 = sbr.rel (%p295) target = $region28
    $region27: #{bottleneck_forward.5} parent=5 // pred_region
      // Predicated region
      $region29: #{bottleneck_forward.5} parent=27 // pred_check
        %p298 = pneg %p49
      $region30: #{bottleneck_forward.5} parent=27 // pred_check_branch
        %300 = sbr.rel (%p298) target = $region32
      $region31: #{bottleneck_forward.5} parent=27 // pred_region
        %s301 = smul.u32 16, %s23
        %p302 = scmp.lt.s32.totalorder %s22, 1
        %s303 = scalar_select %p302, %s22, 1
        %p304 = scmp.lt.s32.totalorder %s301, 15
        %s305 = scalar_select %p304, %s301, 15
        %s306 = smul.addr %s305, 2
        %s307 = smul.addr %s303, 32
        %s308 = sadd.s32 %s306, %s307
        %s309 = smul.addr %s308, 4
        %s310 = scalar_lea.vmem %s0, %s309
        %s311 = smul.u32 16, %s23
      $region32: #{bottleneck_forward.5} parent=27 // pred_fallthru
        _
      // Predicated region
      $region33: #{bottleneck_forward.5} parent=27 // pred_check
        %p312 = pneg %p85
      $region34: #{bottleneck_forward.5} parent=27 // pred_check_branch
        %314 = sbr.rel (%p312) target = $region36
      $region35: #{bottleneck_forward.5} parent=27 // pred_region
        %s315 = smul.u32 %s23, 16
        %s316 = ssub.s32 %s315, 1
        %p317 = scmp.gt.s32.totalorder %s316, 0
        %s318 = scalar_select %p317, %s316, 0
        %p319 = scmp.lt.s32.totalorder %s22, 1
        %s320 = scalar_select %p319, %s22, 1
        %p321 = scmp.lt.s32.totalorder %s318, 15
        %s322 = scalar_select %p321, %s318, 15
        %s323 = smul.addr %s322, 2
        %s324 = smul.addr %s320, 32
        %s325 = sadd.s32 %s323, %s324
        %s326 = smul.addr %s325, 4
        %s327 = scalar_lea.vmem %s1, %s326
        %s328 = smul.u32 %s23, 16
        %s329 = ssub.s32 %s328, 1
        %p330 = scmp.gt.s32.totalorder %s329, 0
        %s331 = scalar_select %p330, %s329, 0
      $region36: #{bottleneck_forward.5} parent=27 // pred_fallthru
        _
      // Predicated region
      $region37: #{bottleneck_forward.5} parent=27 // pred_check
        %p332 = pneg %p121
      $region38: #{bottleneck_forward.5} parent=27 // pred_check_branch
        %334 = sbr.rel (%p332) target = $region40
      $region39: #{bottleneck_forward.5} parent=27 // pred_region
        %s335 = sadd.s32 %s23, 1
        %s336 = smul.u32 %s335, 16
        %p337 = scmp.lt.s32.totalorder %s336, 15
        %s338 = scalar_select %p337, %s336, 15
        %p339 = scmp.lt.s32.totalorder %s22, 1
        %s340 = scalar_select %p339, %s22, 1
        %p341 = scmp.lt.s32.totalorder %s338, 15
        %s342 = scalar_select %p341, %s338, 15
        %s343 = smul.addr %s342, 2
        %s344 = smul.addr %s340, 32
        %s345 = sadd.s32 %s343, %s344
        %s346 = smul.addr %s345, 4
        %s347 = scalar_lea.vmem %s2, %s346
        %s348 = sadd.s32 %s23, 1
        %s349 = smul.u32 %s348, 16
        %p350 = scmp.lt.s32.totalorder %s349, 15
        %s351 = scalar_select %p350, %s349, 15
      $region40: #{bottleneck_forward.5} parent=27 // pred_fallthru
        _
    $region28: #{bottleneck_forward.5} parent=5 // pred_fallthru
      _
    %p352 = scmp.le.s32.totalorder 1, %s15
    %p353 = scmp.lt.s32.totalorder %s15, 3
    %p354 = pnand %p352, %p353
    %p355 = pneg %p354
    // Predicated region
    $region41: #{bottleneck_forward.5} parent=5 // pred_check
      _
    $region42: #{bottleneck_forward.5} parent=5 // pred_check_branch
      %357 = sbr.rel (%p354) target = $region44
    $region43: #{bottleneck_forward.5} parent=5 // pred_region
      %s358 = ssub.s32 %s15, 1
      %s359 = smul.u32 16, %s25
      %p360 = scmp.lt.s32.totalorder %s24, 1
      %s361 = scalar_select %p360, %s24, 1
      %p362 = scmp.lt.s32.totalorder %s359, 15
      %s363 = scalar_select %p362, %s359, 15
      %s364 = smul.addr %s363, 2
      %s365 = smul.addr %s361, 32
      %s366 = sadd.s32 %s364, %s365
      %s367 = smul.addr %s366, 4
      %s368 = scalar_lea.vmem %s0, %s367
      %p369 = pneg %p55
      %p370 = pneg %p52
      %s371 = smul.u32 %s25, 16
      %s372 = ssub.s32 %s371, 1
      %p373 = scmp.gt.s32.totalorder %s372, 0
      %s374 = scalar_select %p373, %s372, 0
      %p375 = scmp.lt.s32.totalorder %s24, 1
      %s376 = scalar_select %p375, %s24, 1
      %p377 = scmp.lt.s32.totalorder %s374, 15
      %s378 = scalar_select %p377, %s374, 15
      %s379 = smul.addr %s378, 2
      %s380 = smul.addr %s376, 32
      %s381 = sadd.s32 %s379, %s380
      %s382 = smul.addr %s381, 4
      %s383 = scalar_lea.vmem %s1, %s382
      %p384 = pneg %p91
      %p385 = pneg %p88
      %s386 = sadd.s32 %s25, 1
      %s387 = smul.u32 %s386, 16
      %p388 = scmp.lt.s32.totalorder %s387, 15
      %s389 = scalar_select %p388, %s387, 15
      %p390 = scmp.lt.s32.totalorder %s24, 1
      %s391 = scalar_select %p390, %s24, 1
      %p392 = scmp.lt.s32.totalorder %s389, 15
      %s393 = scalar_select %p392, %s389, 15
      %s394 = smul.addr %s393, 2
      %s395 = smul.addr %s391, 32
      %s396 = sadd.s32 %s394, %s395
      %s397 = smul.addr %s396, 4
      %s398 = scalar_lea.vmem %s2, %s397
      %p399 = pneg %p127
      %p400 = pneg %p124
      %p401 = pneg %p148
      %p402 = pneg %p145
      %p403 = pneg %p169
      %p404 = pneg %p166
      %p405 = pneg %p190
      %p406 = pneg %p187
      %p407 = pneg %p218
      %p408 = pneg %p215
      %s409 = smul.u32 16, %s25
      %p410 = scmp.lt.s32.totalorder %s24, 1
      %s411 = scalar_select %p410, %s24, 1
      %p412 = scmp.lt.s32.totalorder %s409, 15
      %s413 = scalar_select %p412, %s409, 15
      %s414 = smul.addr %s413, 2
      %s415 = smul.addr %s411, 32
      %s416 = sadd.s32 %s414, %s415
      %s417 = smul.addr %s416, 4
      %s418 = scalar_lea.vmem %s6, %s417
      %p419 = pneg %p244
      %p420 = pneg %p241
      %p421 = scmp.lt.s32.totalorder %s24, 1
      %s422 = scalar_select %p421, %s24, 1
      %s423 = scalar_lea.vmem %s7, %s422
      %p424 = pneg %p270
      %p425 = pneg %p267
      %p426 = scmp.lt.s32.totalorder %s24, 1
      %s427 = scalar_select %p426, %s24, 1
      %s428 = scalar_lea.vmem %s8, %s427
      %s429 = smul.u32 16, %s25
      %p430 = scmp.lt.s32.totalorder %s24, 1
      %s431 = scalar_select %p430, %s24, 1
      %p432 = scmp.lt.s32.totalorder %s429, 15
      %s433 = scalar_select %p432, %s429, 15
      %s434 = smul.addr %s433, 2
      %s435 = smul.addr %s431, 32
      %s436 = sadd.s32 %s434, %s435
      %s437 = smul.addr %s436, 4
      %s438 = scalar_lea.vmem %s0, %s437
      %s439 = smul.u32 16, %s25
      %s440 = smul.u32 %s25, 16
      %s441 = ssub.s32 %s440, 1
      %p442 = scmp.gt.s32.totalorder %s441, 0
      %s443 = scalar_select %p442, %s441, 0
      %p444 = scmp.lt.s32.totalorder %s24, 1
      %s445 = scalar_select %p444, %s24, 1
      %p446 = scmp.lt.s32.totalorder %s443, 15
      %s447 = scalar_select %p446, %s443, 15
      %s448 = smul.addr %s447, 2
      %s449 = smul.addr %s445, 32
      %s450 = sadd.s32 %s448, %s449
      %s451 = smul.addr %s450, 4
      %s452 = scalar_lea.vmem %s1, %s451
      %s453 = smul.u32 %s25, 16
      %s454 = ssub.s32 %s453, 1
      %p455 = scmp.gt.s32.totalorder %s454, 0
      %s456 = scalar_select %p455, %s454, 0
      %s457 = sadd.s32 %s25, 1
      %s458 = smul.u32 %s457, 16
      %p459 = scmp.lt.s32.totalorder %s458, 15
      %s460 = scalar_select %p459, %s458, 15
      %p461 = scmp.lt.s32.totalorder %s24, 1
      %s462 = scalar_select %p461, %s24, 1
      %p463 = scmp.lt.s32.totalorder %s460, 15
      %s464 = scalar_select %p463, %s460, 15
      %s465 = smul.addr %s464, 2
      %s466 = smul.addr %s462, 32
      %s467 = sadd.s32 %s465, %s466
      %s468 = smul.addr %s467, 4
      %s469 = scalar_lea.vmem %s2, %s468
      %s470 = sadd.s32 %s25, 1
      %s471 = smul.u32 %s470, 16
      %p472 = scmp.lt.s32.totalorder %s471, 15
      %s473 = scalar_select %p472, %s471, 15
      %s474 = smul.u32 16, %s25
      %p475 = scmp.lt.s32.totalorder %s24, 1
      %s476 = scalar_select %p475, %s24, 1
      %p477 = scmp.lt.s32.totalorder %s474, 15
      %s478 = scalar_select %p477, %s474, 15
      %s479 = smul.addr %s478, 2
      %s480 = smul.addr %s476, 32
      %s481 = sadd.s32 %s479, %s480
      %s482 = smul.addr %s481, 4
      %s483 = scalar_lea.vmem %s6, %s482
      %s484 = smul.u32 16, %s25
      %p485 = scmp.lt.s32.totalorder %s24, 1
      %s486 = scalar_select %p485, %s24, 1
      %s487 = scalar_lea.vmem %s7, %s486
      %p488 = scmp.lt.s32.totalorder %s24, 1
      %s489 = scalar_select %p488, %s24, 1
      %s490 = scalar_lea.vmem %s8, %s489
      %p492 = scmp.eq.s32.totalorder %s25, 0
      // Predicated region
      $region45: #{bottleneck_forward.5} parent=43 // pred_check
        %p493 = pneg %p492
      $region46: #{bottleneck_forward.5} parent=43 // pred_check_branch
        %495 = sbr.rel (%p493) target = $region48
      $region47: #{bottleneck_forward.5} parent=43 // pred_region
        %vm496 = vcmask 122880
        %497 = vst.msk [vmem:[%s487] sm:$0x1] %vm496, 0.0
        %498 = vst.msk [vmem:[%s490] sm:$0x1] %vm496, 0.0
      $region48: #{bottleneck_forward.5} parent=43 // pred_fallthru
        _
      %v499 = vld [vmem:[%s3] sm:$0x1]
      %v500 = vld [vmem:[%s4] sm:$0x1]
      %v501 = vld [vmem:[%s438] sm:$0xf]
      %v502 = vld [vmem:[%s438 + $0x4] sm:$0xf]
      %v503 = vld [vmem:[%s438 + $0x8] sm:$0xf]
      %v504 = vld [vmem:[%s438 + $0xc] sm:$0xf]
      %v505 = vld [vmem:[%s438 + $0x10] sm:$0xf]
      %v506 = vld [vmem:[%s438 + $0x14] sm:$0xf]
      %v507 = vld [vmem:[%s438 + $0x18] sm:$0xf]
      %v508 = vld [vmem:[%s438 + $0x1c] sm:$0xf]
      %v509 = vld [vmem:[%s438 + $0x20] sm:$0xf]
      %v510 = vld [vmem:[%s438 + $0x24] sm:$0xf]
      %v511 = vld [vmem:[%s438 + $0x28] sm:$0xf]
      %v512 = vld [vmem:[%s438 + $0x2c] sm:$0xf]
      %v513 = vld [vmem:[%s438 + $0x30] sm:$0xf]
      %v514 = vld [vmem:[%s438 + $0x34] sm:$0xf]
      %v515 = vld [vmem:[%s438 + $0x38] sm:$0xf]
      %v516 = vld [vmem:[%s438 + $0x3c] sm:$0xf]
      %v517 = vld [vmem:[%s438 + $0x40] sm:$0xf]
      %v518 = vld [vmem:[%s438 + $0x44] sm:$0xf]
      %v519 = vld [vmem:[%s438 + $0x48] sm:$0xf]
      %v520 = vld [vmem:[%s438 + $0x4c] sm:$0xf]
      %v521 = vld [vmem:[%s438 + $0x50] sm:$0xf]
      %v522 = vld [vmem:[%s438 + $0x54] sm:$0xf]
      %v523 = vld [vmem:[%s438 + $0x58] sm:$0xf]
      %v524 = vld [vmem:[%s438 + $0x5c] sm:$0xf]
      %v525 = vld [vmem:[%s438 + $0x60] sm:$0xf]
      %v526 = vld [vmem:[%s438 + $0x64] sm:$0xf]
      %v527 = vld [vmem:[%s438 + $0x68] sm:$0xf]
      %v528 = vld [vmem:[%s438 + $0x6c] sm:$0xf]
      %v529 = vld [vmem:[%s438 + $0x70] sm:$0xf]
      %v530 = vld [vmem:[%s438 + $0x74] sm:$0xf]
      %v531 = vld [vmem:[%s438 + $0x78] sm:$0xf]
      %v532 = vld [vmem:[%s438 + $0x7c] sm:$0xf]
      %v533 = vunpack.c.l.bf16 %v501
      %v534 = vunpack.c.l.bf16 %v502
      %v535 = vunpack.c.l.bf16 %v503
      %v536 = vunpack.c.l.bf16 %v504
      %v537 = vunpack.c.l.bf16 %v505
      %v538 = vunpack.c.l.bf16 %v506
      %v539 = vunpack.c.l.bf16 %v507
      %v540 = vunpack.c.l.bf16 %v508
      %v541 = vunpack.c.l.bf16 %v509
      %v542 = vunpack.c.l.bf16 %v510
      %v543 = vunpack.c.l.bf16 %v511
      %v544 = vunpack.c.l.bf16 %v512
      %v545 = vunpack.c.l.bf16 %v513
      %v546 = vunpack.c.l.bf16 %v514
      %v547 = vunpack.c.l.bf16 %v515
      %v548 = vunpack.c.l.bf16 %v516
      %v549 = vunpack.c.l.bf16 %v517
      %v550 = vunpack.c.l.bf16 %v518
      %v551 = vunpack.c.l.bf16 %v519
      %v552 = vunpack.c.l.bf16 %v520
      %v553 = vunpack.c.l.bf16 %v521
      %v554 = vunpack.c.l.bf16 %v522
      %v555 = vunpack.c.l.bf16 %v523
      %v556 = vunpack.c.l.bf16 %v524
      %v557 = vunpack.c.l.bf16 %v525
      %v558 = vunpack.c.l.bf16 %v526
      %v559 = vunpack.c.l.bf16 %v527
      %v560 = vunpack.c.l.bf16 %v528
      %v561 = vunpack.c.l.bf16 %v529
      %v562 = vunpack.c.l.bf16 %v530
      %v563 = vunpack.c.l.bf16 %v531
      %v564 = vunpack.c.l.bf16 %v532
      %v566 = vperm.slane %v499, 0
      %v568 = vmul.f32 %v533, %v566
      %v569 = vmul.f32 %v534, %v566
      %v570 = vmul.f32 %v535, %v566
      %v571 = vmul.f32 %v536, %v566
      %v572 = vmul.f32 %v537, %v566
      %v573 = vmul.f32 %v538, %v566
      %v574 = vmul.f32 %v539, %v566
      %v575 = vmul.f32 %v540, %v566
      %v576 = vmul.f32 %v541, %v566
      %v577 = vmul.f32 %v542, %v566
      %v578 = vmul.f32 %v543, %v566
      %v579 = vmul.f32 %v544, %v566
      %v580 = vmul.f32 %v545, %v566
      %v581 = vmul.f32 %v546, %v566
      %v582 = vmul.f32 %v547, %v566
      %v583 = vmul.f32 %v548, %v566
      %v584 = vmul.f32 %v549, %v566
      %v585 = vmul.f32 %v550, %v566
      %v586 = vmul.f32 %v551, %v566
      %v587 = vmul.f32 %v552, %v566
      %v588 = vmul.f32 %v553, %v566
      %v589 = vmul.f32 %v554, %v566
      %v590 = vmul.f32 %v555, %v566
      %v591 = vmul.f32 %v556, %v566
      %v592 = vmul.f32 %v557, %v566
      %v593 = vmul.f32 %v558, %v566
      %v594 = vmul.f32 %v559, %v566
      %v595 = vmul.f32 %v560, %v566
      %v596 = vmul.f32 %v561, %v566
      %v597 = vmul.f32 %v562, %v566
      %v598 = vmul.f32 %v563, %v566
      %v599 = vmul.f32 %v564, %v566
      %v601 = vperm.slane %v500, 0
      %v603 = vadd.f32 %v568, %v601
      %v604 = vadd.f32 %v569, %v601
      %v605 = vadd.f32 %v570, %v601
      %v606 = vadd.f32 %v571, %v601
      %v607 = vadd.f32 %v572, %v601
      %v608 = vadd.f32 %v573, %v601
      %v609 = vadd.f32 %v574, %v601
      %v610 = vadd.f32 %v575, %v601
      %v611 = vadd.f32 %v576, %v601
      %v612 = vadd.f32 %v577, %v601
      %v613 = vadd.f32 %v578, %v601
      %v614 = vadd.f32 %v579, %v601
      %v615 = vadd.f32 %v580, %v601
      %v616 = vadd.f32 %v581, %v601
      %v617 = vadd.f32 %v582, %v601
      %v618 = vadd.f32 %v583, %v601
      %v619 = vadd.f32 %v584, %v601
      %v620 = vadd.f32 %v585, %v601
      %v621 = vadd.f32 %v586, %v601
      %v622 = vadd.f32 %v587, %v601
      %v623 = vadd.f32 %v588, %v601
      %v624 = vadd.f32 %v589, %v601
      %v625 = vadd.f32 %v590, %v601
      %v626 = vadd.f32 %v591, %v601
      %v627 = vadd.f32 %v592, %v601
      %v628 = vadd.f32 %v593, %v601
      %v629 = vadd.f32 %v594, %v601
      %v630 = vadd.f32 %v595, %v601
      %v631 = vadd.f32 %v596, %v601
      %v632 = vadd.f32 %v597, %v601
      %v633 = vadd.f32 %v598, %v601
      %v634 = vadd.f32 %v599, %v601
      %v635 = vmax.f32 %v603, 0.0
      %v636 = vmax.f32 %v604, 0.0
      %v637 = vmax.f32 %v605, 0.0
      %v638 = vmax.f32 %v606, 0.0
      %v639 = vmax.f32 %v607, 0.0
      %v640 = vmax.f32 %v608, 0.0
      %v641 = vmax.f32 %v609, 0.0
      %v642 = vmax.f32 %v610, 0.0
      %v643 = vmax.f32 %v611, 0.0
      %v644 = vmax.f32 %v612, 0.0
      %v645 = vmax.f32 %v613, 0.0
      %v646 = vmax.f32 %v614, 0.0
      %v647 = vmax.f32 %v615, 0.0
      %v648 = vmax.f32 %v616, 0.0
      %v649 = vmax.f32 %v617, 0.0
      %v650 = vmax.f32 %v618, 0.0
      %v651 = vmax.f32 %v619, 0.0
      %v652 = vmax.f32 %v620, 0.0
      %v653 = vmax.f32 %v621, 0.0
      %v654 = vmax.f32 %v622, 0.0
      %v655 = vmax.f32 %v623, 0.0
      %v656 = vmax.f32 %v624, 0.0
      %v657 = vmax.f32 %v625, 0.0
      %v658 = vmax.f32 %v626, 0.0
      %v659 = vmax.f32 %v627, 0.0
      %v660 = vmax.f32 %v628, 0.0
      %v661 = vmax.f32 %v629, 0.0
      %v662 = vmax.f32 %v630, 0.0
      %v663 = vmax.f32 %v631, 0.0
      %v664 = vmax.f32 %v632, 0.0
      %v665 = vmax.f32 %v633, 0.0
      %v666 = vmax.f32 %v634, 0.0
      %v667 = vld [vmem:[%s452] sm:$0xf]
      %v668 = vld [vmem:[%s452 + $0x4] sm:$0xf]
      %v669 = vunpack.c.l.bf16 %v667
      %v670 = vunpack.c.l.bf16 %v668
      %v671 = vmul.f32 %v669, %v566
      %v672 = vmul.f32 %v670, %v566
      %v673 = vadd.f32 %v671, %v601
      %v674 = vadd.f32 %v672, %v601
      %v675 = vmax.f32 %v673, 0.0
      %v676 = vmax.f32 %v674, 0.0
      %p677 = scmp.gt.s32.totalorder %s25, 0
      %s678 = scalar_select %p677, 1, 0
      %s679 = scvt.s32.f32 %s678
      %v680 = vstv %s679
      %v681 = vmul.f32 %v675, %v680
      %v682 = vmul.f32 %v676, %v680
      %v683 = vld [vmem:[%s469] sm:$0xf]
      %v684 = vld [vmem:[%s469 + $0x4] sm:$0xf]
      %v685 = vunpack.c.l.bf16 %v683
      %v686 = vunpack.c.l.bf16 %v684
      %v687 = vmul.f32 %v685, %v566
      %v688 = vmul.f32 %v686, %v566
      %v689 = vadd.f32 %v687, %v601
      %v690 = vadd.f32 %v688, %v601
      %v691 = vmax.f32 %v689, 0.0
      %v692 = vmax.f32 %v690, 0.0
      %p693 = scmp.lt.s32.totalorder %s25, 0
      %s694 = scalar_select %p693, 1, 0
      %s695 = scvt.s32.f32 %s694
      %v696 = vstv %s695
      %v697 = vmul.f32 %v691, %v696
      %v698 = vmul.f32 %v692, %v696
      %vm735 = vcmask 1040384
      %v736 = vrot.slane %v681, 7
      %v737 = vrot.slane %v682, 7
      %v738 = vsel %vm735, %v736, %v737
      %v739 = vrot.slane %v635, 7
      %v740 = vrot.slane %v636, 7
      %v741 = vsel %vm735, %v739, %v740
      %v742 = vrot.slane %v637, 7
      %v743 = vrot.slane %v638, 7
      %v744 = vsel %vm735, %v742, %v743
      %v745 = vrot.slane %v639, 7
      %v746 = vrot.slane %v640, 7
      %v747 = vsel %vm735, %v745, %v746
      %v748 = vrot.slane %v641, 7
      %v749 = vrot.slane %v642, 7
      %v750 = vsel %vm735, %v748, %v749
      %v751 = vrot.slane %v643, 7
      %v752 = vrot.slane %v644, 7
      %v753 = vsel %vm735, %v751, %v752
      %v754 = vrot.slane %v645, 7
      %v755 = vrot.slane %v646, 7
      %v756 = vsel %vm735, %v754, %v755
      %v757 = vrot.slane %v647, 7
      %v758 = vrot.slane %v648, 7
      %v759 = vsel %vm735, %v757, %v758
      %v760 = vrot.slane %v649, 7
      %v761 = vrot.slane %v650, 7
      %v762 = vsel %vm735, %v760, %v761
      %v763 = vrot.slane %v651, 7
      %v764 = vrot.slane %v652, 7
      %v765 = vsel %vm735, %v763, %v764
      %v766 = vrot.slane %v653, 7
      %v767 = vrot.slane %v654, 7
      %v768 = vsel %vm735, %v766, %v767
      %v769 = vrot.slane %v655, 7
      %v770 = vrot.slane %v656, 7
      %v771 = vsel %vm735, %v769, %v770
      %v772 = vrot.slane %v657, 7
      %v773 = vrot.slane %v658, 7
      %v774 = vsel %vm735, %v772, %v773
      %v775 = vrot.slane %v659, 7
      %v776 = vrot.slane %v660, 7
      %v777 = vsel %vm735, %v775, %v776
      %v778 = vrot.slane %v661, 7
      %v779 = vrot.slane %v662, 7
      %v780 = vsel %vm735, %v778, %v779
      %v781 = vrot.slane %v663, 7
      %v782 = vrot.slane %v664, 7
      %v783 = vsel %vm735, %v781, %v782
      %v784 = vrot.slane %v665, 7
      %v785 = vrot.slane %v666, 7
      %v786 = vsel %vm735, %v784, %v785
      %v787 = vrot.slane %v697, 7
      %v788 = vrot.slane %v698, 7
      %v789 = vsel %vm735, %v787, %v788
      %v844 = vsel %vm735, 0.0, %v736
      %v845 = vsel %vm735, 0.0, %v739
      %v846 = vsel %vm735, 0.0, %v742
      %v847 = vsel %vm735, 0.0, %v745
      %v848 = vsel %vm735, 0.0, %v748
      %v849 = vsel %vm735, 0.0, %v751
      %v850 = vsel %vm735, 0.0, %v754
      %v851 = vsel %vm735, 0.0, %v757
      %v852 = vsel %vm735, 0.0, %v760
      %v853 = vsel %vm735, 0.0, %v763
      %v854 = vsel %vm735, 0.0, %v766
      %v855 = vsel %vm735, 0.0, %v769
      %v856 = vsel %vm735, 0.0, %v772
      %v857 = vsel %vm735, 0.0, %v775
      %v858 = vsel %vm735, 0.0, %v778
      %v859 = vsel %vm735, 0.0, %v781
      %v860 = vsel %vm735, 0.0, %v784
      %v861 = vsel %vm735, 0.0, %v787
      %v862 = vsel %vm735, %v737, 0.0
      %v863 = vsel %vm735, %v740, 0.0
      %v864 = vsel %vm735, %v743, 0.0
      %v865 = vsel %vm735, %v746, 0.0
      %v866 = vsel %vm735, %v749, 0.0
      %v867 = vsel %vm735, %v752, 0.0
      %v868 = vsel %vm735, %v755, 0.0
      %v869 = vsel %vm735, %v758, 0.0
      %v870 = vsel %vm735, %v761, 0.0
      %v871 = vsel %vm735, %v764, 0.0
      %v872 = vsel %vm735, %v767, 0.0
      %v873 = vsel %vm735, %v770, 0.0
      %v874 = vsel %vm735, %v773, 0.0
      %v875 = vsel %vm735, %v776, 0.0
      %v876 = vsel %vm735, %v779, 0.0
      %v877 = vsel %vm735, %v782, 0.0
      %v878 = vsel %vm735, %v785, 0.0
      %v879 = vsel %vm735, %v788, 0.0
      %v880 = vpack.c.bf16 %v844, %v844
      %v881 = vpack.c.bf16 %v738, %v738
      %v882 = vpack.c.bf16 %v845, %v845
      %v883 = vpack.c.bf16 %v741, %v741
      %v884 = vpack.c.bf16 %v846, %v846
      %v885 = vpack.c.bf16 %v744, %v744
      %v886 = vpack.c.bf16 %v847, %v847
      %v887 = vpack.c.bf16 %v747, %v747
      %v888 = vpack.c.bf16 %v848, %v848
      %v889 = vpack.c.bf16 %v750, %v750
      %v890 = vpack.c.bf16 %v849, %v849
      %v891 = vpack.c.bf16 %v753, %v753
      %v892 = vpack.c.bf16 %v850, %v850
      %v893 = vpack.c.bf16 %v756, %v756
      %v894 = vpack.c.bf16 %v851, %v851
      %v895 = vpack.c.bf16 %v759, %v759
      %v896 = vpack.c.bf16 %v852, %v852
      %v897 = vpack.c.bf16 %v762, %v762
      %v898 = vpack.c.bf16 %v853, %v853
      %v899 = vpack.c.bf16 %v765, %v765
      %v900 = vpack.c.bf16 %v854, %v854
      %v901 = vpack.c.bf16 %v768, %v768
      %v902 = vpack.c.bf16 %v855, %v855
      %v903 = vpack.c.bf16 %v771, %v771
      %v904 = vpack.c.bf16 %v856, %v856
      %v905 = vpack.c.bf16 %v774, %v774
      %v906 = vpack.c.bf16 %v857, %v857
      %v907 = vpack.c.bf16 %v777, %v777
      %v908 = vpack.c.bf16 %v858, %v858
      %v909 = vpack.c.bf16 %v780, %v780
      %v910 = vpack.c.bf16 %v859, %v859
      %v911 = vpack.c.bf16 %v783, %v783
      %v912 = vpack.c.bf16 %v860, %v860
      %v913 = vpack.c.bf16 %v786, %v786
      %v914 = vpack.c.bf16 %v861, %v861
      %v915 = vpack.c.bf16 %v789, %v789
      %v916 = vpack.c.bf16 %v862, %v862
      %v917 = vpack.c.bf16 %v863, %v863
      %v918 = vpack.c.bf16 %v864, %v864
      %v919 = vpack.c.bf16 %v865, %v865
      %v920 = vpack.c.bf16 %v866, %v866
      %v921 = vpack.c.bf16 %v867, %v867
      %v922 = vpack.c.bf16 %v868, %v868
      %v923 = vpack.c.bf16 %v869, %v869
      %v924 = vpack.c.bf16 %v870, %v870
      %v925 = vpack.c.bf16 %v871, %v871
      %v926 = vpack.c.bf16 %v872, %v872
      %v927 = vpack.c.bf16 %v873, %v873
      %v928 = vpack.c.bf16 %v874, %v874
      %v929 = vpack.c.bf16 %v875, %v875
      %v930 = vpack.c.bf16 %v876, %v876
      %v931 = vpack.c.bf16 %v877, %v877
      %v932 = vpack.c.bf16 %v878, %v878
      %v933 = vpack.c.bf16 %v879, %v879
      %v934 = vld [vmem:[%s5] sm:$0xf]
      %v935 = vld [vmem:[%s5 + $0x4] sm:$0xf]
      %vm936 = vsmask.f32 3328
      %vm937 = vsmask.f32 7440
      %vm938 = vmor %vm936, %vm937
      %v940 = vshrl.u32 %v880, 16
      %v942 = vrot.slane %v940, 4
      %v943 = vshll.u32 %v880, 16
      %v945 = vrot.slane %v943, 5
      %v946 = vor.u32 %v942, %v945
      %v947 = vrot.slane %v946, 4
      %v949 = vshll.u32 %v881, 16
      %v951 = vrot.slane %v949, 5
      %v952 = vsel %vm938, %v947, %v951
      %v953 = vshrl.u32 %v881, 16
      %v955 = vrot.slane %v953, 4
      %v956 = vor.u32 %v955, %v951
      %v957 = vrot.slane %v956, 4
      %v959 = vshll.u32 %v916, 16
      %v961 = vrot.slane %v959, 5
      %v962 = vsel %vm938, %v957, %v961
      %v964 = vshrl.u32 %v882, 16
      %v966 = vrot.slane %v964, 4
      %v967 = vshll.u32 %v882, 16
      %v969 = vrot.slane %v967, 5
      %v970 = vor.u32 %v966, %v969
      %v971 = vrot.slane %v970, 4
      %v973 = vshll.u32 %v883, 16
      %v975 = vrot.slane %v973, 5
      %v976 = vsel %vm938, %v971, %v975
      %v977 = vshrl.u32 %v883, 16
      %v979 = vrot.slane %v977, 4
      %v980 = vor.u32 %v979, %v975
      %v981 = vrot.slane %v980, 4
      %v983 = vshll.u32 %v917, 16
      %v985 = vrot.slane %v983, 5
      %v986 = vsel %vm938, %v981, %v985
      %v988 = vshrl.u32 %v884, 16
      %v990 = vrot.slane %v988, 4
      %v991 = vshll.u32 %v884, 16
      %v993 = vrot.slane %v991, 5
      %v994 = vor.u32 %v990, %v993
      %v995 = vrot.slane %v994, 4
      %v997 = vshll.u32 %v885, 16
      %v999 = vrot.slane %v997, 5
      %v1000 = vsel %vm938, %v995, %v999
      %v1001 = vshrl.u32 %v885, 16
      %v1003 = vrot.slane %v1001, 4
      %v1004 = vor.u32 %v1003, %v999
      %v1005 = vrot.slane %v1004, 4
      %v1007 = vshll.u32 %v918, 16
      %v1009 = vrot.slane %v1007, 5
      %v1010 = vsel %vm938, %v1005, %v1009
      %v1012 = vshrl.u32 %v886, 16
      %v1014 = vrot.slane %v1012, 4
      %v1015 = vshll.u32 %v886, 16
      %v1017 = vrot.slane %v1015, 5
      %v1018 = vor.u32 %v1014, %v1017
      %v1019 = vrot.slane %v1018, 4
      %v1021 = vshll.u32 %v887, 16
      %v1023 = vrot.slane %v1021, 5
      %v1024 = vsel %vm938, %v1019, %v1023
      %v1025 = vshrl.u32 %v887, 16
      %v1027 = vrot.slane %v1025, 4
      %v1028 = vor.u32 %v1027, %v1023
      %v1029 = vrot.slane %v1028, 4
      %v1031 = vshll.u32 %v919, 16
      %v1033 = vrot.slane %v1031, 5
      %v1034 = vsel %vm938, %v1029, %v1033
      %v1036 = vshrl.u32 %v888, 16
      %v1038 = vrot.slane %v1036, 4
      %v1039 = vshll.u32 %v888, 16
      %v1041 = vrot.slane %v1039, 5
      %v1042 = vor.u32 %v1038, %v1041
      %v1043 = vrot.slane %v1042, 4
      %v1045 = vshll.u32 %v889, 16
      %v1047 = vrot.slane %v1045, 5
      %v1048 = vsel %vm938, %v1043, %v1047
      %v1049 = vshrl.u32 %v889, 16
      %v1051 = vrot.slane %v1049, 4
      %v1052 = vor.u32 %v1051, %v1047
      %v1053 = vrot.slane %v1052, 4
      %v1055 = vshll.u32 %v920, 16
      %v1057 = vrot.slane %v1055, 5
      %v1058 = vsel %vm938, %v1053, %v1057
      %v1060 = vshrl.u32 %v890, 16
      %v1062 = vrot.slane %v1060, 4
      %v1063 = vshll.u32 %v890, 16
      %v1065 = vrot.slane %v1063, 5
      %v1066 = vor.u32 %v1062, %v1065
      %v1067 = vrot.slane %v1066, 4
      %v1069 = vshll.u32 %v891, 16
      %v1071 = vrot.slane %v1069, 5
      %v1072 = vsel %vm938, %v1067, %v1071
      %v1073 = vshrl.u32 %v891, 16
      %v1075 = vrot.slane %v1073, 4
      %v1076 = vor.u32 %v1075, %v1071
      %v1077 = vrot.slane %v1076, 4
      %v1079 = vshll.u32 %v921, 16
      %v1081 = vrot.slane %v1079, 5
      %v1082 = vsel %vm938, %v1077, %v1081
      %v1084 = vshrl.u32 %v892, 16
      %v1086 = vrot.slane %v1084, 4
      %v1087 = vshll.u32 %v892, 16
      %v1089 = vrot.slane %v1087, 5
      %v1090 = vor.u32 %v1086, %v1089
      %v1091 = vrot.slane %v1090, 4
      %v1093 = vshll.u32 %v893, 16
      %v1095 = vrot.slane %v1093, 5
      %v1096 = vsel %vm938, %v1091, %v1095
      %v1097 = vshrl.u32 %v893, 16
      %v1099 = vrot.slane %v1097, 4
      %v1100 = vor.u32 %v1099, %v1095
      %v1101 = vrot.slane %v1100, 4
      %v1103 = vshll.u32 %v922, 16
      %v1105 = vrot.slane %v1103, 5
      %v1106 = vsel %vm938, %v1101, %v1105
      %v1108 = vshrl.u32 %v894, 16
      %v1110 = vrot.slane %v1108, 4
      %v1111 = vshll.u32 %v894, 16
      %v1113 = vrot.slane %v1111, 5
      %v1114 = vor.u32 %v1110, %v1113
      %v1115 = vrot.slane %v1114, 4
      %v1117 = vshll.u32 %v895, 16
      %v1119 = vrot.slane %v1117, 5
      %v1120 = vsel %vm938, %v1115, %v1119
      %v1121 = vshrl.u32 %v895, 16
      %v1123 = vrot.slane %v1121, 4
      %v1124 = vor.u32 %v1123, %v1119
      %v1125 = vrot.slane %v1124, 4
      %v1127 = vshll.u32 %v923, 16
      %v1129 = vrot.slane %v1127, 5
      %v1130 = vsel %vm938, %v1125, %v1129
      %v1132 = vshrl.u32 %v896, 16
      %v1134 = vrot.slane %v1132, 4
      %v1135 = vshll.u32 %v896, 16
      %v1137 = vrot.slane %v1135, 5
      %v1138 = vor.u32 %v1134, %v1137
      %v1139 = vrot.slane %v1138, 4
      %v1141 = vshll.u32 %v897, 16
      %v1143 = vrot.slane %v1141, 5
      %v1144 = vsel %vm938, %v1139, %v1143
      %v1145 = vshrl.u32 %v897, 16
      %v1147 = vrot.slane %v1145, 4
      %v1148 = vor.u32 %v1147, %v1143
      %v1149 = vrot.slane %v1148, 4
      %v1151 = vshll.u32 %v924, 16
      %v1153 = vrot.slane %v1151, 5
      %v1154 = vsel %vm938, %v1149, %v1153
      %v1156 = vshrl.u32 %v898, 16
      %v1158 = vrot.slane %v1156, 4
      %v1159 = vshll.u32 %v898, 16
      %v1161 = vrot.slane %v1159, 5
      %v1162 = vor.u32 %v1158, %v1161
      %v1163 = vrot.slane %v1162, 4
      %v1165 = vshll.u32 %v899, 16
      %v1167 = vrot.slane %v1165, 5
      %v1168 = vsel %vm938, %v1163, %v1167
      %v1169 = vshrl.u32 %v899, 16
      %v1171 = vrot.slane %v1169, 4
      %v1172 = vor.u32 %v1171, %v1167
      %v1173 = vrot.slane %v1172, 4
      %v1175 = vshll.u32 %v925, 16
      %v1177 = vrot.slane %v1175, 5
      %v1178 = vsel %vm938, %v1173, %v1177
      %v1180 = vshrl.u32 %v900, 16
      %v1182 = vrot.slane %v1180, 4
      %v1183 = vshll.u32 %v900, 16
      %v1185 = vrot.slane %v1183, 5
      %v1186 = vor.u32 %v1182, %v1185
      %v1187 = vrot.slane %v1186, 4
      %v1189 = vshll.u32 %v901, 16
      %v1191 = vrot.slane %v1189, 5
      %v1192 = vsel %vm938, %v1187, %v1191
      %v1193 = vshrl.u32 %v901, 16
      %v1195 = vrot.slane %v1193, 4
      %v1196 = vor.u32 %v1195, %v1191
      %v1197 = vrot.slane %v1196, 4
      %v1199 = vshll.u32 %v926, 16
      %v1201 = vrot.slane %v1199, 5
      %v1202 = vsel %vm938, %v1197, %v1201
      %v1204 = vshrl.u32 %v902, 16
      %v1206 = vrot.slane %v1204, 4
      %v1207 = vshll.u32 %v902, 16
      %v1209 = vrot.slane %v1207, 5
      %v1210 = vor.u32 %v1206, %v1209
      %v1211 = vrot.slane %v1210, 4
      %v1213 = vshll.u32 %v903, 16
      %v1215 = vrot.slane %v1213, 5
      %v1216 = vsel %vm938, %v1211, %v1215
      %v1217 = vshrl.u32 %v903, 16
      %v1219 = vrot.slane %v1217, 4
      %v1220 = vor.u32 %v1219, %v1215
      %v1221 = vrot.slane %v1220, 4
      %v1223 = vshll.u32 %v927, 16
      %v1225 = vrot.slane %v1223, 5
      %v1226 = vsel %vm938, %v1221, %v1225
      %v1228 = vshrl.u32 %v904, 16
      %v1230 = vrot.slane %v1228, 4
      %v1231 = vshll.u32 %v904, 16
      %v1233 = vrot.slane %v1231, 5
      %v1234 = vor.u32 %v1230, %v1233
      %v1235 = vrot.slane %v1234, 4
      %v1237 = vshll.u32 %v905, 16
      %v1239 = vrot.slane %v1237, 5
      %v1240 = vsel %vm938, %v1235, %v1239
      %v1241 = vshrl.u32 %v905, 16
      %v1243 = vrot.slane %v1241, 4
      %v1244 = vor.u32 %v1243, %v1239
      %v1245 = vrot.slane %v1244, 4
      %v1247 = vshll.u32 %v928, 16
      %v1249 = vrot.slane %v1247, 5
      %v1250 = vsel %vm938, %v1245, %v1249
      %v1252 = vshrl.u32 %v906, 16
      %v1254 = vrot.slane %v1252, 4
      %v1255 = vshll.u32 %v906, 16
      %v1257 = vrot.slane %v1255, 5
      %v1258 = vor.u32 %v1254, %v1257
      %v1259 = vrot.slane %v1258, 4
      %v1261 = vshll.u32 %v907, 16
      %v1263 = vrot.slane %v1261, 5
      %v1264 = vsel %vm938, %v1259, %v1263
      %v1265 = vshrl.u32 %v907, 16
      %v1267 = vrot.slane %v1265, 4
      %v1268 = vor.u32 %v1267, %v1263
      %v1269 = vrot.slane %v1268, 4
      %v1271 = vshll.u32 %v929, 16
      %v1273 = vrot.slane %v1271, 5
      %v1274 = vsel %vm938, %v1269, %v1273
      %v1276 = vshrl.u32 %v908, 16
      %v1278 = vrot.slane %v1276, 4
      %v1279 = vshll.u32 %v908, 16
      %v1281 = vrot.slane %v1279, 5
      %v1282 = vor.u32 %v1278, %v1281
      %v1283 = vrot.slane %v1282, 4
      %v1285 = vshll.u32 %v909, 16
      %v1287 = vrot.slane %v1285, 5
      %v1288 = vsel %vm938, %v1283, %v1287
      %v1289 = vshrl.u32 %v909, 16
      %v1291 = vrot.slane %v1289, 4
      %v1292 = vor.u32 %v1291, %v1287
      %v1293 = vrot.slane %v1292, 4
      %v1295 = vshll.u32 %v930, 16
      %v1297 = vrot.slane %v1295, 5
      %v1298 = vsel %vm938, %v1293, %v1297
      %v1300 = vshrl.u32 %v910, 16
      %v1302 = vrot.slane %v1300, 4
      %v1303 = vshll.u32 %v910, 16
      %v1305 = vrot.slane %v1303, 5
      %v1306 = vor.u32 %v1302, %v1305
      %v1307 = vrot.slane %v1306, 4
      %v1309 = vshll.u32 %v911, 16
      %v1311 = vrot.slane %v1309, 5
      %v1312 = vsel %vm938, %v1307, %v1311
      %v1313 = vshrl.u32 %v911, 16
      %v1315 = vrot.slane %v1313, 4
      %v1316 = vor.u32 %v1315, %v1311
      %v1317 = vrot.slane %v1316, 4
      %v1319 = vshll.u32 %v931, 16
      %v1321 = vrot.slane %v1319, 5
      %v1322 = vsel %vm938, %v1317, %v1321
      %s1323 = scalar_lea.vmem %s5, 8
      %v1324 = vld [vmem:[%s1323] sm:$0xf]
      %v1325 = vld [vmem:[%s1323 + $0x4] sm:$0xf]
      %v1326 = vunpack.c.l.b16 %v952
      %v1327 = vunpack.c.l.b16 %v962
      %v1328 = vunpack.c.l.b16 %v976
      %v1329 = vunpack.c.l.b16 %v986
      %v1330 = vunpack.c.l.b16 %v1000
      %v1331 = vunpack.c.l.b16 %v1010
      %v1332 = vunpack.c.l.b16 %v1024
      %v1333 = vunpack.c.l.b16 %v1034
      %v1334 = vunpack.c.l.b16 %v1048
      %v1335 = vunpack.c.l.b16 %v1058
      %v1336 = vunpack.c.l.b16 %v1072
      %v1337 = vunpack.c.l.b16 %v1082
      %v1338 = vunpack.c.l.b16 %v1096
      %v1339 = vunpack.c.l.b16 %v1106
      %v1340 = vunpack.c.l.b16 %v1120
      %v1341 = vunpack.c.l.b16 %v1130
      %v1342 = vunpack.c.l.b16 %v1144
      %v1343 = vunpack.c.l.b16 %v1154
      %v1344 = vunpack.c.l.b16 %v1168
      %v1345 = vunpack.c.l.b16 %v1178
      %v1346 = vunpack.c.l.b16 %v1192
      %v1347 = vunpack.c.l.b16 %v1202
      %v1348 = vunpack.c.l.b16 %v1216
      %v1349 = vunpack.c.l.b16 %v1226
      %v1350 = vunpack.c.l.b16 %v1240
      %v1351 = vunpack.c.l.b16 %v1250
      %v1352 = vunpack.c.l.b16 %v1264
      %v1353 = vunpack.c.l.b16 %v1274
      %v1354 = vunpack.c.l.b16 %v1288
      %v1355 = vunpack.c.l.b16 %v1298
      %v1356 = vunpack.c.l.b16 %v1312
      %v1357 = vunpack.c.l.b16 %v1322
      %v1358 = vpack.c.b16 %v1327, %v1326
      %v1359 = vpack.c.b16 %v1329, %v1328
      %v1360 = vpack.c.b16 %v1331, %v1330
      %v1361 = vpack.c.b16 %v1333, %v1332
      %v1362 = vpack.c.b16 %v1335, %v1334
      %v1363 = vpack.c.b16 %v1337, %v1336
      %v1364 = vpack.c.b16 %v1339, %v1338
      %v1365 = vpack.c.b16 %v1341, %v1340
      %v1366 = vpack.c.b16 %v1343, %v1342
      %v1367 = vpack.c.b16 %v1345, %v1344
      %v1368 = vpack.c.b16 %v1347, %v1346
      %v1369 = vpack.c.b16 %v1349, %v1348
      %v1370 = vpack.c.b16 %v1351, %v1350
      %v1371 = vpack.c.b16 %v1353, %v1352
      %v1372 = vpack.c.b16 %v1355, %v1354
      %v1373 = vpack.c.b16 %v1357, %v1356
      %v1376 = vunpack.c.l.b16 %v1324
      %v1377 = vunpack.c.l.b16 %v1325
      %v1378 = vpack.c.b16 %v1377, %v1376
      %vm1380 = vcmask 130048
      %v1382 = vsel %vm1380, %v1358, 0
      %v1385 = vsel %vm1380, %v1359, 0
      %v1388 = vsel %vm1380, %v1360, 0
      %v1391 = vsel %vm1380, %v1361, 0
      %v1394 = vsel %vm1380, %v1362, 0
      %v1397 = vsel %vm1380, %v1363, 0
      %v1400 = vsel %vm1380, %v1364, 0
      %v1403 = vsel %vm1380, %v1365, 0
      %v1406 = vsel %vm1380, %v1366, 0
      %v1409 = vsel %vm1380, %v1367, 0
      %v1412 = vsel %vm1380, %v1368, 0
      %v1415 = vsel %vm1380, %v1369, 0
      %v1418 = vsel %vm1380, %v1370, 0
      %v1421 = vsel %vm1380, %v1371, 0
      %v1424 = vsel %vm1380, %v1372, 0
      %v1427 = vsel %vm1380, %v1373, 0
      %1429 = vmatpush.bf16.msra.mxu0 0
      %1430 = vmatpush.bf16.msra.mxu0 0
      %1431 = vmatpush.bf16.msra.mxu0 0
      %1432 = vmatpush.bf16.msra.mxu0 0
      %1433 = vmatpush.bf16.msra.mxu0 0
      %1434 = vmatpush.bf16.msra.mxu0 0
      %1435 = vmatpush.bf16.msra.mxu0 0
      %1436 = vmatpush.bf16.msra.mxu0 %v1378
      %1437 = vmatmul.bf16.gmra.mxu0 %v1382
      %v1438 = vpop.f32.mrf.mxu0
      %v1439 = vadd.f32 0.0, %v1438
      %v1440 = vpop.f32.mrf.mxu0
      %v1441 = vadd.f32 0.0, %v1440
      %1442 = vmatmul.bf16.gmra.mxu0 %v1385
      %v1443 = vpop.f32.mrf.mxu0
      %v1444 = vadd.f32 0.0, %v1443
      %v1445 = vpop.f32.mrf.mxu0
      %v1446 = vadd.f32 0.0, %v1445
      %1447 = vmatmul.bf16.gmra.mxu0 %v1388
      %v1448 = vpop.f32.mrf.mxu0
      %v1449 = vadd.f32 0.0, %v1448
      %v1450 = vpop.f32.mrf.mxu0
      %v1451 = vadd.f32 0.0, %v1450
      %1452 = vmatmul.bf16.gmra.mxu0 %v1391
      %v1453 = vpop.f32.mrf.mxu0
      %v1454 = vadd.f32 0.0, %v1453
      %v1455 = vpop.f32.mrf.mxu0
      %v1456 = vadd.f32 0.0, %v1455
      %1457 = vmatmul.bf16.gmra.mxu0 %v1394
      %v1458 = vpop.f32.mrf.mxu0
      %v1459 = vadd.f32 0.0, %v1458
      %v1460 = vpop.f32.mrf.mxu0
      %v1461 = vadd.f32 0.0, %v1460
      %1462 = vmatmul.bf16.gmra.mxu0 %v1397
      %v1463 = vpop.f32.mrf.mxu0
      %v1464 = vadd.f32 0.0, %v1463
      %v1465 = vpop.f32.mrf.mxu0
      %v1466 = vadd.f32 0.0, %v1465
      %1467 = vmatmul.bf16.gmra.mxu0 %v1400
      %v1468 = vpop.f32.mrf.mxu0
      %v1469 = vadd.f32 0.0, %v1468
      %v1470 = vpop.f32.mrf.mxu0
      %v1471 = vadd.f32 0.0, %v1470
      %1472 = vmatmul.bf16.gmra.mxu0 %v1403
      %v1473 = vpop.f32.mrf.mxu0
      %v1474 = vadd.f32 0.0, %v1473
      %v1475 = vpop.f32.mrf.mxu0
      %v1476 = vadd.f32 0.0, %v1475
      %1477 = vmatmul.bf16.gmra.mxu0 %v1406
      %v1478 = vpop.f32.mrf.mxu0
      %v1479 = vadd.f32 0.0, %v1478
      %v1480 = vpop.f32.mrf.mxu0
      %v1481 = vadd.f32 0.0, %v1480
      %1482 = vmatmul.bf16.gmra.mxu0 %v1409
      %v1483 = vpop.f32.mrf.mxu0
      %v1484 = vadd.f32 0.0, %v1483
      %v1485 = vpop.f32.mrf.mxu0
      %v1486 = vadd.f32 0.0, %v1485
      %1487 = vmatmul.bf16.gmra.mxu0 %v1412
      %v1488 = vpop.f32.mrf.mxu0
      %v1489 = vadd.f32 0.0, %v1488
      %v1490 = vpop.f32.mrf.mxu0
      %v1491 = vadd.f32 0.0, %v1490
      %1492 = vmatmul.bf16.gmra.mxu0 %v1415
      %v1493 = vpop.f32.mrf.mxu0
      %v1494 = vadd.f32 0.0, %v1493
      %v1495 = vpop.f32.mrf.mxu0
      %v1496 = vadd.f32 0.0, %v1495
      %1497 = vmatmul.bf16.gmra.mxu0 %v1418
      %v1498 = vpop.f32.mrf.mxu0
      %v1499 = vadd.f32 0.0, %v1498
      %v1500 = vpop.f32.mrf.mxu0
      %v1501 = vadd.f32 0.0, %v1500
      %1502 = vmatmul.bf16.gmra.mxu0 %v1421
      %v1503 = vpop.f32.mrf.mxu0
      %v1504 = vadd.f32 0.0, %v1503
      %v1505 = vpop.f32.mrf.mxu0
      %v1506 = vadd.f32 0.0, %v1505
      %1507 = vmatmul.bf16.gmra.mxu0 %v1424
      %v1508 = vpop.f32.mrf.mxu0
      %v1509 = vadd.f32 0.0, %v1508
      %v1510 = vpop.f32.mrf.mxu0
      %v1511 = vadd.f32 0.0, %v1510
      %1512 = vmatmul.bf16.gmra.mxu0 %v1427
      %v1513 = vpop.f32.mrf.mxu0
      %v1514 = vadd.f32 0.0, %v1513
      %v1515 = vpop.f32.mrf.mxu0
      %v1516 = vadd.f32 0.0, %v1515
      %1517 = vdwg.mxu0
      %v1550 = vunpack.c.l.b16 %v880
      %v1551 = vunpack.c.l.b16 %v881
      %v1552 = vunpack.c.l.b16 %v882
      %v1553 = vunpack.c.l.b16 %v883
      %v1554 = vunpack.c.l.b16 %v884
      %v1555 = vunpack.c.l.b16 %v885
      %v1556 = vunpack.c.l.b16 %v886
      %v1557 = vunpack.c.l.b16 %v887
      %v1558 = vunpack.c.l.b16 %v888
      %v1559 = vunpack.c.l.b16 %v889
      %v1560 = vunpack.c.l.b16 %v890
      %v1561 = vunpack.c.l.b16 %v891
      %v1562 = vunpack.c.l.b16 %v892
      %v1563 = vunpack.c.l.b16 %v893
      %v1564 = vunpack.c.l.b16 %v894
      %v1565 = vunpack.c.l.b16 %v895
      %v1566 = vunpack.c.l.b16 %v896
      %v1567 = vunpack.c.l.b16 %v897
      %v1568 = vunpack.c.l.b16 %v898
      %v1569 = vunpack.c.l.b16 %v899
      %v1570 = vunpack.c.l.b16 %v900
      %v1571 = vunpack.c.l.b16 %v901
      %v1572 = vunpack.c.l.b16 %v902
      %v1573 = vunpack.c.l.b16 %v903
      %v1574 = vunpack.c.l.b16 %v904
      %v1575 = vunpack.c.l.b16 %v905
      %v1576 = vunpack.c.l.b16 %v906
      %v1577 = vunpack.c.l.b16 %v907
      %v1578 = vunpack.c.l.b16 %v908
      %v1579 = vunpack.c.l.b16 %v909
      %v1580 = vunpack.c.l.b16 %v910
      %v1581 = vunpack.c.l.b16 %v911
      %v1582 = vpack.c.b16 %v1551, %v1550
      %v1583 = vpack.c.b16 %v1553, %v1552
      %v1584 = vpack.c.b16 %v1555, %v1554
      %v1585 = vpack.c.b16 %v1557, %v1556
      %v1586 = vpack.c.b16 %v1559, %v1558
      %v1587 = vpack.c.b16 %v1561, %v1560
      %v1588 = vpack.c.b16 %v1563, %v1562
      %v1589 = vpack.c.b16 %v1565, %v1564
      %v1590 = vpack.c.b16 %v1567, %v1566
      %v1591 = vpack.c.b16 %v1569, %v1568
      %v1592 = vpack.c.b16 %v1571, %v1570
      %v1593 = vpack.c.b16 %v1573, %v1572
      %v1594 = vpack.c.b16 %v1575, %v1574
      %v1595 = vpack.c.b16 %v1577, %v1576
      %v1596 = vpack.c.b16 %v1579, %v1578
      %v1597 = vpack.c.b16 %v1581, %v1580
      %v1600 = vunpack.c.l.b16 %v934
      %v1601 = vunpack.c.l.b16 %v935
      %v1602 = vpack.c.b16 %v1601, %v1600
      %v1605 = vsel %vm1380, %v1582, 0
      %v1608 = vsel %vm1380, %v1583, 0
      %v1611 = vsel %vm1380, %v1584, 0
      %v1614 = vsel %vm1380, %v1585, 0
      %v1617 = vsel %vm1380, %v1586, 0
      %v1620 = vsel %vm1380, %v1587, 0
      %v1623 = vsel %vm1380, %v1588, 0
      %v1626 = vsel %vm1380, %v1589, 0
      %v1629 = vsel %vm1380, %v1590, 0
      %v1632 = vsel %vm1380, %v1591, 0
      %v1635 = vsel %vm1380, %v1592, 0
      %v1638 = vsel %vm1380, %v1593, 0
      %v1641 = vsel %vm1380, %v1594, 0
      %v1644 = vsel %vm1380, %v1595, 0
      %v1647 = vsel %vm1380, %v1596, 0
      %v1650 = vsel %vm1380, %v1597, 0
      %1652 = vmatpush.bf16.msra.mxu0 0
      %1653 = vmatpush.bf16.msra.mxu0 0
      %1654 = vmatpush.bf16.msra.mxu0 0
      %1655 = vmatpush.bf16.msra.mxu0 0
      %1656 = vmatpush.bf16.msra.mxu0 0
      %1657 = vmatpush.bf16.msra.mxu0 0
      %1658 = vmatpush.bf16.msra.mxu0 0
      %1659 = vmatpush.bf16.msra.mxu0 %v1602
      %1660 = vmatmul.bf16.gmra.mxu0 %v1605
      %v1661 = vpop.f32.mrf.mxu0
      %v1662 = vadd.f32 %v1439, %v1661
      %v1663 = vpop.f32.mrf.mxu0
      %v1664 = vadd.f32 %v1441, %v1663
      %1665 = vmatmul.bf16.gmra.mxu0 %v1608
      %v1666 = vpop.f32.mrf.mxu0
      %v1667 = vadd.f32 %v1444, %v1666
      %v1668 = vpop.f32.mrf.mxu0
      %v1669 = vadd.f32 %v1446, %v1668
      %1670 = vmatmul.bf16.gmra.mxu0 %v1611
      %v1671 = vpop.f32.mrf.mxu0
      %v1672 = vadd.f32 %v1449, %v1671
      %v1673 = vpop.f32.mrf.mxu0
      %v1674 = vadd.f32 %v1451, %v1673
      %1675 = vmatmul.bf16.gmra.mxu0 %v1614
      %v1676 = vpop.f32.mrf.mxu0
      %v1677 = vadd.f32 %v1454, %v1676
      %v1678 = vpop.f32.mrf.mxu0
      %v1679 = vadd.f32 %v1456, %v1678
      %1680 = vmatmul.bf16.gmra.mxu0 %v1617
      %v1681 = vpop.f32.mrf.mxu0
      %v1682 = vadd.f32 %v1459, %v1681
      %v1683 = vpop.f32.mrf.mxu0
      %v1684 = vadd.f32 %v1461, %v1683
      %1685 = vmatmul.bf16.gmra.mxu0 %v1620
      %v1686 = vpop.f32.mrf.mxu0
      %v1687 = vadd.f32 %v1464, %v1686
      %v1688 = vpop.f32.mrf.mxu0
      %v1689 = vadd.f32 %v1466, %v1688
      %1690 = vmatmul.bf16.gmra.mxu0 %v1623
      %v1691 = vpop.f32.mrf.mxu0
      %v1692 = vadd.f32 %v1469, %v1691
      %v1693 = vpop.f32.mrf.mxu0
      %v1694 = vadd.f32 %v1471, %v1693
      %1695 = vmatmul.bf16.gmra.mxu0 %v1626
      %v1696 = vpop.f32.mrf.mxu0
      %v1697 = vadd.f32 %v1474, %v1696
      %v1698 = vpop.f32.mrf.mxu0
      %v1699 = vadd.f32 %v1476, %v1698
      %1700 = vmatmul.bf16.gmra.mxu0 %v1629
      %v1701 = vpop.f32.mrf.mxu0
      %v1702 = vadd.f32 %v1479, %v1701
      %v1703 = vpop.f32.mrf.mxu0
      %v1704 = vadd.f32 %v1481, %v1703
      %1705 = vmatmul.bf16.gmra.mxu0 %v1632
      %v1706 = vpop.f32.mrf.mxu0
      %v1707 = vadd.f32 %v1484, %v1706
      %v1708 = vpop.f32.mrf.mxu0
      %v1709 = vadd.f32 %v1486, %v1708
      %1710 = vmatmul.bf16.gmra.mxu0 %v1635
      %v1711 = vpop.f32.mrf.mxu0
      %v1712 = vadd.f32 %v1489, %v1711
      %v1713 = vpop.f32.mrf.mxu0
      %v1714 = vadd.f32 %v1491, %v1713
      %1715 = vmatmul.bf16.gmra.mxu0 %v1638
      %v1716 = vpop.f32.mrf.mxu0
      %v1717 = vadd.f32 %v1494, %v1716
      %v1718 = vpop.f32.mrf.mxu0
      %v1719 = vadd.f32 %v1496, %v1718
      %1720 = vmatmul.bf16.gmra.mxu0 %v1641
      %v1721 = vpop.f32.mrf.mxu0
      %v1722 = vadd.f32 %v1499, %v1721
      %v1723 = vpop.f32.mrf.mxu0
      %v1724 = vadd.f32 %v1501, %v1723
      %1725 = vmatmul.bf16.gmra.mxu0 %v1644
      %v1726 = vpop.f32.mrf.mxu0
      %v1727 = vadd.f32 %v1504, %v1726
      %v1728 = vpop.f32.mrf.mxu0
      %v1729 = vadd.f32 %v1506, %v1728
      %1730 = vmatmul.bf16.gmra.mxu0 %v1647
      %v1731 = vpop.f32.mrf.mxu0
      %v1732 = vadd.f32 %v1509, %v1731
      %v1733 = vpop.f32.mrf.mxu0
      %v1734 = vadd.f32 %v1511, %v1733
      %1735 = vmatmul.bf16.gmra.mxu0 %v1650
      %v1736 = vpop.f32.mrf.mxu0
      %v1737 = vadd.f32 %v1514, %v1736
      %v1738 = vpop.f32.mrf.mxu0
      %v1739 = vadd.f32 %v1516, %v1738
      %1740 = vdwg.mxu0
      %vm1757 = vcmask 1042432
      %vm1758 = vcmask 1046532
      %vm1759 = vmor %vm1757, %vm1758
      %v1760 = vrot.slane %v880, 5
      %v1761 = vrot.slane %v1760, 4
      %v1762 = vrot.slane %v881, 5
      %v1763 = vsel %vm1759, %v1761, %v1762
      %v1764 = vrot.slane %v1762, 4
      %v1765 = vrot.slane %v916, 5
      %v1766 = vsel %vm1759, %v1764, %v1765
      %v1767 = vrot.slane %v882, 5
      %v1768 = vrot.slane %v1767, 4
      %v1769 = vrot.slane %v883, 5
      %v1770 = vsel %vm1759, %v1768, %v1769
      %v1771 = vrot.slane %v1769, 4
      %v1772 = vrot.slane %v917, 5
      %v1773 = vsel %vm1759, %v1771, %v1772
      %v1774 = vrot.slane %v884, 5
      %v1775 = vrot.slane %v1774, 4
      %v1776 = vrot.slane %v885, 5
      %v1777 = vsel %vm1759, %v1775, %v1776
      %v1778 = vrot.slane %v1776, 4
      %v1779 = vrot.slane %v918, 5
      %v1780 = vsel %vm1759, %v1778, %v1779
      %v1781 = vrot.slane %v886, 5
      %v1782 = vrot.slane %v1781, 4
      %v1783 = vrot.slane %v887, 5
      %v1784 = vsel %vm1759, %v1782, %v1783
      %v1785 = vrot.slane %v1783, 4
      %v1786 = vrot.slane %v919, 5
      %v1787 = vsel %vm1759, %v1785, %v1786
      %v1788 = vrot.slane %v888, 5
      %v1789 = vrot.slane %v1788, 4
      %v1790 = vrot.slane %v889, 5
      %v1791 = vsel %vm1759, %v1789, %v1790
      %v1792 = vrot.slane %v1790, 4
      %v1793 = vrot.slane %v920, 5
      %v1794 = vsel %vm1759, %v1792, %v1793
      %v1795 = vrot.slane %v890, 5
      %v1796 = vrot.slane %v1795, 4
      %v1797 = vrot.slane %v891, 5
      %v1798 = vsel %vm1759, %v1796, %v1797
      %v1799 = vrot.slane %v1797, 4
      %v1800 = vrot.slane %v921, 5
      %v1801 = vsel %vm1759, %v1799, %v1800
      %v1802 = vrot.slane %v892, 5
      %v1803 = vrot.slane %v1802, 4
      %v1804 = vrot.slane %v893, 5
      %v1805 = vsel %vm1759, %v1803, %v1804
      %v1806 = vrot.slane %v1804, 4
      %v1807 = vrot.slane %v922, 5
      %v1808 = vsel %vm1759, %v1806, %v1807
      %v1809 = vrot.slane %v894, 5
      %v1810 = vrot.slane %v1809, 4
      %v1811 = vrot.slane %v895, 5
      %v1812 = vsel %vm1759, %v1810, %v1811
      %v1813 = vrot.slane %v1811, 4
      %v1814 = vrot.slane %v923, 5
      %v1815 = vsel %vm1759, %v1813, %v1814
      %v1816 = vrot.slane %v896, 5
      %v1817 = vrot.slane %v1816, 4
      %v1818 = vrot.slane %v897, 5
      %v1819 = vsel %vm1759, %v1817, %v1818
      %v1820 = vrot.slane %v1818, 4
      %v1821 = vrot.slane %v924, 5
      %v1822 = vsel %vm1759, %v1820, %v1821
      %v1823 = vrot.slane %v898, 5
      %v1824 = vrot.slane %v1823, 4
      %v1825 = vrot.slane %v899, 5
      %v1826 = vsel %vm1759, %v1824, %v1825
      %v1827 = vrot.slane %v1825, 4
      %v1828 = vrot.slane %v925, 5
      %v1829 = vsel %vm1759, %v1827, %v1828
      %v1830 = vrot.slane %v900, 5
      %v1831 = vrot.slane %v1830, 4
      %v1832 = vrot.slane %v901, 5
      %v1833 = vsel %vm1759, %v1831, %v1832
      %v1834 = vrot.slane %v1832, 4
      %v1835 = vrot.slane %v926, 5
      %v1836 = vsel %vm1759, %v1834, %v1835
      %v1837 = vrot.slane %v902, 5
      %v1838 = vrot.slane %v1837, 4
      %v1839 = vrot.slane %v903, 5
      %v1840 = vsel %vm1759, %v1838, %v1839
      %v1841 = vrot.slane %v1839, 4
      %v1842 = vrot.slane %v927, 5
      %v1843 = vsel %vm1759, %v1841, %v1842
      %v1844 = vrot.slane %v904, 5
      %v1845 = vrot.slane %v1844, 4
      %v1846 = vrot.slane %v905, 5
      %v1847 = vsel %vm1759, %v1845, %v1846
      %v1848 = vrot.slane %v1846, 4
      %v1849 = vrot.slane %v928, 5
      %v1850 = vsel %vm1759, %v1848, %v1849
      %v1851 = vrot.slane %v906, 5
      %v1852 = vrot.slane %v1851, 4
      %v1853 = vrot.slane %v907, 5
      %v1854 = vsel %vm1759, %v1852, %v1853
      %v1855 = vrot.slane %v1853, 4
      %v1856 = vrot.slane %v929, 5
      %v1857 = vsel %vm1759, %v1855, %v1856
      %v1858 = vrot.slane %v908, 5
      %v1859 = vrot.slane %v1858, 4
      %v1860 = vrot.slane %v909, 5
      %v1861 = vsel %vm1759, %v1859, %v1860
      %v1862 = vrot.slane %v1860, 4
      %v1863 = vrot.slane %v930, 5
      %v1864 = vsel %vm1759, %v1862, %v1863
      %v1865 = vrot.slane %v910, 5
      %v1866 = vrot.slane %v1865, 4
      %v1867 = vrot.slane %v911, 5
      %v1868 = vsel %vm1759, %v1866, %v1867
      %v1869 = vrot.slane %v1867, 4
      %v1870 = vrot.slane %v931, 5
      %v1871 = vsel %vm1759, %v1869, %v1870
      %s1872 = scalar_lea.vmem %s5, 16
      %v1873 = vld [vmem:[%s1872] sm:$0xf]
      %v1874 = vld [vmem:[%s1872 + $0x4] sm:$0xf]
      %v1875 = vunpack.c.l.b16 %v1763
      %v1876 = vunpack.c.l.b16 %v1766
      %v1877 = vunpack.c.l.b16 %v1770
      %v1878 = vunpack.c.l.b16 %v1773
      %v1879 = vunpack.c.l.b16 %v1777
      %v1880 = vunpack.c.l.b16 %v1780
      %v1881 = vunpack.c.l.b16 %v1784
      %v1882 = vunpack.c.l.b16 %v1787
      %v1883 = vunpack.c.l.b16 %v1791
      %v1884 = vunpack.c.l.b16 %v1794
      %v1885 = vunpack.c.l.b16 %v1798
      %v1886 = vunpack.c.l.b16 %v1801
      %v1887 = vunpack.c.l.b16 %v1805
      %v1888 = vunpack.c.l.b16 %v1808
      %v1889 = vunpack.c.l.b16 %v1812
      %v1890 = vunpack.c.l.b16 %v1815
      %v1891 = vunpack.c.l.b16 %v1819
      %v1892 = vunpack.c.l.b16 %v1822
      %v1893 = vunpack.c.l.b16 %v1826
      %v1894 = vunpack.c.l.b16 %v1829
      %v1895 = vunpack.c.l.b16 %v1833
      %v1896 = vunpack.c.l.b16 %v1836
      %v1897 = vunpack.c.l.b16 %v1840
      %v1898 = vunpack.c.l.b16 %v1843
      %v1899 = vunpack.c.l.b16 %v1847
      %v1900 = vunpack.c.l.b16 %v1850
      %v1901 = vunpack.c.l.b16 %v1854
      %v1902 = vunpack.c.l.b16 %v1857
      %v1903 = vunpack.c.l.b16 %v1861
      %v1904 = vunpack.c.l.b16 %v1864
      %v1905 = vunpack.c.l.b16 %v1868
      %v1906 = vunpack.c.l.b16 %v1871
      %v1907 = vpack.c.b16 %v1876, %v1875
      %v1908 = vpack.c.b16 %v1878, %v1877
      %v1909 = vpack.c.b16 %v1880, %v1879
      %v1910 = vpack.c.b16 %v1882, %v1881
      %v1911 = vpack.c.b16 %v1884, %v1883
      %v1912 = vpack.c.b16 %v1886, %v1885
      %v1913 = vpack.c.b16 %v1888, %v1887
      %v1914 = vpack.c.b16 %v1890, %v1889
      %v1915 = vpack.c.b16 %v1892, %v1891
      %v1916 = vpack.c.b16 %v1894, %v1893
      %v1917 = vpack.c.b16 %v1896, %v1895
      %v1918 = vpack.c.b16 %v1898, %v1897
      %v1919 = vpack.c.b16 %v1900, %v1899
      %v1920 = vpack.c.b16 %v1902, %v1901
      %v1921 = vpack.c.b16 %v1904, %v1903
      %v1922 = vpack.c.b16 %v1906, %v1905
      %v1925 = vunpack.c.l.b16 %v1873
      %v1926 = vunpack.c.l.b16 %v1874
      %v1927 = vpack.c.b16 %v1926, %v1925
      %v1930 = vsel %vm1380, %v1907, 0
      %v1933 = vsel %vm1380, %v1908, 0
      %v1936 = vsel %vm1380, %v1909, 0
      %v1939 = vsel %vm1380, %v1910, 0
      %v1942 = vsel %vm1380, %v1911, 0
      %v1945 = vsel %vm1380, %v1912, 0
      %v1948 = vsel %vm1380, %v1913, 0
      %v1951 = vsel %vm1380, %v1914, 0
      %v1954 = vsel %vm1380, %v1915, 0
      %v1957 = vsel %vm1380, %v1916, 0
      %v1960 = vsel %vm1380, %v1917, 0
      %v1963 = vsel %vm1380, %v1918, 0
      %v1966 = vsel %vm1380, %v1919, 0
      %v1969 = vsel %vm1380, %v1920, 0
      %v1972 = vsel %vm1380, %v1921, 0
      %v1975 = vsel %vm1380, %v1922, 0
      %1977 = vmatpush.bf16.msra.mxu0 0
      %1978 = vmatpush.bf16.msra.mxu0 0
      %1979 = vmatpush.bf16.msra.mxu0 0
      %1980 = vmatpush.bf16.msra.mxu0 0
      %1981 = vmatpush.bf16.msra.mxu0 0
      %1982 = vmatpush.bf16.msra.mxu0 0
      %1983 = vmatpush.bf16.msra.mxu0 0
      %1984 = vmatpush.bf16.msra.mxu0 %v1927
      %1985 = vmatmul.bf16.gmra.mxu0 %v1930
      %v1986 = vpop.f32.mrf.mxu0
      %v1987 = vadd.f32 0.0, %v1986
      %v1988 = vpop.f32.mrf.mxu0
      %v1989 = vadd.f32 0.0, %v1988
      %1990 = vmatmul.bf16.gmra.mxu0 %v1933
      %v1991 = vpop.f32.mrf.mxu0
      %v1992 = vadd.f32 0.0, %v1991
      %v1993 = vpop.f32.mrf.mxu0
      %v1994 = vadd.f32 0.0, %v1993
      %1995 = vmatmul.bf16.gmra.mxu0 %v1936
      %v1996 = vpop.f32.mrf.mxu0
      %v1997 = vadd.f32 0.0, %v1996
      %v1998 = vpop.f32.mrf.mxu0
      %v1999 = vadd.f32 0.0, %v1998
      %2000 = vmatmul.bf16.gmra.mxu0 %v1939
      %v2001 = vpop.f32.mrf.mxu0
      %v2002 = vadd.f32 0.0, %v2001
      %v2003 = vpop.f32.mrf.mxu0
      %v2004 = vadd.f32 0.0, %v2003
      %2005 = vmatmul.bf16.gmra.mxu0 %v1942
      %v2006 = vpop.f32.mrf.mxu0
      %v2007 = vadd.f32 0.0, %v2006
      %v2008 = vpop.f32.mrf.mxu0
      %v2009 = vadd.f32 0.0, %v2008
      %2010 = vmatmul.bf16.gmra.mxu0 %v1945
      %v2011 = vpop.f32.mrf.mxu0
      %v2012 = vadd.f32 0.0, %v2011
      %v2013 = vpop.f32.mrf.mxu0
      %v2014 = vadd.f32 0.0, %v2013
      %2015 = vmatmul.bf16.gmra.mxu0 %v1948
      %v2016 = vpop.f32.mrf.mxu0
      %v2017 = vadd.f32 0.0, %v2016
      %v2018 = vpop.f32.mrf.mxu0
      %v2019 = vadd.f32 0.0, %v2018
      %2020 = vmatmul.bf16.gmra.mxu0 %v1951
      %v2021 = vpop.f32.mrf.mxu0
      %v2022 = vadd.f32 0.0, %v2021
      %v2023 = vpop.f32.mrf.mxu0
      %v2024 = vadd.f32 0.0, %v2023
      %2025 = vmatmul.bf16.gmra.mxu0 %v1954
      %v2026 = vpop.f32.mrf.mxu0
      %v2027 = vadd.f32 0.0, %v2026
      %v2028 = vpop.f32.mrf.mxu0
      %v2029 = vadd.f32 0.0, %v2028
      %2030 = vmatmul.bf16.gmra.mxu0 %v1957
      %v2031 = vpop.f32.mrf.mxu0
      %v2032 = vadd.f32 0.0, %v2031
      %v2033 = vpop.f32.mrf.mxu0
      %v2034 = vadd.f32 0.0, %v2033
      %2035 = vmatmul.bf16.gmra.mxu0 %v1960
      %v2036 = vpop.f32.mrf.mxu0
      %v2037 = vadd.f32 0.0, %v2036
      %v2038 = vpop.f32.mrf.mxu0
      %v2039 = vadd.f32 0.0, %v2038
      %2040 = vmatmul.bf16.gmra.mxu0 %v1963
      %v2041 = vpop.f32.mrf.mxu0
      %v2042 = vadd.f32 0.0, %v2041
      %v2043 = vpop.f32.mrf.mxu0
      %v2044 = vadd.f32 0.0, %v2043
      %2045 = vmatmul.bf16.gmra.mxu0 %v1966
      %v2046 = vpop.f32.mrf.mxu0
      %v2047 = vadd.f32 0.0, %v2046
      %v2048 = vpop.f32.mrf.mxu0
      %v2049 = vadd.f32 0.0, %v2048
      %2050 = vmatmul.bf16.gmra.mxu0 %v1969
      %v2051 = vpop.f32.mrf.mxu0
      %v2052 = vadd.f32 0.0, %v2051
      %v2053 = vpop.f32.mrf.mxu0
      %v2054 = vadd.f32 0.0, %v2053
      %2055 = vmatmul.bf16.gmra.mxu0 %v1972
      %v2056 = vpop.f32.mrf.mxu0
      %v2057 = vadd.f32 0.0, %v2056
      %v2058 = vpop.f32.mrf.mxu0
      %v2059 = vadd.f32 0.0, %v2058
      %2060 = vmatmul.bf16.gmra.mxu0 %v1975
      %v2061 = vpop.f32.mrf.mxu0
      %v2062 = vadd.f32 0.0, %v2061
      %v2063 = vpop.f32.mrf.mxu0
      %v2064 = vadd.f32 0.0, %v2063
      %2065 = vdwg.mxu0
      %v2066 = vadd.f32 %v1662, %v1987
      %v2067 = vadd.f32 %v1664, %v1989
      %v2068 = vadd.f32 %v1667, %v1992
      %v2069 = vadd.f32 %v1669, %v1994
      %v2070 = vadd.f32 %v1672, %v1997
      %v2071 = vadd.f32 %v1674, %v1999
      %v2072 = vadd.f32 %v1677, %v2002
      %v2073 = vadd.f32 %v1679, %v2004
      %v2074 = vadd.f32 %v1682, %v2007
      %v2075 = vadd.f32 %v1684, %v2009
      %v2076 = vadd.f32 %v1687, %v2012
      %v2077 = vadd.f32 %v1689, %v2014
      %v2078 = vadd.f32 %v1692, %v2017
      %v2079 = vadd.f32 %v1694, %v2019
      %v2080 = vadd.f32 %v1697, %v2022
      %v2081 = vadd.f32 %v1699, %v2024
      %v2082 = vadd.f32 %v1702, %v2027
      %v2083 = vadd.f32 %v1704, %v2029
      %v2084 = vadd.f32 %v1707, %v2032
      %v2085 = vadd.f32 %v1709, %v2034
      %v2086 = vadd.f32 %v1712, %v2037
      %v2087 = vadd.f32 %v1714, %v2039
      %v2088 = vadd.f32 %v1717, %v2042
      %v2089 = vadd.f32 %v1719, %v2044
      %v2090 = vadd.f32 %v1722, %v2047
      %v2091 = vadd.f32 %v1724, %v2049
      %v2092 = vadd.f32 %v1727, %v2052
      %v2093 = vadd.f32 %v1729, %v2054
      %v2094 = vadd.f32 %v1732, %v2057
      %v2095 = vadd.f32 %v1734, %v2059
      %v2096 = vadd.f32 %v1737, %v2062
      %v2097 = vadd.f32 %v1739, %v2064
      %s2098 = scalar_lea.vmem %s5, 24
      %v2099 = vld [vmem:[%s2098] sm:$0xf]
      %v2100 = vld [vmem:[%s2098 + $0x4] sm:$0xf]
      %v2103 = vunpack.c.l.b16 %v912
      %v2104 = vunpack.c.l.b16 %v913
      %v2105 = vpack.c.b16 %v2104, %v2103
      %v2108 = vunpack.c.l.b16 %v2099
      %v2109 = vunpack.c.l.b16 %v2100
      %v2110 = vpack.c.b16 %v2109, %v2108
      %v2113 = vsel %vm1380, %v2105, 0
      %2115 = vmatpush.bf16.msra.mxu0 0
      %2116 = vmatpush.bf16.msra.mxu0 0
      %2117 = vmatpush.bf16.msra.mxu0 0
      %2118 = vmatpush.bf16.msra.mxu0 0
      %2119 = vmatpush.bf16.msra.mxu0 0
      %2120 = vmatpush.bf16.msra.mxu0 0
      %2121 = vmatpush.bf16.msra.mxu0 0
      %2122 = vmatpush.bf16.msra.mxu0 %v2110
      %2123 = vmatmul.bf16.gmra.mxu0 %v1608
      %v2124 = vpop.f32.mrf.mxu0
      %v2125 = vadd.f32 0.0, %v2124
      %v2126 = vpop.f32.mrf.mxu0
      %v2127 = vadd.f32 0.0, %v2126
      %2128 = vmatmul.bf16.gmra.mxu0 %v1611
      %v2129 = vpop.f32.mrf.mxu0
      %v2130 = vadd.f32 0.0, %v2129
      %v2131 = vpop.f32.mrf.mxu0
      %v2132 = vadd.f32 0.0, %v2131
      %2133 = vmatmul.bf16.gmra.mxu0 %v1614
      %v2134 = vpop.f32.mrf.mxu0
      %v2135 = vadd.f32 0.0, %v2134
      %v2136 = vpop.f32.mrf.mxu0
      %v2137 = vadd.f32 0.0, %v2136
      %2138 = vmatmul.bf16.gmra.mxu0 %v1617
      %v2139 = vpop.f32.mrf.mxu0
      %v2140 = vadd.f32 0.0, %v2139
      %v2141 = vpop.f32.mrf.mxu0
      %v2142 = vadd.f32 0.0, %v2141
      %2143 = vmatmul.bf16.gmra.mxu0 %v1620
      %v2144 = vpop.f32.mrf.mxu0
      %v2145 = vadd.f32 0.0, %v2144
      %v2146 = vpop.f32.mrf.mxu0
      %v2147 = vadd.f32 0.0, %v2146
      %2148 = vmatmul.bf16.gmra.mxu0 %v1623
      %v2149 = vpop.f32.mrf.mxu0
      %v2150 = vadd.f32 0.0, %v2149
      %v2151 = vpop.f32.mrf.mxu0
      %v2152 = vadd.f32 0.0, %v2151
      %2153 = vmatmul.bf16.gmra.mxu0 %v1626
      %v2154 = vpop.f32.mrf.mxu0
      %v2155 = vadd.f32 0.0, %v2154
      %v2156 = vpop.f32.mrf.mxu0
      %v2157 = vadd.f32 0.0, %v2156
      %2158 = vmatmul.bf16.gmra.mxu0 %v1629
      %v2159 = vpop.f32.mrf.mxu0
      %v2160 = vadd.f32 0.0, %v2159
      %v2161 = vpop.f32.mrf.mxu0
      %v2162 = vadd.f32 0.0, %v2161
      %2163 = vmatmul.bf16.gmra.mxu0 %v1632
      %v2164 = vpop.f32.mrf.mxu0
      %v2165 = vadd.f32 0.0, %v2164
      %v2166 = vpop.f32.mrf.mxu0
      %v2167 = vadd.f32 0.0, %v2166
      %2168 = vmatmul.bf16.gmra.mxu0 %v1635
      %v2169 = vpop.f32.mrf.mxu0
      %v2170 = vadd.f32 0.0, %v2169
      %v2171 = vpop.f32.mrf.mxu0
      %v2172 = vadd.f32 0.0, %v2171
      %2173 = vmatmul.bf16.gmra.mxu0 %v1638
      %v2174 = vpop.f32.mrf.mxu0
      %v2175 = vadd.f32 0.0, %v2174
      %v2176 = vpop.f32.mrf.mxu0
      %v2177 = vadd.f32 0.0, %v2176
      %2178 = vmatmul.bf16.gmra.mxu0 %v1641
      %v2179 = vpop.f32.mrf.mxu0
      %v2180 = vadd.f32 0.0, %v2179
      %v2181 = vpop.f32.mrf.mxu0
      %v2182 = vadd.f32 0.0, %v2181
      %2183 = vmatmul.bf16.gmra.mxu0 %v1644
      %v2184 = vpop.f32.mrf.mxu0
      %v2185 = vadd.f32 0.0, %v2184
      %v2186 = vpop.f32.mrf.mxu0
      %v2187 = vadd.f32 0.0, %v2186
      %2188 = vmatmul.bf16.gmra.mxu0 %v1647
      %v2189 = vpop.f32.mrf.mxu0
      %v2190 = vadd.f32 0.0, %v2189
      %v2191 = vpop.f32.mrf.mxu0
      %v2192 = vadd.f32 0.0, %v2191
      %2193 = vmatmul.bf16.gmra.mxu0 %v1650
      %v2194 = vpop.f32.mrf.mxu0
      %v2195 = vadd.f32 0.0, %v2194
      %v2196 = vpop.f32.mrf.mxu0
      %v2197 = vadd.f32 0.0, %v2196
      %2198 = vmatmul.bf16.gmra.mxu0 %v2113
      %v2199 = vpop.f32.mrf.mxu0
      %v2200 = vadd.f32 0.0, %v2199
      %v2201 = vpop.f32.mrf.mxu0
      %v2202 = vadd.f32 0.0, %v2201
      %2203 = vdwg.mxu0
      %v2204 = vadd.f32 %v2066, %v2125
      %v2205 = vadd.f32 %v2067, %v2127
      %v2206 = vadd.f32 %v2068, %v2130
      %v2207 = vadd.f32 %v2069, %v2132
      %v2208 = vadd.f32 %v2070, %v2135
      %v2209 = vadd.f32 %v2071, %v2137
      %v2210 = vadd.f32 %v2072, %v2140
      %v2211 = vadd.f32 %v2073, %v2142
      %v2212 = vadd.f32 %v2074, %v2145
      %v2213 = vadd.f32 %v2075, %v2147
      %v2214 = vadd.f32 %v2076, %v2150
      %v2215 = vadd.f32 %v2077, %v2152
      %v2216 = vadd.f32 %v2078, %v2155
      %v2217 = vadd.f32 %v2079, %v2157
      %v2218 = vadd.f32 %v2080, %v2160
      %v2219 = vadd.f32 %v2081, %v2162
      %v2220 = vadd.f32 %v2082, %v2165
      %v2221 = vadd.f32 %v2083, %v2167
      %v2222 = vadd.f32 %v2084, %v2170
      %v2223 = vadd.f32 %v2085, %v2172
      %v2224 = vadd.f32 %v2086, %v2175
      %v2225 = vadd.f32 %v2087, %v2177
      %v2226 = vadd.f32 %v2088, %v2180
      %v2227 = vadd.f32 %v2089, %v2182
      %v2228 = vadd.f32 %v2090, %v2185
      %v2229 = vadd.f32 %v2091, %v2187
      %v2230 = vadd.f32 %v2092, %v2190
      %v2231 = vadd.f32 %v2093, %v2192
      %v2232 = vadd.f32 %v2094, %v2195
      %v2233 = vadd.f32 %v2095, %v2197
      %v2234 = vadd.f32 %v2096, %v2200
      %v2235 = vadd.f32 %v2097, %v2202
      %v2237 = vshrl.u32 %v912, 16
      %v2239 = vrot.slane %v2237, 4
      %v2240 = vshll.u32 %v912, 16
      %v2242 = vrot.slane %v2240, 5
      %v2243 = vor.u32 %v2239, %v2242
      %v2244 = vrot.slane %v2243, 4
      %v2246 = vshll.u32 %v913, 16
      %v2248 = vrot.slane %v2246, 5
      %v2249 = vsel %vm938, %v2244, %v2248
      %v2250 = vshrl.u32 %v913, 16
      %v2252 = vrot.slane %v2250, 4
      %v2253 = vor.u32 %v2252, %v2248
      %v2254 = vrot.slane %v2253, 4
      %v2256 = vshll.u32 %v932, 16
      %v2258 = vrot.slane %v2256, 5
      %v2259 = vsel %vm938, %v2254, %v2258
      %s2260 = scalar_lea.vmem %s5, 32
      %v2261 = vld [vmem:[%s2260] sm:$0xf]
      %v2262 = vld [vmem:[%s2260 + $0x4] sm:$0xf]
      %v2263 = vunpack.c.l.b16 %v2249
      %v2264 = vunpack.c.l.b16 %v2259
      %v2265 = vpack.c.b16 %v2264, %v2263
      %v2268 = vunpack.c.l.b16 %v2261
      %v2269 = vunpack.c.l.b16 %v2262
      %v2270 = vpack.c.b16 %v2269, %v2268
      %v2273 = vsel %vm1380, %v2265, 0
      %2275 = vmatpush.bf16.msra.mxu0 0
      %2276 = vmatpush.bf16.msra.mxu0 0
      %2277 = vmatpush.bf16.msra.mxu0 0
      %2278 = vmatpush.bf16.msra.mxu0 0
      %2279 = vmatpush.bf16.msra.mxu0 0
      %2280 = vmatpush.bf16.msra.mxu0 0
      %2281 = vmatpush.bf16.msra.mxu0 0
      %2282 = vmatpush.bf16.msra.mxu0 %v2270
      %2283 = vmatmul.bf16.gmra.mxu0 %v1385
      %v2284 = vpop.f32.mrf.mxu0
      %v2285 = vadd.f32 0.0, %v2284
      %v2286 = vpop.f32.mrf.mxu0
      %v2287 = vadd.f32 0.0, %v2286
      %2288 = vmatmul.bf16.gmra.mxu0 %v1388
      %v2289 = vpop.f32.mrf.mxu0
      %v2290 = vadd.f32 0.0, %v2289
      %v2291 = vpop.f32.mrf.mxu0
      %v2292 = vadd.f32 0.0, %v2291
      %2293 = vmatmul.bf16.gmra.mxu0 %v1391
      %v2294 = vpop.f32.mrf.mxu0
      %v2295 = vadd.f32 0.0, %v2294
      %v2296 = vpop.f32.mrf.mxu0
      %v2297 = vadd.f32 0.0, %v2296
      %2298 = vmatmul.bf16.gmra.mxu0 %v1394
      %v2299 = vpop.f32.mrf.mxu0
      %v2300 = vadd.f32 0.0, %v2299
      %v2301 = vpop.f32.mrf.mxu0
      %v2302 = vadd.f32 0.0, %v2301
      %2303 = vmatmul.bf16.gmra.mxu0 %v1397
      %v2304 = vpop.f32.mrf.mxu0
      %v2305 = vadd.f32 0.0, %v2304
      %v2306 = vpop.f32.mrf.mxu0
      %v2307 = vadd.f32 0.0, %v2306
      %2308 = vmatmul.bf16.gmra.mxu0 %v1400
      %v2309 = vpop.f32.mrf.mxu0
      %v2310 = vadd.f32 0.0, %v2309
      %v2311 = vpop.f32.mrf.mxu0
      %v2312 = vadd.f32 0.0, %v2311
      %2313 = vmatmul.bf16.gmra.mxu0 %v1403
      %v2314 = vpop.f32.mrf.mxu0
      %v2315 = vadd.f32 0.0, %v2314
      %v2316 = vpop.f32.mrf.mxu0
      %v2317 = vadd.f32 0.0, %v2316
      %2318 = vmatmul.bf16.gmra.mxu0 %v1406
      %v2319 = vpop.f32.mrf.mxu0
      %v2320 = vadd.f32 0.0, %v2319
      %v2321 = vpop.f32.mrf.mxu0
      %v2322 = vadd.f32 0.0, %v2321
      %2323 = vmatmul.bf16.gmra.mxu0 %v1409
      %v2324 = vpop.f32.mrf.mxu0
      %v2325 = vadd.f32 0.0, %v2324
      %v2326 = vpop.f32.mrf.mxu0
      %v2327 = vadd.f32 0.0, %v2326
      %2328 = vmatmul.bf16.gmra.mxu0 %v1412
      %v2329 = vpop.f32.mrf.mxu0
      %v2330 = vadd.f32 0.0, %v2329
      %v2331 = vpop.f32.mrf.mxu0
      %v2332 = vadd.f32 0.0, %v2331
      %2333 = vmatmul.bf16.gmra.mxu0 %v1415
      %v2334 = vpop.f32.mrf.mxu0
      %v2335 = vadd.f32 0.0, %v2334
      %v2336 = vpop.f32.mrf.mxu0
      %v2337 = vadd.f32 0.0, %v2336
      %2338 = vmatmul.bf16.gmra.mxu0 %v1418
      %v2339 = vpop.f32.mrf.mxu0
      %v2340 = vadd.f32 0.0, %v2339
      %v2341 = vpop.f32.mrf.mxu0
      %v2342 = vadd.f32 0.0, %v2341
      %2343 = vmatmul.bf16.gmra.mxu0 %v1421
      %v2344 = vpop.f32.mrf.mxu0
      %v2345 = vadd.f32 0.0, %v2344
      %v2346 = vpop.f32.mrf.mxu0
      %v2347 = vadd.f32 0.0, %v2346
      %2348 = vmatmul.bf16.gmra.mxu0 %v1424
      %v2349 = vpop.f32.mrf.mxu0
      %v2350 = vadd.f32 0.0, %v2349
      %v2351 = vpop.f32.mrf.mxu0
      %v2352 = vadd.f32 0.0, %v2351
      %2353 = vmatmul.bf16.gmra.mxu0 %v1427
      %v2354 = vpop.f32.mrf.mxu0
      %v2355 = vadd.f32 0.0, %v2354
      %v2356 = vpop.f32.mrf.mxu0
      %v2357 = vadd.f32 0.0, %v2356
      %2358 = vmatmul.bf16.gmra.mxu0 %v2273
      %v2359 = vpop.f32.mrf.mxu0
      %v2360 = vadd.f32 0.0, %v2359
      %v2361 = vpop.f32.mrf.mxu0
      %v2362 = vadd.f32 0.0, %v2361
      %2363 = vdwg.mxu0
      %v2364 = vadd.f32 %v2204, %v2285
      %v2365 = vadd.f32 %v2205, %v2287
      %v2366 = vadd.f32 %v2206, %v2290
      %v2367 = vadd.f32 %v2207, %v2292
      %v2368 = vadd.f32 %v2208, %v2295
      %v2369 = vadd.f32 %v2209, %v2297
      %v2370 = vadd.f32 %v2210, %v2300
      %v2371 = vadd.f32 %v2211, %v2302
      %v2372 = vadd.f32 %v2212, %v2305
      %v2373 = vadd.f32 %v2213, %v2307
      %v2374 = vadd.f32 %v2214, %v2310
      %v2375 = vadd.f32 %v2215, %v2312
      %v2376 = vadd.f32 %v2216, %v2315
      %v2377 = vadd.f32 %v2217, %v2317
      %v2378 = vadd.f32 %v2218, %v2320
      %v2379 = vadd.f32 %v2219, %v2322
      %v2380 = vadd.f32 %v2220, %v2325
      %v2381 = vadd.f32 %v2221, %v2327
      %v2382 = vadd.f32 %v2222, %v2330
      %v2383 = vadd.f32 %v2223, %v2332
      %v2384 = vadd.f32 %v2224, %v2335
      %v2385 = vadd.f32 %v2225, %v2337
      %v2386 = vadd.f32 %v2226, %v2340
      %v2387 = vadd.f32 %v2227, %v2342
      %v2388 = vadd.f32 %v2228, %v2345
      %v2389 = vadd.f32 %v2229, %v2347
      %v2390 = vadd.f32 %v2230, %v2350
      %v2391 = vadd.f32 %v2231, %v2352
      %v2392 = vadd.f32 %v2232, %v2355
      %v2393 = vadd.f32 %v2233, %v2357
      %v2394 = vadd.f32 %v2234, %v2360
      %v2395 = vadd.f32 %v2235, %v2362
      %v2397 = vrot.slane %v912, 5
      %v2398 = vrot.slane %v2397, 4
      %v2399 = vrot.slane %v913, 5
      %v2400 = vsel %vm1759, %v2398, %v2399
      %v2401 = vrot.slane %v2399, 4
      %v2402 = vrot.slane %v932, 5
      %v2403 = vsel %vm1759, %v2401, %v2402
      %s2404 = scalar_lea.vmem %s5, 40
      %v2405 = vld [vmem:[%s2404] sm:$0xf]
      %v2406 = vld [vmem:[%s2404 + $0x4] sm:$0xf]
      %v2407 = vunpack.c.l.b16 %v2400
      %v2408 = vunpack.c.l.b16 %v2403
      %v2409 = vpack.c.b16 %v2408, %v2407
      %v2412 = vunpack.c.l.b16 %v2405
      %v2413 = vunpack.c.l.b16 %v2406
      %v2414 = vpack.c.b16 %v2413, %v2412
      %v2417 = vsel %vm1380, %v2409, 0
      %2419 = vmatpush.bf16.msra.mxu0 0
      %2420 = vmatpush.bf16.msra.mxu0 0
      %2421 = vmatpush.bf16.msra.mxu0 0
      %2422 = vmatpush.bf16.msra.mxu0 0
      %2423 = vmatpush.bf16.msra.mxu0 0
      %2424 = vmatpush.bf16.msra.mxu0 0
      %2425 = vmatpush.bf16.msra.mxu0 0
      %2426 = vmatpush.bf16.msra.mxu0 %v2414
      %2427 = vmatmul.bf16.gmra.mxu0 %v1933
      %v2428 = vpop.f32.mrf.mxu0
      %v2429 = vadd.f32 0.0, %v2428
      %v2430 = vpop.f32.mrf.mxu0
      %v2431 = vadd.f32 0.0, %v2430
      %2432 = vmatmul.bf16.gmra.mxu0 %v1936
      %v2433 = vpop.f32.mrf.mxu0
      %v2434 = vadd.f32 0.0, %v2433
      %v2435 = vpop.f32.mrf.mxu0
      %v2436 = vadd.f32 0.0, %v2435
      %2437 = vmatmul.bf16.gmra.mxu0 %v1939
      %v2438 = vpop.f32.mrf.mxu0
      %v2439 = vadd.f32 0.0, %v2438
      %v2440 = vpop.f32.mrf.mxu0
      %v2441 = vadd.f32 0.0, %v2440
      %2442 = vmatmul.bf16.gmra.mxu0 %v1942
      %v2443 = vpop.f32.mrf.mxu0
      %v2444 = vadd.f32 0.0, %v2443
      %v2445 = vpop.f32.mrf.mxu0
      %v2446 = vadd.f32 0.0, %v2445
      %2447 = vmatmul.bf16.gmra.mxu0 %v1945
      %v2448 = vpop.f32.mrf.mxu0
      %v2449 = vadd.f32 0.0, %v2448
      %v2450 = vpop.f32.mrf.mxu0
      %v2451 = vadd.f32 0.0, %v2450
      %2452 = vmatmul.bf16.gmra.mxu0 %v1948
      %v2453 = vpop.f32.mrf.mxu0
      %v2454 = vadd.f32 0.0, %v2453
      %v2455 = vpop.f32.mrf.mxu0
      %v2456 = vadd.f32 0.0, %v2455
      %2457 = vmatmul.bf16.gmra.mxu0 %v1951
      %v2458 = vpop.f32.mrf.mxu0
      %v2459 = vadd.f32 0.0, %v2458
      %v2460 = vpop.f32.mrf.mxu0
      %v2461 = vadd.f32 0.0, %v2460
      %2462 = vmatmul.bf16.gmra.mxu0 %v1954
      %v2463 = vpop.f32.mrf.mxu0
      %v2464 = vadd.f32 0.0, %v2463
      %v2465 = vpop.f32.mrf.mxu0
      %v2466 = vadd.f32 0.0, %v2465
      %2467 = vmatmul.bf16.gmra.mxu0 %v1957
      %v2468 = vpop.f32.mrf.mxu0
      %v2469 = vadd.f32 0.0, %v2468
      %v2470 = vpop.f32.mrf.mxu0
      %v2471 = vadd.f32 0.0, %v2470
      %2472 = vmatmul.bf16.gmra.mxu0 %v1960
      %v2473 = vpop.f32.mrf.mxu0
      %v2474 = vadd.f32 0.0, %v2473
      %v2475 = vpop.f32.mrf.mxu0
      %v2476 = vadd.f32 0.0, %v2475
      %2477 = vmatmul.bf16.gmra.mxu0 %v1963
      %v2478 = vpop.f32.mrf.mxu0
      %v2479 = vadd.f32 0.0, %v2478
      %v2480 = vpop.f32.mrf.mxu0
      %v2481 = vadd.f32 0.0, %v2480
      %2482 = vmatmul.bf16.gmra.mxu0 %v1966
      %v2483 = vpop.f32.mrf.mxu0
      %v2484 = vadd.f32 0.0, %v2483
      %v2485 = vpop.f32.mrf.mxu0
      %v2486 = vadd.f32 0.0, %v2485
      %2487 = vmatmul.bf16.gmra.mxu0 %v1969
      %v2488 = vpop.f32.mrf.mxu0
      %v2489 = vadd.f32 0.0, %v2488
      %v2490 = vpop.f32.mrf.mxu0
      %v2491 = vadd.f32 0.0, %v2490
      %2492 = vmatmul.bf16.gmra.mxu0 %v1972
      %v2493 = vpop.f32.mrf.mxu0
      %v2494 = vadd.f32 0.0, %v2493
      %v2495 = vpop.f32.mrf.mxu0
      %v2496 = vadd.f32 0.0, %v2495
      %2497 = vmatmul.bf16.gmra.mxu0 %v1975
      %v2498 = vpop.f32.mrf.mxu0
      %v2499 = vadd.f32 0.0, %v2498
      %v2500 = vpop.f32.mrf.mxu0
      %v2501 = vadd.f32 0.0, %v2500
      %2502 = vmatmul.bf16.gmra.mxu0 %v2417
      %v2503 = vpop.f32.mrf.mxu0
      %v2504 = vadd.f32 0.0, %v2503
      %v2505 = vpop.f32.mrf.mxu0
      %v2506 = vadd.f32 0.0, %v2505
      %2507 = vdwg.mxu0
      %v2508 = vadd.f32 %v2364, %v2429
      %v2509 = vadd.f32 %v2365, %v2431
      %v2510 = vadd.f32 %v2366, %v2434
      %v2511 = vadd.f32 %v2367, %v2436
      %v2512 = vadd.f32 %v2368, %v2439
      %v2513 = vadd.f32 %v2369, %v2441
      %v2514 = vadd.f32 %v2370, %v2444
      %v2515 = vadd.f32 %v2371, %v2446
      %v2516 = vadd.f32 %v2372, %v2449
      %v2517 = vadd.f32 %v2373, %v2451
      %v2518 = vadd.f32 %v2374, %v2454
      %v2519 = vadd.f32 %v2375, %v2456
      %v2520 = vadd.f32 %v2376, %v2459
      %v2521 = vadd.f32 %v2377, %v2461
      %v2522 = vadd.f32 %v2378, %v2464
      %v2523 = vadd.f32 %v2379, %v2466
      %v2524 = vadd.f32 %v2380, %v2469
      %v2525 = vadd.f32 %v2381, %v2471
      %v2526 = vadd.f32 %v2382, %v2474
      %v2527 = vadd.f32 %v2383, %v2476
      %v2528 = vadd.f32 %v2384, %v2479
      %v2529 = vadd.f32 %v2385, %v2481
      %v2530 = vadd.f32 %v2386, %v2484
      %v2531 = vadd.f32 %v2387, %v2486
      %v2532 = vadd.f32 %v2388, %v2489
      %v2533 = vadd.f32 %v2389, %v2491
      %v2534 = vadd.f32 %v2390, %v2494
      %v2535 = vadd.f32 %v2391, %v2496
      %v2536 = vadd.f32 %v2392, %v2499
      %v2537 = vadd.f32 %v2393, %v2501
      %v2538 = vadd.f32 %v2394, %v2504
      %v2539 = vadd.f32 %v2395, %v2506
      %s2540 = scalar_lea.vmem %s5, 48
      %v2541 = vld [vmem:[%s2540] sm:$0xf]
      %v2542 = vld [vmem:[%s2540 + $0x4] sm:$0xf]
      %v2545 = vunpack.c.l.b16 %v914
      %v2546 = vunpack.c.l.b16 %v915
      %v2547 = vpack.c.b16 %v2546, %v2545
      %v2550 = vunpack.c.l.b16 %v2541
      %v2551 = vunpack.c.l.b16 %v2542
      %v2552 = vpack.c.b16 %v2551, %v2550
      %v2555 = vsel %vm1380, %v2547, 0
      %2557 = vmatpush.bf16.msra.mxu0 0
      %2558 = vmatpush.bf16.msra.mxu0 0
      %2559 = vmatpush.bf16.msra.mxu0 0
      %2560 = vmatpush.bf16.msra.mxu0 0
      %2561 = vmatpush.bf16.msra.mxu0 0
      %2562 = vmatpush.bf16.msra.mxu0 0
      %2563 = vmatpush.bf16.msra.mxu0 0
      %2564 = vmatpush.bf16.msra.mxu0 %v2552
      %2565 = vmatmul.bf16.gmra.mxu0 %v1611
      %v2566 = vpop.f32.mrf.mxu0
      %v2567 = vadd.f32 0.0, %v2566
      %v2568 = vpop.f32.mrf.mxu0
      %v2569 = vadd.f32 0.0, %v2568
      %2570 = vmatmul.bf16.gmra.mxu0 %v1614
      %v2571 = vpop.f32.mrf.mxu0
      %v2572 = vadd.f32 0.0, %v2571
      %v2573 = vpop.f32.mrf.mxu0
      %v2574 = vadd.f32 0.0, %v2573
      %2575 = vmatmul.bf16.gmra.mxu0 %v1617
      %v2576 = vpop.f32.mrf.mxu0
      %v2577 = vadd.f32 0.0, %v2576
      %v2578 = vpop.f32.mrf.mxu0
      %v2579 = vadd.f32 0.0, %v2578
      %2580 = vmatmul.bf16.gmra.mxu0 %v1620
      %v2581 = vpop.f32.mrf.mxu0
      %v2582 = vadd.f32 0.0, %v2581
      %v2583 = vpop.f32.mrf.mxu0
      %v2584 = vadd.f32 0.0, %v2583
      %2585 = vmatmul.bf16.gmra.mxu0 %v1623
      %v2586 = vpop.f32.mrf.mxu0
      %v2587 = vadd.f32 0.0, %v2586
      %v2588 = vpop.f32.mrf.mxu0
      %v2589 = vadd.f32 0.0, %v2588
      %2590 = vmatmul.bf16.gmra.mxu0 %v1626
      %v2591 = vpop.f32.mrf.mxu0
      %v2592 = vadd.f32 0.0, %v2591
      %v2593 = vpop.f32.mrf.mxu0
      %v2594 = vadd.f32 0.0, %v2593
      %2595 = vmatmul.bf16.gmra.mxu0 %v1629
      %v2596 = vpop.f32.mrf.mxu0
      %v2597 = vadd.f32 0.0, %v2596
      %v2598 = vpop.f32.mrf.mxu0
      %v2599 = vadd.f32 0.0, %v2598
      %2600 = vmatmul.bf16.gmra.mxu0 %v1632
      %v2601 = vpop.f32.mrf.mxu0
      %v2602 = vadd.f32 0.0, %v2601
      %v2603 = vpop.f32.mrf.mxu0
      %v2604 = vadd.f32 0.0, %v2603
      %2605 = vmatmul.bf16.gmra.mxu0 %v1635
      %v2606 = vpop.f32.mrf.mxu0
      %v2607 = vadd.f32 0.0, %v2606
      %v2608 = vpop.f32.mrf.mxu0
      %v2609 = vadd.f32 0.0, %v2608
      %2610 = vmatmul.bf16.gmra.mxu0 %v1638
      %v2611 = vpop.f32.mrf.mxu0
      %v2612 = vadd.f32 0.0, %v2611
      %v2613 = vpop.f32.mrf.mxu0
      %v2614 = vadd.f32 0.0, %v2613
      %2615 = vmatmul.bf16.gmra.mxu0 %v1641
      %v2616 = vpop.f32.mrf.mxu0
      %v2617 = vadd.f32 0.0, %v2616
      %v2618 = vpop.f32.mrf.mxu0
      %v2619 = vadd.f32 0.0, %v2618
      %2620 = vmatmul.bf16.gmra.mxu0 %v1644
      %v2621 = vpop.f32.mrf.mxu0
      %v2622 = vadd.f32 0.0, %v2621
      %v2623 = vpop.f32.mrf.mxu0
      %v2624 = vadd.f32 0.0, %v2623
      %2625 = vmatmul.bf16.gmra.mxu0 %v1647
      %v2626 = vpop.f32.mrf.mxu0
      %v2627 = vadd.f32 0.0, %v2626
      %v2628 = vpop.f32.mrf.mxu0
      %v2629 = vadd.f32 0.0, %v2628
      %2630 = vmatmul.bf16.gmra.mxu0 %v1650
      %v2631 = vpop.f32.mrf.mxu0
      %v2632 = vadd.f32 0.0, %v2631
      %v2633 = vpop.f32.mrf.mxu0
      %v2634 = vadd.f32 0.0, %v2633
      %2635 = vmatmul.bf16.gmra.mxu0 %v2113
      %v2636 = vpop.f32.mrf.mxu0
      %v2637 = vadd.f32 0.0, %v2636
      %v2638 = vpop.f32.mrf.mxu0
      %v2639 = vadd.f32 0.0, %v2638
      %2640 = vmatmul.bf16.gmra.mxu0 %v2555
      %v2641 = vpop.f32.mrf.mxu0
      %v2642 = vadd.f32 0.0, %v2641
      %v2643 = vpop.f32.mrf.mxu0
      %v2644 = vadd.f32 0.0, %v2643
      %2645 = vdwg.mxu0
      %v2646 = vadd.f32 %v2508, %v2567
      %v2647 = vadd.f32 %v2509, %v2569
      %v2648 = vadd.f32 %v2510, %v2572
      %v2649 = vadd.f32 %v2511, %v2574
      %v2650 = vadd.f32 %v2512, %v2577
      %v2651 = vadd.f32 %v2513, %v2579
      %v2652 = vadd.f32 %v2514, %v2582
      %v2653 = vadd.f32 %v2515, %v2584
      %v2654 = vadd.f32 %v2516, %v2587
      %v2655 = vadd.f32 %v2517, %v2589
      %v2656 = vadd.f32 %v2518, %v2592
      %v2657 = vadd.f32 %v2519, %v2594
      %v2658 = vadd.f32 %v2520, %v2597
      %v2659 = vadd.f32 %v2521, %v2599
      %v2660 = vadd.f32 %v2522, %v2602
      %v2661 = vadd.f32 %v2523, %v2604
      %v2662 = vadd.f32 %v2524, %v2607
      %v2663 = vadd.f32 %v2525, %v2609
      %v2664 = vadd.f32 %v2526, %v2612
      %v2665 = vadd.f32 %v2527, %v2614
      %v2666 = vadd.f32 %v2528, %v2617
      %v2667 = vadd.f32 %v2529, %v2619
      %v2668 = vadd.f32 %v2530, %v2622
      %v2669 = vadd.f32 %v2531, %v2624
      %v2670 = vadd.f32 %v2532, %v2627
      %v2671 = vadd.f32 %v2533, %v2629
      %v2672 = vadd.f32 %v2534, %v2632
      %v2673 = vadd.f32 %v2535, %v2634
      %v2674 = vadd.f32 %v2536, %v2637
      %v2675 = vadd.f32 %v2537, %v2639
      %v2676 = vadd.f32 %v2538, %v2642
      %v2677 = vadd.f32 %v2539, %v2644
      %v2679 = vshrl.u32 %v914, 16
      %v2681 = vrot.slane %v2679, 4
      %v2682 = vshll.u32 %v914, 16
      %v2684 = vrot.slane %v2682, 5
      %v2685 = vor.u32 %v2681, %v2684
      %v2686 = vrot.slane %v2685, 4
      %v2688 = vshll.u32 %v915, 16
      %v2690 = vrot.slane %v2688, 5
      %v2691 = vsel %vm938, %v2686, %v2690
      %v2692 = vshrl.u32 %v915, 16
      %v2694 = vrot.slane %v2692, 4
      %v2695 = vor.u32 %v2694, %v2690
      %v2696 = vrot.slane %v2695, 4
      %v2698 = vshll.u32 %v933, 16
      %v2700 = vrot.slane %v2698, 5
      %v2701 = vsel %vm938, %v2696, %v2700
      %s2702 = scalar_lea.vmem %s5, 56
      %v2703 = vld [vmem:[%s2702] sm:$0xf]
      %v2704 = vld [vmem:[%s2702 + $0x4] sm:$0xf]
      %v2705 = vunpack.c.l.b16 %v2691
      %v2706 = vunpack.c.l.b16 %v2701
      %v2707 = vpack.c.b16 %v2706, %v2705
      %v2710 = vunpack.c.l.b16 %v2703
      %v2711 = vunpack.c.l.b16 %v2704
      %v2712 = vpack.c.b16 %v2711, %v2710
      %v2715 = vsel %vm1380, %v2707, 0
      %2717 = vmatpush.bf16.msra.mxu0 0
      %2718 = vmatpush.bf16.msra.mxu0 0
      %2719 = vmatpush.bf16.msra.mxu0 0
      %2720 = vmatpush.bf16.msra.mxu0 0
      %2721 = vmatpush.bf16.msra.mxu0 0
      %2722 = vmatpush.bf16.msra.mxu0 0
      %2723 = vmatpush.bf16.msra.mxu0 0
      %2724 = vmatpush.bf16.msra.mxu0 %v2712
      %2725 = vmatmul.bf16.gmra.mxu0 %v1388
      %v2726 = vpop.f32.mrf.mxu0
      %v2727 = vadd.f32 0.0, %v2726
      %v2728 = vpop.f32.mrf.mxu0
      %v2729 = vadd.f32 0.0, %v2728
      %2730 = vmatmul.bf16.gmra.mxu0 %v1391
      %v2731 = vpop.f32.mrf.mxu0
      %v2732 = vadd.f32 0.0, %v2731
      %v2733 = vpop.f32.mrf.mxu0
      %v2734 = vadd.f32 0.0, %v2733
      %2735 = vmatmul.bf16.gmra.mxu0 %v1394
      %v2736 = vpop.f32.mrf.mxu0
      %v2737 = vadd.f32 0.0, %v2736
      %v2738 = vpop.f32.mrf.mxu0
      %v2739 = vadd.f32 0.0, %v2738
      %2740 = vmatmul.bf16.gmra.mxu0 %v1397
      %v2741 = vpop.f32.mrf.mxu0
      %v2742 = vadd.f32 0.0, %v2741
      %v2743 = vpop.f32.mrf.mxu0
      %v2744 = vadd.f32 0.0, %v2743
      %2745 = vmatmul.bf16.gmra.mxu0 %v1400
      %v2746 = vpop.f32.mrf.mxu0
      %v2747 = vadd.f32 0.0, %v2746
      %v2748 = vpop.f32.mrf.mxu0
      %v2749 = vadd.f32 0.0, %v2748
      %2750 = vmatmul.bf16.gmra.mxu0 %v1403
      %v2751 = vpop.f32.mrf.mxu0
      %v2752 = vadd.f32 0.0, %v2751
      %v2753 = vpop.f32.mrf.mxu0
      %v2754 = vadd.f32 0.0, %v2753
      %2755 = vmatmul.bf16.gmra.mxu0 %v1406
      %v2756 = vpop.f32.mrf.mxu0
      %v2757 = vadd.f32 0.0, %v2756
      %v2758 = vpop.f32.mrf.mxu0
      %v2759 = vadd.f32 0.0, %v2758
      %2760 = vmatmul.bf16.gmra.mxu0 %v1409
      %v2761 = vpop.f32.mrf.mxu0
      %v2762 = vadd.f32 0.0, %v2761
      %v2763 = vpop.f32.mrf.mxu0
      %v2764 = vadd.f32 0.0, %v2763
      %2765 = vmatmul.bf16.gmra.mxu0 %v1412
      %v2766 = vpop.f32.mrf.mxu0
      %v2767 = vadd.f32 0.0, %v2766
      %v2768 = vpop.f32.mrf.mxu0
      %v2769 = vadd.f32 0.0, %v2768
      %2770 = vmatmul.bf16.gmra.mxu0 %v1415
      %v2771 = vpop.f32.mrf.mxu0
      %v2772 = vadd.f32 0.0, %v2771
      %v2773 = vpop.f32.mrf.mxu0
      %v2774 = vadd.f32 0.0, %v2773
      %2775 = vmatmul.bf16.gmra.mxu0 %v1418
      %v2776 = vpop.f32.mrf.mxu0
      %v2777 = vadd.f32 0.0, %v2776
      %v2778 = vpop.f32.mrf.mxu0
      %v2779 = vadd.f32 0.0, %v2778
      %2780 = vmatmul.bf16.gmra.mxu0 %v1421
      %v2781 = vpop.f32.mrf.mxu0
      %v2782 = vadd.f32 0.0, %v2781
      %v2783 = vpop.f32.mrf.mxu0
      %v2784 = vadd.f32 0.0, %v2783
      %2785 = vmatmul.bf16.gmra.mxu0 %v1424
      %v2786 = vpop.f32.mrf.mxu0
      %v2787 = vadd.f32 0.0, %v2786
      %v2788 = vpop.f32.mrf.mxu0
      %v2789 = vadd.f32 0.0, %v2788
      %2790 = vmatmul.bf16.gmra.mxu0 %v1427
      %v2791 = vpop.f32.mrf.mxu0
      %v2792 = vadd.f32 0.0, %v2791
      %v2793 = vpop.f32.mrf.mxu0
      %v2794 = vadd.f32 0.0, %v2793
      %2795 = vmatmul.bf16.gmra.mxu0 %v2273
      %v2796 = vpop.f32.mrf.mxu0
      %v2797 = vadd.f32 0.0, %v2796
      %v2798 = vpop.f32.mrf.mxu0
      %v2799 = vadd.f32 0.0, %v2798
      %2800 = vmatmul.bf16.gmra.mxu0 %v2715
      %v2801 = vpop.f32.mrf.mxu0
      %v2802 = vadd.f32 0.0, %v2801
      %v2803 = vpop.f32.mrf.mxu0
      %v2804 = vadd.f32 0.0, %v2803
      %2805 = vdwg.mxu0
      %v2806 = vadd.f32 %v2646, %v2727
      %v2807 = vadd.f32 %v2647, %v2729
      %v2808 = vadd.f32 %v2648, %v2732
      %v2809 = vadd.f32 %v2649, %v2734
      %v2810 = vadd.f32 %v2650, %v2737
      %v2811 = vadd.f32 %v2651, %v2739
      %v2812 = vadd.f32 %v2652, %v2742
      %v2813 = vadd.f32 %v2653, %v2744
      %v2814 = vadd.f32 %v2654, %v2747
      %v2815 = vadd.f32 %v2655, %v2749
      %v2816 = vadd.f32 %v2656, %v2752
      %v2817 = vadd.f32 %v2657, %v2754
      %v2818 = vadd.f32 %v2658, %v2757
      %v2819 = vadd.f32 %v2659, %v2759
      %v2820 = vadd.f32 %v2660, %v2762
      %v2821 = vadd.f32 %v2661, %v2764
      %v2822 = vadd.f32 %v2662, %v2767
      %v2823 = vadd.f32 %v2663, %v2769
      %v2824 = vadd.f32 %v2664, %v2772
      %v2825 = vadd.f32 %v2665, %v2774
      %v2826 = vadd.f32 %v2666, %v2777
      %v2827 = vadd.f32 %v2667, %v2779
      %v2828 = vadd.f32 %v2668, %v2782
      %v2829 = vadd.f32 %v2669, %v2784
      %v2830 = vadd.f32 %v2670, %v2787
      %v2831 = vadd.f32 %v2671, %v2789
      %v2832 = vadd.f32 %v2672, %v2792
      %v2833 = vadd.f32 %v2673, %v2794
      %v2834 = vadd.f32 %v2674, %v2797
      %v2835 = vadd.f32 %v2675, %v2799
      %v2836 = vadd.f32 %v2676, %v2802
      %v2837 = vadd.f32 %v2677, %v2804
      %v2839 = vrot.slane %v914, 5
      %v2840 = vrot.slane %v2839, 4
      %v2841 = vrot.slane %v915, 5
      %v2842 = vsel %vm1759, %v2840, %v2841
      %v2843 = vrot.slane %v2841, 4
      %v2844 = vrot.slane %v933, 5
      %v2845 = vsel %vm1759, %v2843, %v2844
      %s2846 = scalar_lea.vmem %s5, 64
      %v2847 = vld [vmem:[%s2846] sm:$0xf]
      %v2848 = vld [vmem:[%s2846 + $0x4] sm:$0xf]
      %v2849 = vunpack.c.l.b16 %v2842
      %v2850 = vunpack.c.l.b16 %v2845
      %v2851 = vpack.c.b16 %v2850, %v2849
      %v2854 = vunpack.c.l.b16 %v2847
      %v2855 = vunpack.c.l.b16 %v2848
      %v2856 = vpack.c.b16 %v2855, %v2854
      %v2859 = vsel %vm1380, %v2851, 0
      %2861 = vmatpush.bf16.msra.mxu0 0
      %2862 = vmatpush.bf16.msra.mxu0 0
      %2863 = vmatpush.bf16.msra.mxu0 0
      %2864 = vmatpush.bf16.msra.mxu0 0
      %2865 = vmatpush.bf16.msra.mxu0 0
      %2866 = vmatpush.bf16.msra.mxu0 0
      %2867 = vmatpush.bf16.msra.mxu0 0
      %2868 = vmatpush.bf16.msra.mxu0 %v2856
      %2869 = vmatmul.bf16.gmra.mxu0 %v1936
      %v2870 = vpop.f32.mrf.mxu0
      %v2871 = vadd.f32 0.0, %v2870
      %v2872 = vpop.f32.mrf.mxu0
      %v2873 = vadd.f32 0.0, %v2872
      %2874 = vmatmul.bf16.gmra.mxu0 %v1939
      %v2875 = vpop.f32.mrf.mxu0
      %v2876 = vadd.f32 0.0, %v2875
      %v2877 = vpop.f32.mrf.mxu0
      %v2878 = vadd.f32 0.0, %v2877
      %2879 = vmatmul.bf16.gmra.mxu0 %v1942
      %v2880 = vpop.f32.mrf.mxu0
      %v2881 = vadd.f32 0.0, %v2880
      %v2882 = vpop.f32.mrf.mxu0
      %v2883 = vadd.f32 0.0, %v2882
      %2884 = vmatmul.bf16.gmra.mxu0 %v1945
      %v2885 = vpop.f32.mrf.mxu0
      %v2886 = vadd.f32 0.0, %v2885
      %v2887 = vpop.f32.mrf.mxu0
      %v2888 = vadd.f32 0.0, %v2887
      %2889 = vmatmul.bf16.gmra.mxu0 %v1948
      %v2890 = vpop.f32.mrf.mxu0
      %v2891 = vadd.f32 0.0, %v2890
      %v2892 = vpop.f32.mrf.mxu0
      %v2893 = vadd.f32 0.0, %v2892
      %2894 = vmatmul.bf16.gmra.mxu0 %v1951
      %v2895 = vpop.f32.mrf.mxu0
      %v2896 = vadd.f32 0.0, %v2895
      %v2897 = vpop.f32.mrf.mxu0
      %v2898 = vadd.f32 0.0, %v2897
      %2899 = vmatmul.bf16.gmra.mxu0 %v1954
      %v2900 = vpop.f32.mrf.mxu0
      %v2901 = vadd.f32 0.0, %v2900
      %v2902 = vpop.f32.mrf.mxu0
      %v2903 = vadd.f32 0.0, %v2902
      %2904 = vmatmul.bf16.gmra.mxu0 %v1957
      %v2905 = vpop.f32.mrf.mxu0
      %v2906 = vadd.f32 0.0, %v2905
      %v2907 = vpop.f32.mrf.mxu0
      %v2908 = vadd.f32 0.0, %v2907
      %2909 = vmatmul.bf16.gmra.mxu0 %v1960
      %v2910 = vpop.f32.mrf.mxu0
      %v2911 = vadd.f32 0.0, %v2910
      %v2912 = vpop.f32.mrf.mxu0
      %v2913 = vadd.f32 0.0, %v2912
      %2914 = vmatmul.bf16.gmra.mxu0 %v1963
      %v2915 = vpop.f32.mrf.mxu0
      %v2916 = vadd.f32 0.0, %v2915
      %v2917 = vpop.f32.mrf.mxu0
      %v2918 = vadd.f32 0.0, %v2917
      %2919 = vmatmul.bf16.gmra.mxu0 %v1966
      %v2920 = vpop.f32.mrf.mxu0
      %v2921 = vadd.f32 0.0, %v2920
      %v2922 = vpop.f32.mrf.mxu0
      %v2923 = vadd.f32 0.0, %v2922
      %2924 = vmatmul.bf16.gmra.mxu0 %v1969
      %v2925 = vpop.f32.mrf.mxu0
      %v2926 = vadd.f32 0.0, %v2925
      %v2927 = vpop.f32.mrf.mxu0
      %v2928 = vadd.f32 0.0, %v2927
      %2929 = vmatmul.bf16.gmra.mxu0 %v1972
      %v2930 = vpop.f32.mrf.mxu0
      %v2931 = vadd.f32 0.0, %v2930
      %v2932 = vpop.f32.mrf.mxu0
      %v2933 = vadd.f32 0.0, %v2932
      %2934 = vmatmul.bf16.gmra.mxu0 %v1975
      %v2935 = vpop.f32.mrf.mxu0
      %v2936 = vadd.f32 0.0, %v2935
      %v2937 = vpop.f32.mrf.mxu0
      %v2938 = vadd.f32 0.0, %v2937
      %2939 = vmatmul.bf16.gmra.mxu0 %v2417
      %v2940 = vpop.f32.mrf.mxu0
      %v2941 = vadd.f32 0.0, %v2940
      %v2942 = vpop.f32.mrf.mxu0
      %v2943 = vadd.f32 0.0, %v2942
      %2944 = vmatmul.bf16.gmra.mxu0 %v2859
      %v2945 = vpop.f32.mrf.mxu0
      %v2946 = vadd.f32 0.0, %v2945
      %v2947 = vpop.f32.mrf.mxu0
      %v2948 = vadd.f32 0.0, %v2947
      %2949 = vdwg.mxu0
      %v2950 = vadd.f32 %v2806, %v2871
      %v2951 = vadd.f32 %v2807, %v2873
      %v2952 = vadd.f32 %v2808, %v2876
      %v2953 = vadd.f32 %v2809, %v2878
      %v2954 = vadd.f32 %v2810, %v2881
      %v2955 = vadd.f32 %v2811, %v2883
      %v2956 = vadd.f32 %v2812, %v2886
      %v2957 = vadd.f32 %v2813, %v2888
      %v2958 = vadd.f32 %v2814, %v2891
      %v2959 = vadd.f32 %v2815, %v2893
      %v2960 = vadd.f32 %v2816, %v2896
      %v2961 = vadd.f32 %v2817, %v2898
      %v2962 = vadd.f32 %v2818, %v2901
      %v2963 = vadd.f32 %v2819, %v2903
      %v2964 = vadd.f32 %v2820, %v2906
      %v2965 = vadd.f32 %v2821, %v2908
      %v2966 = vadd.f32 %v2822, %v2911
      %v2967 = vadd.f32 %v2823, %v2913
      %v2968 = vadd.f32 %v2824, %v2916
      %v2969 = vadd.f32 %v2825, %v2918
      %v2970 = vadd.f32 %v2826, %v2921
      %v2971 = vadd.f32 %v2827, %v2923
      %v2972 = vadd.f32 %v2828, %v2926
      %v2973 = vadd.f32 %v2829, %v2928
      %v2974 = vadd.f32 %v2830, %v2931
      %v2975 = vadd.f32 %v2831, %v2933
      %v2976 = vadd.f32 %v2832, %v2936
      %v2977 = vadd.f32 %v2833, %v2938
      %v2978 = vadd.f32 %v2834, %v2941
      %v2979 = vadd.f32 %v2835, %v2943
      %v2980 = vadd.f32 %v2836, %v2946
      %v2981 = vadd.f32 %v2837, %v2948
      %v2982 = vpack.c.bf16 %v2950, %v2950
      %v2983 = vpack.c.bf16 %v2951, %v2951
      %v2984 = vpack.c.bf16 %v2952, %v2952
      %v2985 = vpack.c.bf16 %v2953, %v2953
      %v2986 = vpack.c.bf16 %v2954, %v2954
      %v2987 = vpack.c.bf16 %v2955, %v2955
      %v2988 = vpack.c.bf16 %v2956, %v2956
      %v2989 = vpack.c.bf16 %v2957, %v2957
      %v2990 = vpack.c.bf16 %v2958, %v2958
      %v2991 = vpack.c.bf16 %v2959, %v2959
      %v2992 = vpack.c.bf16 %v2960, %v2960
      %v2993 = vpack.c.bf16 %v2961, %v2961
      %v2994 = vpack.c.bf16 %v2962, %v2962
      %v2995 = vpack.c.bf16 %v2963, %v2963
      %v2996 = vpack.c.bf16 %v2964, %v2964
      %v2997 = vpack.c.bf16 %v2965, %v2965
      %v2998 = vpack.c.bf16 %v2966, %v2966
      %v2999 = vpack.c.bf16 %v2967, %v2967
      %v3000 = vpack.c.bf16 %v2968, %v2968
      %v3001 = vpack.c.bf16 %v2969, %v2969
      %v3002 = vpack.c.bf16 %v2970, %v2970
      %v3003 = vpack.c.bf16 %v2971, %v2971
      %v3004 = vpack.c.bf16 %v2972, %v2972
      %v3005 = vpack.c.bf16 %v2973, %v2973
      %v3006 = vpack.c.bf16 %v2974, %v2974
      %v3007 = vpack.c.bf16 %v2975, %v2975
      %v3008 = vpack.c.bf16 %v2976, %v2976
      %v3009 = vpack.c.bf16 %v2977, %v2977
      %v3010 = vpack.c.bf16 %v2978, %v2978
      %v3011 = vpack.c.bf16 %v2979, %v2979
      %v3012 = vpack.c.bf16 %v2980, %v2980
      %v3013 = vpack.c.bf16 %v2981, %v2981
      %vm3014 = vcmask 125952
      %3015 = vst.msk [vmem:[%s483] sm:$0xf] %vm3014, %v2982
      %3016 = vst.msk [vmem:[%s483 + $0x4] sm:$0xf] %vm3014, %v2983
      %3017 = vst.msk [vmem:[%s483 + $0x8] sm:$0xf] %vm3014, %v2984
      %3018 = vst.msk [vmem:[%s483 + $0xc] sm:$0xf] %vm3014, %v2985
      %3019 = vst.msk [vmem:[%s483 + $0x10] sm:$0xf] %vm3014, %v2986
      %3020 = vst.msk [vmem:[%s483 + $0x14] sm:$0xf] %vm3014, %v2987
      %3021 = vst.msk [vmem:[%s483 + $0x18] sm:$0xf] %vm3014, %v2988
      %3022 = vst.msk [vmem:[%s483 + $0x1c] sm:$0xf] %vm3014, %v2989
      %3023 = vst.msk [vmem:[%s483 + $0x20] sm:$0xf] %vm3014, %v2990
      %3024 = vst.msk [vmem:[%s483 + $0x24] sm:$0xf] %vm3014, %v2991
      %3025 = vst.msk [vmem:[%s483 + $0x28] sm:$0xf] %vm3014, %v2992
      %3026 = vst.msk [vmem:[%s483 + $0x2c] sm:$0xf] %vm3014, %v2993
      %3027 = vst.msk [vmem:[%s483 + $0x30] sm:$0xf] %vm3014, %v2994
      %3028 = vst.msk [vmem:[%s483 + $0x34] sm:$0xf] %vm3014, %v2995
      %3029 = vst.msk [vmem:[%s483 + $0x38] sm:$0xf] %vm3014, %v2996
      %3030 = vst.msk [vmem:[%s483 + $0x3c] sm:$0xf] %vm3014, %v2997
      %3031 = vst.msk [vmem:[%s483 + $0x40] sm:$0xf] %vm3014, %v2998
      %3032 = vst.msk [vmem:[%s483 + $0x44] sm:$0xf] %vm3014, %v2999
      %3033 = vst.msk [vmem:[%s483 + $0x48] sm:$0xf] %vm3014, %v3000
      %3034 = vst.msk [vmem:[%s483 + $0x4c] sm:$0xf] %vm3014, %v3001
      %3035 = vst.msk [vmem:[%s483 + $0x50] sm:$0xf] %vm3014, %v3002
      %3036 = vst.msk [vmem:[%s483 + $0x54] sm:$0xf] %vm3014, %v3003
      %3037 = vst.msk [vmem:[%s483 + $0x58] sm:$0xf] %vm3014, %v3004
      %3038 = vst.msk [vmem:[%s483 + $0x5c] sm:$0xf] %vm3014, %v3005
      %3039 = vst.msk [vmem:[%s483 + $0x60] sm:$0xf] %vm3014, %v3006
      %3040 = vst.msk [vmem:[%s483 + $0x64] sm:$0xf] %vm3014, %v3007
      %3041 = vst.msk [vmem:[%s483 + $0x68] sm:$0xf] %vm3014, %v3008
      %3042 = vst.msk [vmem:[%s483 + $0x6c] sm:$0xf] %vm3014, %v3009
      %3043 = vst.msk [vmem:[%s483 + $0x70] sm:$0xf] %vm3014, %v3010
      %3044 = vst.msk [vmem:[%s483 + $0x74] sm:$0xf] %vm3014, %v3011
      %3045 = vst.msk [vmem:[%s483 + $0x78] sm:$0xf] %vm3014, %v3012
      %3046 = vst.msk [vmem:[%s483 + $0x7c] sm:$0xf] %vm3014, %v3013
      %v3047 = vld [vmem:[%s487] sm:$0x1]
      %v3048 = vsel %vm1380, %v2950, 0.0
      %v3049 = vsel %vm1380, %v2951, 0.0
      %v3050 = vadd.f32 %v3048, %v3049
      %v3051 = vsel %vm1380, %v2952, 0.0
      %v3052 = vadd.f32 %v3050, %v3051
      %v3053 = vsel %vm1380, %v2953, 0.0
      %v3054 = vadd.f32 %v3052, %v3053
      %v3055 = vsel %vm1380, %v2954, 0.0
      %v3056 = vadd.f32 %v3054, %v3055
      %v3057 = vsel %vm1380, %v2955, 0.0
      %v3058 = vadd.f32 %v3056, %v3057
      %v3059 = vsel %vm1380, %v2956, 0.0
      %v3060 = vadd.f32 %v3058, %v3059
      %v3061 = vsel %vm1380, %v2957, 0.0
      %v3062 = vadd.f32 %v3060, %v3061
      %v3063 = vsel %vm1380, %v2958, 0.0
      %v3064 = vadd.f32 %v3062, %v3063
      %v3065 = vsel %vm1380, %v2959, 0.0
      %v3066 = vadd.f32 %v3064, %v3065
      %v3067 = vsel %vm1380, %v2960, 0.0
      %v3068 = vadd.f32 %v3066, %v3067
      %v3069 = vsel %vm1380, %v2961, 0.0
      %v3070 = vadd.f32 %v3068, %v3069
      %v3071 = vsel %vm1380, %v2962, 0.0
      %v3072 = vadd.f32 %v3070, %v3071
      %v3073 = vsel %vm1380, %v2963, 0.0
      %v3074 = vadd.f32 %v3072, %v3073
      %v3075 = vsel %vm1380, %v2964, 0.0
      %v3076 = vadd.f32 %v3074, %v3075
      %v3077 = vsel %vm1380, %v2965, 0.0
      %v3078 = vadd.f32 %v3076, %v3077
      %v3079 = vsel %vm1380, %v2966, 0.0
      %v3080 = vadd.f32 %v3078, %v3079
      %v3081 = vsel %vm1380, %v2967, 0.0
      %v3082 = vadd.f32 %v3080, %v3081
      %v3083 = vsel %vm1380, %v2968, 0.0
      %v3084 = vadd.f32 %v3082, %v3083
      %v3085 = vsel %vm1380, %v2969, 0.0
      %v3086 = vadd.f32 %v3084, %v3085
      %v3087 = vsel %vm1380, %v2970, 0.0
      %v3088 = vadd.f32 %v3086, %v3087
      %v3089 = vsel %vm1380, %v2971, 0.0
      %v3090 = vadd.f32 %v3088, %v3089
      %v3091 = vsel %vm1380, %v2972, 0.0
      %v3092 = vadd.f32 %v3090, %v3091
      %v3093 = vsel %vm1380, %v2973, 0.0
      %v3094 = vadd.f32 %v3092, %v3093
      %v3095 = vsel %vm1380, %v2974, 0.0
      %v3096 = vadd.f32 %v3094, %v3095
      %v3097 = vsel %vm1380, %v2975, 0.0
      %v3098 = vadd.f32 %v3096, %v3097
      %v3099 = vsel %vm1380, %v2976, 0.0
      %v3100 = vadd.f32 %v3098, %v3099
      %v3101 = vsel %vm1380, %v2977, 0.0
      %v3102 = vadd.f32 %v3100, %v3101
      %v3103 = vsel %vm1380, %v2978, 0.0
      %v3104 = vadd.f32 %v3102, %v3103
      %v3105 = vsel %vm1380, %v2979, 0.0
      %v3106 = vadd.f32 %v3104, %v3105
      %v3107 = vsel %vm1380, %v2980, 0.0
      %v3108 = vadd.f32 %v3106, %v3107
      %v3109 = vsel %vm1380, %v2981, 0.0
      %v3110 = vadd.f32 %v3108, %v3109
      %v3111 = vrot.slane %v3110, 4
      %v3112 = vadd.f32 %v3110, %v3111
      %v3113 = vrot.slane %v3112, 2
      %v3114 = vadd.f32 %v3112, %v3113
      %v3115 = vrot.slane %v3114, 1
      %v3116 = vadd.f32 %v3114, %v3115
      %v3117 = vadd.f32 %v3047, %v3116
      %vm3118 = vcmask 122880
      %3119 = vst.msk [vmem:[%s487] sm:$0x1] %vm3118, %v3117
      %v3120 = vld [vmem:[%s490] sm:$0x1]
      %v3121 = vmul.f32 %v2950, %v2950
      %v3122 = vmul.f32 %v2951, %v2951
      %v3123 = vmul.f32 %v2952, %v2952
      %v3124 = vmul.f32 %v2953, %v2953
      %v3125 = vmul.f32 %v2954, %v2954
      %v3126 = vmul.f32 %v2955, %v2955
      %v3127 = vmul.f32 %v2956, %v2956
      %v3128 = vmul.f32 %v2957, %v2957
      %v3129 = vmul.f32 %v2958, %v2958
      %v3130 = vmul.f32 %v2959, %v2959
      %v3131 = vmul.f32 %v2960, %v2960
      %v3132 = vmul.f32 %v2961, %v2961
      %v3133 = vmul.f32 %v2962, %v2962
      %v3134 = vmul.f32 %v2963, %v2963
      %v3135 = vmul.f32 %v2964, %v2964
      %v3136 = vmul.f32 %v2965, %v2965
      %v3137 = vmul.f32 %v2966, %v2966
      %v3138 = vmul.f32 %v2967, %v2967
      %v3139 = vmul.f32 %v2968, %v2968
      %v3140 = vmul.f32 %v2969, %v2969
      %v3141 = vmul.f32 %v2970, %v2970
      %v3142 = vmul.f32 %v2971, %v2971
      %v3143 = vmul.f32 %v2972, %v2972
      %v3144 = vmul.f32 %v2973, %v2973
      %v3145 = vmul.f32 %v2974, %v2974
      %v3146 = vmul.f32 %v2975, %v2975
      %v3147 = vmul.f32 %v2976, %v2976
      %v3148 = vmul.f32 %v2977, %v2977
      %v3149 = vmul.f32 %v2978, %v2978
      %v3150 = vmul.f32 %v2979, %v2979
      %v3151 = vmul.f32 %v2980, %v2980
      %v3152 = vmul.f32 %v2981, %v2981
      %v3153 = vsel %vm1380, %v3121, 0.0
      %v3154 = vsel %vm1380, %v3122, 0.0
      %v3155 = vadd.f32 %v3153, %v3154
      %v3156 = vsel %vm1380, %v3123, 0.0
      %v3157 = vadd.f32 %v3155, %v3156
      %v3158 = vsel %vm1380, %v3124, 0.0
      %v3159 = vadd.f32 %v3157, %v3158
      %v3160 = vsel %vm1380, %v3125, 0.0
      %v3161 = vadd.f32 %v3159, %v3160
      %v3162 = vsel %vm1380, %v3126, 0.0
      %v3163 = vadd.f32 %v3161, %v3162
      %v3164 = vsel %vm1380, %v3127, 0.0
      %v3165 = vadd.f32 %v3163, %v3164
      %v3166 = vsel %vm1380, %v3128, 0.0
      %v3167 = vadd.f32 %v3165, %v3166
      %v3168 = vsel %vm1380, %v3129, 0.0
      %v3169 = vadd.f32 %v3167, %v3168
      %v3170 = vsel %vm1380, %v3130, 0.0
      %v3171 = vadd.f32 %v3169, %v3170
      %v3172 = vsel %vm1380, %v3131, 0.0
      %v3173 = vadd.f32 %v3171, %v3172
      %v3174 = vsel %vm1380, %v3132, 0.0
      %v3175 = vadd.f32 %v3173, %v3174
      %v3176 = vsel %vm1380, %v3133, 0.0
      %v3177 = vadd.f32 %v3175, %v3176
      %v3178 = vsel %vm1380, %v3134, 0.0
      %v3179 = vadd.f32 %v3177, %v3178
      %v3180 = vsel %vm1380, %v3135, 0.0
      %v3181 = vadd.f32 %v3179, %v3180
      %v3182 = vsel %vm1380, %v3136, 0.0
      %v3183 = vadd.f32 %v3181, %v3182
      %v3184 = vsel %vm1380, %v3137, 0.0
      %v3185 = vadd.f32 %v3183, %v3184
      %v3186 = vsel %vm1380, %v3138, 0.0
      %v3187 = vadd.f32 %v3185, %v3186
      %v3188 = vsel %vm1380, %v3139, 0.0
      %v3189 = vadd.f32 %v3187, %v3188
      %v3190 = vsel %vm1380, %v3140, 0.0
      %v3191 = vadd.f32 %v3189, %v3190
      %v3192 = vsel %vm1380, %v3141, 0.0
      %v3193 = vadd.f32 %v3191, %v3192
      %v3194 = vsel %vm1380, %v3142, 0.0
      %v3195 = vadd.f32 %v3193, %v3194
      %v3196 = vsel %vm1380, %v3143, 0.0
      %v3197 = vadd.f32 %v3195, %v3196
      %v3198 = vsel %vm1380, %v3144, 0.0
      %v3199 = vadd.f32 %v3197, %v3198
      %v3200 = vsel %vm1380, %v3145, 0.0
      %v3201 = vadd.f32 %v3199, %v3200
      %v3202 = vsel %vm1380, %v3146, 0.0
      %v3203 = vadd.f32 %v3201, %v3202
      %v3204 = vsel %vm1380, %v3147, 0.0
      %v3205 = vadd.f32 %v3203, %v3204
      %v3206 = vsel %vm1380, %v3148, 0.0
      %v3207 = vadd.f32 %v3205, %v3206
      %v3208 = vsel %vm1380, %v3149, 0.0
      %v3209 = vadd.f32 %v3207, %v3208
      %v3210 = vsel %vm1380, %v3150, 0.0
      %v3211 = vadd.f32 %v3209, %v3210
      %v3212 = vsel %vm1380, %v3151, 0.0
      %v3213 = vadd.f32 %v3211, %v3212
      %v3214 = vsel %vm1380, %v3152, 0.0
      %v3215 = vadd.f32 %v3213, %v3214
      %v3216 = vrot.slane %v3215, 4
      %v3217 = vadd.f32 %v3215, %v3216
      %v3218 = vrot.slane %v3217, 2
      %v3219 = vadd.f32 %v3217, %v3218
      %v3220 = vrot.slane %v3219, 1
      %v3221 = vadd.f32 %v3219, %v3220
      %v3222 = vadd.f32 %v3120, %v3221
      %3223 = vst.msk [vmem:[%s490] sm:$0x1] %vm3118, %v3222
      %s3224 = smul.u32 16, %s25
      %p3225 = scmp.lt.s32.totalorder %s24, 1
      %s3226 = scalar_select %p3225, %s24, 1
      %p3227 = scmp.lt.s32.totalorder %s3224, 15
      %s3228 = scalar_select %p3227, %s3224, 15
      %s3229 = smul.addr %s3228, 2
      %s3230 = smul.addr %s3226, 32
      %s3231 = sadd.s32 %s3229, %s3230
      %s3232 = smul.addr %s3231, 4
      %s3233 = scalar_lea.vmem %s6, %s3232
      %p3234 = scmp.lt.s32.totalorder %s24, 1
      %s3235 = scalar_select %p3234, %s24, 1
      %s3236 = scalar_lea.vmem %s7, %s3235
      %p3237 = scmp.lt.s32.totalorder %s24, 1
      %s3238 = scalar_select %p3237, %s24, 1
      %s3239 = scalar_lea.vmem %s8, %s3238
      // Predicated region
      $region49: #{bottleneck_forward.5} parent=43 // pred_check
        %p3240 = pneg %p215
      $region50: #{bottleneck_forward.5} parent=43 // pred_check_branch
        %3242 = sbr.rel (%p3240) target = $region52
      $region51: #{bottleneck_forward.5} parent=43 // pred_region
        %s3243 = smul.u32 16, %s25
      $region52: #{bottleneck_forward.5} parent=43 // pred_fallthru
        _
      // Predicated region
      $region53: #{bottleneck_forward.5} parent=43 // pred_check
        %p3244 = pneg %p241
      $region54: #{bottleneck_forward.5} parent=43 // pred_check_branch
        %3246 = sbr.rel (%p3244) target = $region56
      $region55: #{bottleneck_forward.5} parent=43 // pred_region
        _
      $region56: #{bottleneck_forward.5} parent=43 // pred_fallthru
        _
      // Predicated region
      $region57: #{bottleneck_forward.5} parent=43 // pred_check
        %p3247 = pneg %p267
      $region58: #{bottleneck_forward.5} parent=43 // pred_check_branch
        %3249 = sbr.rel (%p3247) target = $region60
      $region59: #{bottleneck_forward.5} parent=43 // pred_region
        _
      $region60: #{bottleneck_forward.5} parent=43 // pred_fallthru
        _
    $region44: #{bottleneck_forward.5} parent=5 // pred_fallthru
      _
    %p3250 = scmp.le.s32.totalorder 2, %s15
    // Predicated region
    $region61: #{bottleneck_forward.5} parent=5 // pred_check
      %p3251 = pneg %p3250
    $region62: #{bottleneck_forward.5} parent=5 // pred_check_branch
      %3253 = sbr.rel (%p3251) target = $region64
    $region63: #{bottleneck_forward.5} parent=5 // pred_region
      %s3254 = ssub.s32 %s15, 2
      // Predicated region
      $region65: #{bottleneck_forward.5} parent=63 // pred_check
        %p3255 = pneg %p221
      $region66: #{bottleneck_forward.5} parent=63 // pred_check_branch
        %3257 = sbr.rel (%p3255) target = $region68
      $region67: #{bottleneck_forward.5} parent=63 // pred_region
        %s3258 = smul.u32 16, %s27
        %p3259 = scmp.lt.s32.totalorder %s26, 1
        %s3260 = scalar_select %p3259, %s26, 1
        %p3261 = scmp.lt.s32.totalorder %s3258, 15
        %s3262 = scalar_select %p3261, %s3258, 15
        %s3263 = smul.addr %s3262, 2
        %s3264 = smul.addr %s3260, 32
        %s3265 = sadd.s32 %s3263, %s3264
        %s3266 = smul.addr %s3265, 4
        %s3267 = scalar_lea.vmem %s6, %s3266
      $region68: #{bottleneck_forward.5} parent=63 // pred_fallthru
        _
      // Predicated region
      $region69: #{bottleneck_forward.5} parent=63 // pred_check
        %p3268 = pneg %p247
      $region70: #{bottleneck_forward.5} parent=63 // pred_check_branch
        %3270 = sbr.rel (%p3268) target = $region72
      $region71: #{bottleneck_forward.5} parent=63 // pred_region
        %p3271 = scmp.lt.s32.totalorder %s26, 1
        %s3272 = scalar_select %p3271, %s26, 1
        %s3273 = scalar_lea.vmem %s7, %s3272
      $region72: #{bottleneck_forward.5} parent=63 // pred_fallthru
        _
      // Predicated region
      $region73: #{bottleneck_forward.5} parent=63 // pred_check
        %p3274 = pneg %p273
      $region74: #{bottleneck_forward.5} parent=63 // pred_check_branch
        %3276 = sbr.rel (%p3274) target = $region76
      $region75: #{bottleneck_forward.5} parent=63 // pred_region
        %p3277 = scmp.lt.s32.totalorder %s26, 1
        %s3278 = scalar_select %p3277, %s26, 1
        %s3279 = scalar_lea.vmem %s8, %s3278
      $region76: #{bottleneck_forward.5} parent=63 // pred_fallthru
        _
    $region64: #{bottleneck_forward.5} parent=5 // pred_fallthru
      _
  $region6: #{bottleneck_forward.5} parent=0 // loop_footer
    %s19 = sadd.s32 1, %s15
  $region7: #{bottleneck_forward.5} parent=0 // loop_footer_branch
    %14 = sbr.rel target = $region3
  $region8: #{bottleneck_forward.5} parent=0 // loop_exit
    _

</llo_original>
